<compile_context>
chip_gen: v5e
topology: v5e:2x2
jax: 0.10.0
libtpu: 0.0.40
codegen_flags: <defaults>
</compile_context>

<pallas_src>
import functools

import jax
import jax.numpy as jnp
from jax.experimental import pallas as pl
from jax.experimental.pallas import tpu as pltpu

NUM_CLASSES = 10
IN_FEATURES = 28 * 28        # 784
IN_PAD = 896                 # 7 * 128: lane-aligned K for layer 1
HIDDEN = 256
OUT_PAD = 128                # lane-dense output tile; sliced to 10 outside
DEFAULT_TB = 256             # batch tile: fills the 256x256 MXU on v6e/v7x


def mlp_kernel(x_ref, w1_ref, b1_ref, w2_ref, b2_ref, w3_ref, b3_ref, o_ref):
    # Layer 1: (TB, 896)bf16 @ (896, 256)bf16 -> f32 accumulate; bias+ReLU in f32.
    h1 = jnp.dot(x_ref[...], w1_ref[...], preferred_element_type=jnp.float32)
    h1 = jnp.maximum(h1 + b1_ref[...], 0.0)

    # Layer 2: (TB, 256) @ (256, 256)
    h2 = jnp.dot(h1.astype(w2_ref.dtype), w2_ref[...],
                 preferred_element_type=jnp.float32)
    h2 = jnp.maximum(h2 + b2_ref[...], 0.0)

    # Layer 3: (TB, 256) @ (256, 128); columns >= 10 are zero padding.
    logits = jnp.dot(h2.astype(w3_ref.dtype), w3_ref[...],
                     preferred_element_type=jnp.float32)
    logits = logits + b3_ref[...]

    # Mask padded class columns so they do not contribute to the softmax.
    col = jax.lax.broadcasted_iota(jnp.int32, logits.shape, 1)
    logits = jnp.where(col < NUM_CLASSES, logits, jnp.float32(-1e30))

    # log_softmax over the class axis (max-stabilized, f32; exp runs on the EUP).
    m = jnp.max(logits, axis=-1, keepdims=True)
    z = logits - m
    lse = jnp.log(jnp.sum(jnp.exp(z), axis=-1, keepdims=True))
    o_ref[...] = z - lse


def prepare_params(params, dot_dtype=jnp.bfloat16):
    """One-time weight prep: transpose to (in, out), pad to lane-aligned shapes, cast to bf16."""
    w1 = jnp.zeros((IN_PAD, HIDDEN), dot_dtype).at[:IN_FEATURES, :].set(
        params["w1"].T.astype(dot_dtype))
    w2 = params["w2"].T.astype(dot_dtype)
    w3 = jnp.zeros((HIDDEN, OUT_PAD), dot_dtype).at[:, :NUM_CLASSES].set(
        params["w3"].T.astype(dot_dtype))
    b1 = params["b1"].reshape(1, HIDDEN).astype(jnp.float32)
    b2 = params["b2"].reshape(1, HIDDEN).astype(jnp.float32)
    b3 = jnp.zeros((1, OUT_PAD), jnp.float32).at[0, :NUM_CLASSES].set(
        params["b3"].astype(jnp.float32))
    return {"w1": w1, "b1": b1, "w2": w2, "b2": b2, "w3": w3, "b3": b3}


@functools.partial(jax.jit, static_argnames=("block_b",))
def mlp_forward(x, prepped, block_b=DEFAULT_TB):
    """x: [B, 784] f32. prepped: output of prepare_params(). Returns [B, 10] f32 log-probs."""
    B = x.shape[0]
    dot_dtype = prepped["w1"].dtype

    # Pad batch to a multiple of the batch tile; pad/cast features once per call.
    Bp = pl.cdiv(B, block_b) * block_b
    xp = jnp.zeros((Bp, IN_PAD), dot_dtype).at[:B, :IN_FEATURES].set(
        x.astype(dot_dtype))

    const = lambda shape: pl.BlockSpec(shape, lambda i: (0, 0))

    out = pl.pallas_call(
        mlp_kernel,
        out_shape=jax.ShapeDtypeStruct((Bp, OUT_PAD), jnp.float32),
        grid=(Bp // block_b,),
        in_specs=[
            pl.BlockSpec((block_b, IN_PAD), lambda i: (i, 0)),  # x: tiled on batch
            const((IN_PAD, HIDDEN)),                             # weights/biases resident
            const((1, HIDDEN)),
            const((HIDDEN, HIDDEN)),
            const((1, HIDDEN)),
            const((HIDDEN, OUT_PAD)),
            const((1, OUT_PAD)),
        ],
        out_specs=pl.BlockSpec((block_b, OUT_PAD), lambda i: (i, 0)),
        compiler_params=pltpu.CompilerParams(
            dimension_semantics=("parallel",),
            vmem_limit_bytes=16 << 20,
        ),
    )(xp, prepped["w1"], prepped["b1"], prepped["w2"], prepped["b2"],
      prepped["w3"], prepped["b3"])

    return out[:B, :NUM_CLASSES]


def init_params(key):
    """Deterministic parameter init (PyTorch Linear convention: W is (out, in))."""
    k1, k2, k3, k4, k5, k6 = jax.random.split(key, 6)

    def linear(kw, kb, fan_in, fan_out):
        bound = 1.0 / jnp.sqrt(fan_in)
        w = jax.random.uniform(kw, (fan_out, fan_in), jnp.float32, -bound, bound)
        b = jax.random.uniform(kb, (fan_out,), jnp.float32, -bound, bound)
        return w, b

    w1, b1 = linear(k1, k2, IN_FEATURES, HIDDEN)
    w2, b2 = linear(k3, k4, HIDDEN, HIDDEN)
    w3, b3 = linear(k5, k6, HIDDEN, NUM_CLASSES)
    return {"w1": w1, "b1": b1, "w2": w2, "b2": b2, "w3": w3, "b3": b3}


def mlp_reference(x, params):
    """Full-f32 reference (PyTorch semantics)."""
    h1 = jnp.maximum(x @ params["w1"].T + params["b1"], 0.0)
    h2 = jnp.maximum(h1 @ params["w2"].T + params["b2"], 0.0)
    logits = h2 @ params["w3"].T + params["b3"]
    return jax.nn.log_softmax(logits, axis=1)


def mlp_reference_bf16(x, params):
    """Reference matching the kernel's numerics (bf16 matmul inputs, f32 accumulate)."""
    bf = jnp.bfloat16

    def dot(a, w):
        return jnp.dot(a.astype(bf), w.T.astype(bf),
                       preferred_element_type=jnp.float32)

    h1 = jnp.maximum(dot(x, params["w1"]) + params["b1"], 0.0)
    h2 = jnp.maximum(dot(h1, params["w2"]) + params["b2"], 0.0)
    logits = dot(h2, params["w3"]) + params["b3"]
    return jax.nn.log_softmax(logits, axis=1)


if __name__ == "__main__":
    key = jax.random.PRNGKey(0)
    kx, kp = jax.random.split(key)

    B = 8
    x = jax.random.normal(kx, (B, IN_FEATURES), jnp.float32)
    params = init_params(kp)
    prepped = prepare_params(params)   # one-time transpose / pad / bf16 cast

    out = mlp_forward(x, prepped)
    jax.block_until_ready(out)
    assert out.shape == (B, NUM_CLASSES), out.shape

    # Tight check against a reference using the same bf16-input / f32-accum matmuls.
    ref_bf16 = mlp_reference_bf16(x, params)
    assert jnp.allclose(out, ref_bf16, atol=2e-3, rtol=2e-3), float(
        jnp.max(jnp.abs(out - ref_bf16)))

    # Looser check against the full-f32 reference (difference is bf16 matmul inputs).
    ref_f32 = mlp_reference(x, params)
    assert jnp.allclose(out, ref_f32, atol=5e-2, rtol=5e-2), float(
        jnp.max(jnp.abs(out - ref_f32)))

    print("KERNEL_OK")
</pallas_src>

<mosaic_0001>
module attributes {stable_mosaic.version = 11 : i64} {
  func.func @mlp_kernel(%arg0: i32, %arg1: memref<256x896xbf16, #tpu.memory_space<vmem>>, %arg2: memref<896x256xbf16, #tpu.memory_space<vmem>>, %arg3: memref<1x256xf32, #tpu.memory_space<vmem>>, %arg4: memref<256x256xbf16, #tpu.memory_space<vmem>>, %arg5: memref<1x256xf32, #tpu.memory_space<vmem>>, %arg6: memref<256x128xbf16, #tpu.memory_space<vmem>>, %arg7: memref<1x128xf32, #tpu.memory_space<vmem>>, %arg8: memref<256x128xf32, #tpu.memory_space<vmem>>) attributes {dimension_semantics = [#tpu.dimension_semantics<parallel>], iteration_bounds = array<i64: 1>, scalar_prefetch = 0 : i64, scratch_operands = 0 : i64, tpu.core_type = #tpu.core_type<tc>, window_params = [{transform_indices = @transform_0, window_bounds = array<i64: 256, 896>}, {pipeline_mode = #tpu.pipeline_mode<synchronous>, transform_indices = @transform_1, window_bounds = array<i64: 896, 256>}, {pipeline_mode = #tpu.pipeline_mode<synchronous>, transform_indices = @transform_2, window_bounds = array<i64: 1, 256>}, {pipeline_mode = #tpu.pipeline_mode<synchronous>, transform_indices = @transform_3, window_bounds = array<i64: 256, 256>}, {pipeline_mode = #tpu.pipeline_mode<synchronous>, transform_indices = @transform_4, window_bounds = array<i64: 1, 256>}, {pipeline_mode = #tpu.pipeline_mode<synchronous>, transform_indices = @transform_5, window_bounds = array<i64: 256, 128>}, {pipeline_mode = #tpu.pipeline_mode<synchronous>, transform_indices = @transform_6, window_bounds = array<i64: 1, 128>}, {transform_indices = @transform_7, window_bounds = array<i64: 256, 128>}]} {
    %c0 = arith.constant 0 : index
    %c0_0 = arith.constant 0 : index
    %0 = vector.load %arg1[%c0, %c0_0] : memref<256x896xbf16, #tpu.memory_space<vmem>>, vector<256x896xbf16>
    %c0_1 = arith.constant 0 : index
    %c0_2 = arith.constant 0 : index
    %1 = vector.load %arg2[%c0_1, %c0_2] : memref<896x256xbf16, #tpu.memory_space<vmem>>, vector<896x256xbf16>
    %cst = arith.constant dense<0.000000e+00> : vector<256x256xf32>
    %2 = tpu.matmul %0, %1, %cst {dimension_numbers = #tpu.dot_dimension_numbers<[1], [0], [0], [1], [0, 0, 1, 1], [], []>} : vector<256x896xbf16>, vector<896x256xbf16>, vector<256x256xf32> -> vector<256x256xf32>
    %c0_3 = arith.constant 0 : index
    %c0_4 = arith.constant 0 : index
    %3 = vector.load %arg3[%c0_3, %c0_4] : memref<1x256xf32, #tpu.memory_space<vmem>>, vector<1x256xf32>
    %4 = vector.broadcast %3 : vector<1x256xf32> to vector<256x256xf32>
    %5 = arith.addf %2, %4 : vector<256x256xf32>
    %cst_5 = arith.constant 0.000000e+00 : f32
    %6 = vector.broadcast %cst_5 : f32 to vector<256x256xf32>
    %7 = arith.maximumf %5, %6 : vector<256x256xf32>
    %8 = arith.truncf %7 : vector<256x256xf32> to vector<256x256xbf16>
    %c0_6 = arith.constant 0 : index
    %c0_7 = arith.constant 0 : index
    %9 = vector.load %arg4[%c0_6, %c0_7] : memref<256x256xbf16, #tpu.memory_space<vmem>>, vector<256x256xbf16>
    %cst_8 = arith.constant dense<0.000000e+00> : vector<256x256xf32>
    %10 = tpu.matmul %8, %9, %cst_8 {dimension_numbers = #tpu.dot_dimension_numbers<[1], [0], [0], [1], [0, 0, 1, 1], [], []>} : vector<256x256xbf16>, vector<256x256xbf16>, vector<256x256xf32> -> vector<256x256xf32>
    %c0_9 = arith.constant 0 : index
    %c0_10 = arith.constant 0 : index
    %11 = vector.load %arg5[%c0_9, %c0_10] : memref<1x256xf32, #tpu.memory_space<vmem>>, vector<1x256xf32>
    %12 = vector.broadcast %11 : vector<1x256xf32> to vector<256x256xf32>
    %13 = arith.addf %10, %12 : vector<256x256xf32>
    %cst_11 = arith.constant 0.000000e+00 : f32
    %14 = vector.broadcast %cst_11 : f32 to vector<256x256xf32>
    %15 = arith.maximumf %13, %14 : vector<256x256xf32>
    %16 = arith.truncf %15 : vector<256x256xf32> to vector<256x256xbf16>
    %c0_12 = arith.constant 0 : index
    %c0_13 = arith.constant 0 : index
    %17 = vector.load %arg6[%c0_12, %c0_13] : memref<256x128xbf16, #tpu.memory_space<vmem>>, vector<256x128xbf16>
    %cst_14 = arith.constant dense<0.000000e+00> : vector<256x128xf32>
    %18 = tpu.matmul %16, %17, %cst_14 {dimension_numbers = #tpu.dot_dimension_numbers<[1], [0], [0], [1], [0, 0, 1, 1], [], []>} : vector<256x256xbf16>, vector<256x128xbf16>, vector<256x128xf32> -> vector<256x128xf32>
    %c0_15 = arith.constant 0 : index
    %c0_16 = arith.constant 0 : index
    %19 = vector.load %arg7[%c0_15, %c0_16] : memref<1x128xf32, #tpu.memory_space<vmem>>, vector<1x128xf32>
    %20 = vector.broadcast %19 : vector<1x128xf32> to vector<256x128xf32>
    %21 = arith.addf %18, %20 : vector<256x128xf32>
    %22 = tpu.iota {dimensions = array<i32: 1>} : vector<256x128xi32>
    %c10_i32 = arith.constant 10 : i32
    %23 = vector.broadcast %c10_i32 : i32 to vector<256x128xi32>
    %24 = arith.cmpi slt, %22, %23 : vector<256x128xi32>
    %cst_17 = arith.constant -1.000000e+30 : f32
    %25 = vector.broadcast %cst_17 : f32 to vector<256x128xf32>
    %26 = arith.select %24, %21, %25 : vector<256x128xi1>, vector<256x128xf32>
    %cst_18 = arith.constant dense<0xFF800000> : vector<256xf32>
    %27 = vector.multi_reduction <maximumf>, %26, %cst_18 [1] : vector<256x128xf32> to vector<256xf32>
    %28 = vector.shape_cast %27 : vector<256xf32> to vector<256x1xf32>
    %29 = vector.broadcast %28 : vector<256x1xf32> to vector<256x128xf32>
    %30 = arith.subf %26, %29 : vector<256x128xf32>
    %31 = math.exp %30 : vector<256x128xf32>
    %cst_19 = arith.constant dense<0.000000e+00> : vector<256xf32>
    %32 = vector.multi_reduction <add>, %31, %cst_19 [1] : vector<256x128xf32> to vector<256xf32>
    %33 = vector.shape_cast %32 : vector<256xf32> to vector<256x1xf32>
    %34 = math.log %33 : vector<256x1xf32>
    %35 = vector.broadcast %34 : vector<256x1xf32> to vector<256x128xf32>
    %36 = arith.subf %30, %35 : vector<256x128xf32>
    %c0_20 = arith.constant 0 : index
    %c0_21 = arith.constant 0 : index
    %37 = vector.load %arg8[%c0_20, %c0_21] : memref<256x128xf32, #tpu.memory_space<vmem>>, vector<256x128xf32>
    tpu.vector_store %arg8[%c0_20, %c0_21], %36 {strides = array<i32>} : memref<256x128xf32, #tpu.memory_space<vmem>>, vector<256x128xf32>,
    return
  }
  func.func @transform_0(%arg0: i32) -> (i32, i32) {
    %c0_i32 = arith.constant 0 : i32
    %c0_i32_0 = arith.constant 0 : i32
    return %arg0, %c0_i32 : i32, i32
  }
  func.func @transform_1(%arg0: i32) -> (i32, i32) {
    %c0_i32 = arith.constant 0 : i32
    %c0_i32_0 = arith.constant 0 : i32
    %c0_i32_1 = arith.constant 0 : i32
    return %c0_i32, %c0_i32_0 : i32, i32
  }
  func.func @transform_2(%arg0: i32) -> (i32, i32) {
    %c0_i32 = arith.constant 0 : i32
    %c0_i32_0 = arith.constant 0 : i32
    %c0_i32_1 = arith.constant 0 : i32
    return %c0_i32, %c0_i32_0 : i32, i32
  }
  func.func @transform_3(%arg0: i32) -> (i32, i32) {
    %c0_i32 = arith.constant 0 : i32
    %c0_i32_0 = arith.constant 0 : i32
    %c0_i32_1 = arith.constant 0 : i32
    return %c0_i32, %c0_i32_0 : i32, i32
  }
  func.func @transform_4(%arg0: i32) -> (i32, i32) {
    %c0_i32 = arith.constant 0 : i32
    %c0_i32_0 = arith.constant 0 : i32
    %c0_i32_1 = arith.constant 0 : i32
    return %c0_i32, %c0_i32_0 : i32, i32
  }
  func.func @transform_5(%arg0: i32) -> (i32, i32) {
    %c0_i32 = arith.constant 0 : i32
    %c0_i32_0 = arith.constant 0 : i32
    %c0_i32_1 = arith.constant 0 : i32
    return %c0_i32, %c0_i32_0 : i32, i32
  }
  func.func @transform_6(%arg0: i32) -> (i32, i32) {
    %c0_i32 = arith.constant 0 : i32
    %c0_i32_0 = arith.constant 0 : i32
    %c0_i32_1 = arith.constant 0 : i32
    return %c0_i32, %c0_i32_0 : i32, i32
  }
  func.func @transform_7(%arg0: i32) -> (i32, i32) {
    %c0_i32 = arith.constant 0 : i32
    %c0_i32_0 = arith.constant 0 : i32
    return %arg0, %c0_i32 : i32, i32
  }
}

</mosaic_0001>

<llo_original>
// kernel: mlp_forward.1
$region0: #{mlp_forward.1}
  #allocation0 [shape = 'u32[]', space=smem, size = 0x4, offset = 0x4, fixed_abs, tag = 'smem constant byte address 0x4 - core index']
  #allocation1 [shape = 'u32[72,128]{1,0:T(1,128)}', space=vmem, size = 0x9000, scoped, tag = 'internal scratch']
  %s0 = inlined_call_operand.vmem [shape: bf16[256,896], index: 0, kind: input, shape index: {}]
  %s1 = inlined_call_operand.vmem [shape: bf16[896,256], index: 1, kind: input, shape index: {}]
  %s2 = inlined_call_operand.vmem [shape: f32[1,256], index: 2, kind: input, shape index: {}]
  %s3 = inlined_call_operand.hbm [shape: bf16[256,256], index: 3, kind: input, shape index: {}]
  %s4 = inlined_call_operand.vmem [shape: f32[1,256], index: 4, kind: input, shape index: {}]
  %s5 = inlined_call_operand.hbm [shape: bf16[256,128], index: 5, kind: input, shape index: {}]
  %s6 = inlined_call_operand.vmem [shape: f32[1,128], index: 6, kind: input, shape index: {}]
  %s7 = inlined_call_operand.vmem [shape: f32[256,128], index: 7, kind: output, shape index: {}]
  %s8 = sld [smem:[#allocation0]]
  $region46: #{mlp_forward.1} parent=0
    _
  %s10 = ssub.s32 1, %s8
  %s11 = scalar_select 0, %s10, %s8
  $region1: #{mlp_forward.1} parent=0
    #allocation2 [shape = 'u8[131072]{0}', space=vmem, size = 0x20000, scoped, tag = 'input window, operand 3, single buffered']
    #allocation3 [shape = 's32[1]{0}', space=sflag, size = 0x4, scoped, tag = 'scoped memory for mlp_forward.1']
    #allocation4 [shape = 'u8[65536]{0}', space=vmem, size = 0x10000, scoped, tag = 'input window, operand 5, single buffered']
    #allocation5 [shape = 's32[1]{0}', space=sflag, size = 0x4, scoped, tag = 'scoped memory for mlp_forward.1']
    %12 = vsyncpa [#allocation3], 0
    %13 = vsyncpa [#allocation5], 0
    // Predicated region
    $region2: #{mlp_forward.1} parent=1 // pred_check
      _
    $region3: #{mlp_forward.1} parent=1 // pred_check_branch
      %15 = sbr.rel (0) target = $region5
    $region4: #{mlp_forward.1} parent=1 // pred_region
      _
    $region5: #{mlp_forward.1} parent=1 // pred_fallthru
      _
    // Predicated region
    $region6: #{mlp_forward.1} parent=1 // pred_check
      _
    $region7: #{mlp_forward.1} parent=1 // pred_check_branch
      %17 = sbr.rel (0) target = $region9
    $region8: #{mlp_forward.1} parent=1 // pred_region
      _
    $region9: #{mlp_forward.1} parent=1 // pred_fallthru
      _
    // Predicated region
    $region10: #{mlp_forward.1} parent=1 // pred_check
      _
    $region11: #{mlp_forward.1} parent=1 // pred_check_branch
      %19 = sbr.rel (0) target = $region13
    $region12: #{mlp_forward.1} parent=1 // pred_region
      _
    $region13: #{mlp_forward.1} parent=1 // pred_fallthru
      _
    // Predicated region
    $region14: #{mlp_forward.1} parent=1 // pred_check
      _
    $region15: #{mlp_forward.1} parent=1 // pred_check_branch
      %21 = sbr.rel (0) target = $region17
    $region16: #{mlp_forward.1} parent=1 // pred_region
      %23 = vsyncadd [#allocation3], 0
      %s24 = sshll.u32 %s3, 4
      %s25 = int_to_ptr.hbm [resolvable:$true] %s24
      %s26 = sshll.u32 [#allocation2], 4
      %s27 = int_to_ptr.vmem [resolvable:$true] %s26
      %32 = dma.hbm_to_vmem [thread:$0]  %s25, 4096, %s27, [#allocation3], 128, 128, 8
    $region17: #{mlp_forward.1} parent=1 // pred_fallthru
      _
    // Predicated region
    $region18: #{mlp_forward.1} parent=1 // pred_check
      _
    $region19: #{mlp_forward.1} parent=1 // pred_check_branch
      %34 = sbr.rel (0) target = $region21
    $region20: #{mlp_forward.1} parent=1 // pred_region
      _
    $region21: #{mlp_forward.1} parent=1 // pred_fallthru
      _
    // Predicated region
    $region22: #{mlp_forward.1} parent=1 // pred_check
      _
    $region23: #{mlp_forward.1} parent=1 // pred_check_branch
      %36 = sbr.rel (0) target = $region25
    $region24: #{mlp_forward.1} parent=1 // pred_region
      %38 = vsyncadd [#allocation5], 0
      %s39 = sshll.u32 %s5, 4
      %s40 = int_to_ptr.hbm [resolvable:$true] %s39
      %s41 = sshll.u32 [#allocation4], 4
      %s42 = int_to_ptr.vmem [resolvable:$true] %s41
      %47 = dma.hbm_to_vmem [thread:$0]  %s40, 2048, %s42, [#allocation5], 64, 64, 4
    $region25: #{mlp_forward.1} parent=1 // pred_fallthru
      _
    // Predicated region
    $region26: #{mlp_forward.1} parent=1 // pred_check
      _
    $region27: #{mlp_forward.1} parent=1 // pred_check_branch
      %49 = sbr.rel (0) target = $region29
    $region28: #{mlp_forward.1} parent=1 // pred_region
      _
    $region29: #{mlp_forward.1} parent=1 // pred_fallthru
      _
    // Predicated region
    $region30: #{mlp_forward.1} parent=1 // pred_check
      _
    $region31: #{mlp_forward.1} parent=1 // pred_check_branch
      %51 = sbr.rel (0) target = $region33
    $region32: #{mlp_forward.1} parent=1 // pred_region
      %53 = dma.done [#allocation3], 4096
    $region33: #{mlp_forward.1} parent=1 // pred_fallthru
      _
    // Predicated region
    $region34: #{mlp_forward.1} parent=1 // pred_check
      _
    $region35: #{mlp_forward.1} parent=1 // pred_check_branch
      %55 = sbr.rel (0) target = $region37
    $region36: #{mlp_forward.1} parent=1 // pred_region
      %57 = dma.done [#allocation5], 2048
    $region37: #{mlp_forward.1} parent=1 // pred_fallthru
      _
    %v58 = vld [vmem:[%s0] sm:$0xff]
    %v59 = vld [vmem:[%s0 + $0x8] sm:$0xff]
    %v60 = vld [vmem:[%s0 + $0x10] sm:$0xff]
    %v61 = vld [vmem:[%s0 + $0x18] sm:$0xf]
    %v62 = vld [vmem:[%s0 + $0x1c] sm:$0xff]
    %v63 = vld [vmem:[%s0 + $0x24] sm:$0xff]
    %v64 = vld [vmem:[%s0 + $0x2c] sm:$0xff]
    %v65 = vld [vmem:[%s0 + $0x34] sm:$0xf]
    %v66 = vld [vmem:[%s0 + $0x38] sm:$0xff]
    %v67 = vld [vmem:[%s0 + $0x40] sm:$0xff]
    %v68 = vld [vmem:[%s0 + $0x48] sm:$0xff]
    %v69 = vld [vmem:[%s0 + $0x50] sm:$0xf]
    %v70 = vld [vmem:[%s0 + $0x54] sm:$0xff]
    %v71 = vld [vmem:[%s0 + $0x5c] sm:$0xff]
    %v72 = vld [vmem:[%s0 + $0x64] sm:$0xff]
    %v73 = vld [vmem:[%s0 + $0x6c] sm:$0xf]
    %v74 = vld [vmem:[%s0 + $0x70] sm:$0xff]
    %v75 = vld [vmem:[%s0 + $0x78] sm:$0xff]
    %v76 = vld [vmem:[%s0 + $0x80] sm:$0xff]
    %v77 = vld [vmem:[%s0 + $0x88] sm:$0xf]
    %v78 = vld [vmem:[%s0 + $0x8c] sm:$0xff]
    %v79 = vld [vmem:[%s0 + $0x94] sm:$0xff]
    %v80 = vld [vmem:[%s0 + $0x9c] sm:$0xff]
    %v81 = vld [vmem:[%s0 + $0xa4] sm:$0xf]
    %v82 = vld [vmem:[%s0 + $0xa8] sm:$0xff]
    %v83 = vld [vmem:[%s0 + $0xb0] sm:$0xff]
    %v84 = vld [vmem:[%s0 + $0xb8] sm:$0xff]
    %v85 = vld [vmem:[%s0 + $0xc0] sm:$0xf]
    %v86 = vld [vmem:[%s0 + $0xc4] sm:$0xff]
    %v87 = vld [vmem:[%s0 + $0xcc] sm:$0xff]
    %v88 = vld [vmem:[%s0 + $0xd4] sm:$0xff]
    %v89 = vld [vmem:[%s0 + $0xdc] sm:$0xf]
    %v90 = vld [vmem:[%s0 + $0xe0] sm:$0xff]
    %v91 = vld [vmem:[%s0 + $0xe8] sm:$0xff]
    %v92 = vld [vmem:[%s0 + $0xf0] sm:$0xff]
    %v93 = vld [vmem:[%s0 + $0xf8] sm:$0xf]
    %v94 = vld [vmem:[%s0 + $0xfc] sm:$0xff]
    %v95 = vld [vmem:[%s0 + $0x104] sm:$0xff]
    %v96 = vld [vmem:[%s0 + $0x10c] sm:$0xff]
    %v97 = vld [vmem:[%s0 + $0x114] sm:$0xf]
    %v98 = vld [vmem:[%s0 + $0x118] sm:$0xff]
    %v99 = vld [vmem:[%s0 + $0x120] sm:$0xff]
    %v100 = vld [vmem:[%s0 + $0x128] sm:$0xff]
    %v101 = vld [vmem:[%s0 + $0x130] sm:$0xf]
    %v102 = vld [vmem:[%s0 + $0x134] sm:$0xff]
    %v103 = vld [vmem:[%s0 + $0x13c] sm:$0xff]
    %v104 = vld [vmem:[%s0 + $0x144] sm:$0xff]
    %v105 = vld [vmem:[%s0 + $0x14c] sm:$0xf]
    %v106 = vld [vmem:[%s0 + $0x150] sm:$0xff]
    %v107 = vld [vmem:[%s0 + $0x158] sm:$0xff]
    %v108 = vld [vmem:[%s0 + $0x160] sm:$0xff]
    %v109 = vld [vmem:[%s0 + $0x168] sm:$0xf]
    %v110 = vld [vmem:[%s0 + $0x16c] sm:$0xff]
    %v111 = vld [vmem:[%s0 + $0x174] sm:$0xff]
    %v112 = vld [vmem:[%s0 + $0x17c] sm:$0xff]
    %v113 = vld [vmem:[%s0 + $0x184] sm:$0xf]
    %v114 = vld [vmem:[%s0 + $0x188] sm:$0xff]
    %v115 = vld [vmem:[%s0 + $0x190] sm:$0xff]
    %v116 = vld [vmem:[%s0 + $0x198] sm:$0xff]
    %v117 = vld [vmem:[%s0 + $0x1a0] sm:$0xf]
    %v118 = vld [vmem:[%s0 + $0x1a4] sm:$0xff]
    %v119 = vld [vmem:[%s0 + $0x1ac] sm:$0xff]
    %v120 = vld [vmem:[%s0 + $0x1b4] sm:$0xff]
    %v121 = vld [vmem:[%s0 + $0x1bc] sm:$0xf]
    %v122 = vld [vmem:[%s0 + $0x1c0] sm:$0xff]
    %v123 = vld [vmem:[%s0 + $0x1c8] sm:$0xff]
    %v124 = vld [vmem:[%s0 + $0x1d0] sm:$0xff]
    %v125 = vld [vmem:[%s0 + $0x1d8] sm:$0xf]
    %v126 = vld [vmem:[%s0 + $0x1dc] sm:$0xff]
    %v127 = vld [vmem:[%s0 + $0x1e4] sm:$0xff]
    %v128 = vld [vmem:[%s0 + $0x1ec] sm:$0xff]
    %v129 = vld [vmem:[%s0 + $0x1f4] sm:$0xf]
    %v130 = vld [vmem:[%s0 + $0x1f8] sm:$0xff]
    %v131 = vld [vmem:[%s0 + $0x200] sm:$0xff]
    %v132 = vld [vmem:[%s0 + $0x208] sm:$0xff]
    %v133 = vld [vmem:[%s0 + $0x210] sm:$0xf]
    %v134 = vld [vmem:[%s0 + $0x214] sm:$0xff]
    %v135 = vld [vmem:[%s0 + $0x21c] sm:$0xff]
    %v136 = vld [vmem:[%s0 + $0x224] sm:$0xff]
    %v137 = vld [vmem:[%s0 + $0x22c] sm:$0xf]
    %v138 = vld [vmem:[%s0 + $0x230] sm:$0xff]
    %v139 = vld [vmem:[%s0 + $0x238] sm:$0xff]
    %v140 = vld [vmem:[%s0 + $0x240] sm:$0xff]
    %v141 = vld [vmem:[%s0 + $0x248] sm:$0xf]
    %v142 = vld [vmem:[%s0 + $0x24c] sm:$0xff]
    %v143 = vld [vmem:[%s0 + $0x254] sm:$0xff]
    %v144 = vld [vmem:[%s0 + $0x25c] sm:$0xff]
    %v145 = vld [vmem:[%s0 + $0x264] sm:$0xf]
    %v146 = vld [vmem:[%s0 + $0x268] sm:$0xff]
    %v147 = vld [vmem:[%s0 + $0x270] sm:$0xff]
    %v148 = vld [vmem:[%s0 + $0x278] sm:$0xff]
    %v149 = vld [vmem:[%s0 + $0x280] sm:$0xf]
    %v150 = vld [vmem:[%s0 + $0x284] sm:$0xff]
    %v151 = vld [vmem:[%s0 + $0x28c] sm:$0xff]
    %v152 = vld [vmem:[%s0 + $0x294] sm:$0xff]
    %v153 = vld [vmem:[%s0 + $0x29c] sm:$0xf]
    %v154 = vld [vmem:[%s0 + $0x2a0] sm:$0xff]
    %v155 = vld [vmem:[%s0 + $0x2a8] sm:$0xff]
    %v156 = vld [vmem:[%s0 + $0x2b0] sm:$0xff]
    %v157 = vld [vmem:[%s0 + $0x2b8] sm:$0xf]
    %v158 = vld [vmem:[%s0 + $0x2bc] sm:$0xff]
    %v159 = vld [vmem:[%s0 + $0x2c4] sm:$0xff]
    %v160 = vld [vmem:[%s0 + $0x2cc] sm:$0xff]
    %v161 = vld [vmem:[%s0 + $0x2d4] sm:$0xf]
    %v162 = vld [vmem:[%s0 + $0x2d8] sm:$0xff]
    %v163 = vld [vmem:[%s0 + $0x2e0] sm:$0xff]
    %v164 = vld [vmem:[%s0 + $0x2e8] sm:$0xff]
    %v165 = vld [vmem:[%s0 + $0x2f0] sm:$0xf]
    %v166 = vld [vmem:[%s0 + $0x2f4] sm:$0xff]
    %v167 = vld [vmem:[%s0 + $0x2fc] sm:$0xff]
    %v168 = vld [vmem:[%s0 + $0x304] sm:$0xff]
    %v169 = vld [vmem:[%s0 + $0x30c] sm:$0xf]
    %v170 = vld [vmem:[%s0 + $0x310] sm:$0xff]
    %v171 = vld [vmem:[%s0 + $0x318] sm:$0xff]
    %v172 = vld [vmem:[%s0 + $0x320] sm:$0xff]
    %v173 = vld [vmem:[%s0 + $0x328] sm:$0xf]
    %v174 = vld [vmem:[%s0 + $0x32c] sm:$0xff]
    %v175 = vld [vmem:[%s0 + $0x334] sm:$0xff]
    %v176 = vld [vmem:[%s0 + $0x33c] sm:$0xff]
    %v177 = vld [vmem:[%s0 + $0x344] sm:$0xf]
    %v178 = vld [vmem:[%s0 + $0x348] sm:$0xff]
    %v179 = vld [vmem:[%s0 + $0x350] sm:$0xff]
    %v180 = vld [vmem:[%s0 + $0x358] sm:$0xff]
    %v181 = vld [vmem:[%s0 + $0x360] sm:$0xf]
    %v182 = vld [vmem:[%s0 + $0x364] sm:$0xff]
    %v183 = vld [vmem:[%s0 + $0x36c] sm:$0xff]
    %v184 = vld [vmem:[%s0 + $0x374] sm:$0xff]
    %v185 = vld [vmem:[%s0 + $0x37c] sm:$0xf]
    %v186 = vld [vmem:[%s1] sm:$0xff]
    %v187 = vld [vmem:[%s1 + $0x8] sm:$0xff]
    %v188 = vld [vmem:[%s1 + $0x10] sm:$0xff]
    %v189 = vld [vmem:[%s1 + $0x18] sm:$0xff]
    %v190 = vld [vmem:[%s1 + $0x20] sm:$0xff]
    %v191 = vld [vmem:[%s1 + $0x28] sm:$0xff]
    %v192 = vld [vmem:[%s1 + $0x30] sm:$0xff]
    %v193 = vld [vmem:[%s1 + $0x38] sm:$0xff]
    %v194 = vld [vmem:[%s1 + $0x40] sm:$0xff]
    %v195 = vld [vmem:[%s1 + $0x48] sm:$0xff]
    %v196 = vld [vmem:[%s1 + $0x50] sm:$0xff]
    %v197 = vld [vmem:[%s1 + $0x58] sm:$0xff]
    %v198 = vld [vmem:[%s1 + $0x60] sm:$0xff]
    %v199 = vld [vmem:[%s1 + $0x68] sm:$0xff]
    %v200 = vld [vmem:[%s1 + $0x70] sm:$0xff]
    %v201 = vld [vmem:[%s1 + $0x78] sm:$0xff]
    %v202 = vld [vmem:[%s1 + $0x80] sm:$0xff]
    %v203 = vld [vmem:[%s1 + $0x88] sm:$0xff]
    %v204 = vld [vmem:[%s1 + $0x90] sm:$0xff]
    %v205 = vld [vmem:[%s1 + $0x98] sm:$0xff]
    %v206 = vld [vmem:[%s1 + $0xa0] sm:$0xff]
    %v207 = vld [vmem:[%s1 + $0xa8] sm:$0xff]
    %v208 = vld [vmem:[%s1 + $0xb0] sm:$0xff]
    %v209 = vld [vmem:[%s1 + $0xb8] sm:$0xff]
    %v210 = vld [vmem:[%s1 + $0xc0] sm:$0xff]
    %v211 = vld [vmem:[%s1 + $0xc8] sm:$0xff]
    %v212 = vld [vmem:[%s1 + $0xd0] sm:$0xff]
    %v213 = vld [vmem:[%s1 + $0xd8] sm:$0xff]
    %v214 = vld [vmem:[%s1 + $0xe0] sm:$0xff]
    %v215 = vld [vmem:[%s1 + $0xe8] sm:$0xff]
    %v216 = vld [vmem:[%s1 + $0xf0] sm:$0xff]
    %v217 = vld [vmem:[%s1 + $0xf8] sm:$0xff]
    %v218 = vld [vmem:[%s1 + $0x100] sm:$0xff]
    %v219 = vld [vmem:[%s1 + $0x108] sm:$0xff]
    %v220 = vld [vmem:[%s1 + $0x110] sm:$0xff]
    %v221 = vld [vmem:[%s1 + $0x118] sm:$0xff]
    %v222 = vld [vmem:[%s1 + $0x120] sm:$0xff]
    %v223 = vld [vmem:[%s1 + $0x128] sm:$0xff]
    %v224 = vld [vmem:[%s1 + $0x130] sm:$0xff]
    %v225 = vld [vmem:[%s1 + $0x138] sm:$0xff]
    %v226 = vld [vmem:[%s1 + $0x140] sm:$0xff]
    %v227 = vld [vmem:[%s1 + $0x148] sm:$0xff]
    %v228 = vld [vmem:[%s1 + $0x150] sm:$0xff]
    %v229 = vld [vmem:[%s1 + $0x158] sm:$0xff]
    %v230 = vld [vmem:[%s1 + $0x160] sm:$0xff]
    %v231 = vld [vmem:[%s1 + $0x168] sm:$0xff]
    %v232 = vld [vmem:[%s1 + $0x170] sm:$0xff]
    %v233 = vld [vmem:[%s1 + $0x178] sm:$0xff]
    %v234 = vld [vmem:[%s1 + $0x180] sm:$0xff]
    %v235 = vld [vmem:[%s1 + $0x188] sm:$0xff]
    %v236 = vld [vmem:[%s1 + $0x190] sm:$0xff]
    %v237 = vld [vmem:[%s1 + $0x198] sm:$0xff]
    %v238 = vld [vmem:[%s1 + $0x1a0] sm:$0xff]
    %v239 = vld [vmem:[%s1 + $0x1a8] sm:$0xff]
    %v240 = vld [vmem:[%s1 + $0x1b0] sm:$0xff]
    %v241 = vld [vmem:[%s1 + $0x1b8] sm:$0xff]
    %v242 = vld [vmem:[%s1 + $0x1c0] sm:$0xff]
    %v243 = vld [vmem:[%s1 + $0x1c8] sm:$0xff]
    %v244 = vld [vmem:[%s1 + $0x1d0] sm:$0xff]
    %v245 = vld [vmem:[%s1 + $0x1d8] sm:$0xff]
    %v246 = vld [vmem:[%s1 + $0x1e0] sm:$0xff]
    %v247 = vld [vmem:[%s1 + $0x1e8] sm:$0xff]
    %v248 = vld [vmem:[%s1 + $0x1f0] sm:$0xff]
    %v249 = vld [vmem:[%s1 + $0x1f8] sm:$0xff]
    %v250 = vld [vmem:[%s1 + $0x200] sm:$0xff]
    %v251 = vld [vmem:[%s1 + $0x208] sm:$0xff]
    %v252 = vld [vmem:[%s1 + $0x210] sm:$0xff]
    %v253 = vld [vmem:[%s1 + $0x218] sm:$0xff]
    %v254 = vld [vmem:[%s1 + $0x220] sm:$0xff]
    %v255 = vld [vmem:[%s1 + $0x228] sm:$0xff]
    %v256 = vld [vmem:[%s1 + $0x230] sm:$0xff]
    %v257 = vld [vmem:[%s1 + $0x238] sm:$0xff]
    %v258 = vld [vmem:[%s1 + $0x240] sm:$0xff]
    %v259 = vld [vmem:[%s1 + $0x248] sm:$0xff]
    %v260 = vld [vmem:[%s1 + $0x250] sm:$0xff]
    %v261 = vld [vmem:[%s1 + $0x258] sm:$0xff]
    %v262 = vld [vmem:[%s1 + $0x260] sm:$0xff]
    %v263 = vld [vmem:[%s1 + $0x268] sm:$0xff]
    %v264 = vld [vmem:[%s1 + $0x270] sm:$0xff]
    %v265 = vld [vmem:[%s1 + $0x278] sm:$0xff]
    %v266 = vld [vmem:[%s1 + $0x280] sm:$0xff]
    %v267 = vld [vmem:[%s1 + $0x288] sm:$0xff]
    %v268 = vld [vmem:[%s1 + $0x290] sm:$0xff]
    %v269 = vld [vmem:[%s1 + $0x298] sm:$0xff]
    %v270 = vld [vmem:[%s1 + $0x2a0] sm:$0xff]
    %v271 = vld [vmem:[%s1 + $0x2a8] sm:$0xff]
    %v272 = vld [vmem:[%s1 + $0x2b0] sm:$0xff]
    %v273 = vld [vmem:[%s1 + $0x2b8] sm:$0xff]
    %v274 = vld [vmem:[%s1 + $0x2c0] sm:$0xff]
    %v275 = vld [vmem:[%s1 + $0x2c8] sm:$0xff]
    %v276 = vld [vmem:[%s1 + $0x2d0] sm:$0xff]
    %v277 = vld [vmem:[%s1 + $0x2d8] sm:$0xff]
    %v278 = vld [vmem:[%s1 + $0x2e0] sm:$0xff]
    %v279 = vld [vmem:[%s1 + $0x2e8] sm:$0xff]
    %v280 = vld [vmem:[%s1 + $0x2f0] sm:$0xff]
    %v281 = vld [vmem:[%s1 + $0x2f8] sm:$0xff]
    %v282 = vld [vmem:[%s1 + $0x300] sm:$0xff]
    %v283 = vld [vmem:[%s1 + $0x308] sm:$0xff]
    %v284 = vld [vmem:[%s1 + $0x310] sm:$0xff]
    %v285 = vld [vmem:[%s1 + $0x318] sm:$0xff]
    %v286 = vld [vmem:[%s1 + $0x320] sm:$0xff]
    %v287 = vld [vmem:[%s1 + $0x328] sm:$0xff]
    %v288 = vld [vmem:[%s1 + $0x330] sm:$0xff]
    %v289 = vld [vmem:[%s1 + $0x338] sm:$0xff]
    %v290 = vld [vmem:[%s1 + $0x340] sm:$0xff]
    %v291 = vld [vmem:[%s1 + $0x348] sm:$0xff]
    %v292 = vld [vmem:[%s1 + $0x350] sm:$0xff]
    %v293 = vld [vmem:[%s1 + $0x358] sm:$0xff]
    %v294 = vld [vmem:[%s1 + $0x360] sm:$0xff]
    %v295 = vld [vmem:[%s1 + $0x368] sm:$0xff]
    %v296 = vld [vmem:[%s1 + $0x370] sm:$0xff]
    %v297 = vld [vmem:[%s1 + $0x378] sm:$0xff]
    %v298 = vld [vmem:[%s2] sm:$0x3]
    %v300 = vperm.slane %v298, 0
    %v301 = vperm.slane %v298, 1
    %v432 = vunpack.c.l.b16 %v58
    %v433 = vunpack.c.h.b16 %v58
    %v434 = vunpack.c.l.b16 %v59
    %v435 = vunpack.c.h.b16 %v59
    %v436 = vunpack.c.l.b16 %v60
    %v437 = vunpack.c.h.b16 %v60
    %v438 = vunpack.c.l.b16 %v61
    %v439 = vunpack.c.l.b16 %v62
    %v440 = vunpack.c.h.b16 %v62
    %v441 = vunpack.c.l.b16 %v63
    %v442 = vunpack.c.h.b16 %v63
    %v443 = vunpack.c.l.b16 %v64
    %v444 = vunpack.c.h.b16 %v64
    %v445 = vunpack.c.l.b16 %v65
    %v446 = vunpack.c.l.b16 %v66
    %v447 = vunpack.c.h.b16 %v66
    %v448 = vunpack.c.l.b16 %v67
    %v449 = vunpack.c.h.b16 %v67
    %v450 = vunpack.c.l.b16 %v68
    %v451 = vunpack.c.h.b16 %v68
    %v452 = vunpack.c.l.b16 %v69
    %v453 = vunpack.c.l.b16 %v70
    %v454 = vunpack.c.h.b16 %v70
    %v455 = vunpack.c.l.b16 %v71
    %v456 = vunpack.c.h.b16 %v71
    %v457 = vunpack.c.l.b16 %v72
    %v458 = vunpack.c.h.b16 %v72
    %v459 = vunpack.c.l.b16 %v73
    %v460 = vunpack.c.l.b16 %v74
    %v461 = vunpack.c.h.b16 %v74
    %v462 = vunpack.c.l.b16 %v75
    %v463 = vunpack.c.h.b16 %v75
    %v464 = vunpack.c.l.b16 %v76
    %v465 = vunpack.c.h.b16 %v76
    %v466 = vunpack.c.l.b16 %v77
    %v467 = vunpack.c.l.b16 %v78
    %v468 = vunpack.c.h.b16 %v78
    %v469 = vunpack.c.l.b16 %v79
    %v470 = vunpack.c.h.b16 %v79
    %v471 = vunpack.c.l.b16 %v80
    %v472 = vunpack.c.h.b16 %v80
    %v473 = vunpack.c.l.b16 %v81
    %v474 = vunpack.c.l.b16 %v82
    %v475 = vunpack.c.h.b16 %v82
    %v476 = vunpack.c.l.b16 %v83
    %v477 = vunpack.c.h.b16 %v83
    %v478 = vunpack.c.l.b16 %v84
    %v479 = vunpack.c.h.b16 %v84
    %v480 = vunpack.c.l.b16 %v85
    %v481 = vunpack.c.l.b16 %v86
    %v482 = vunpack.c.h.b16 %v86
    %v483 = vunpack.c.l.b16 %v87
    %v484 = vunpack.c.h.b16 %v87
    %v485 = vunpack.c.l.b16 %v88
    %v486 = vunpack.c.h.b16 %v88
    %v487 = vunpack.c.l.b16 %v89
    %v488 = vunpack.c.l.b16 %v90
    %v489 = vunpack.c.h.b16 %v90
    %v490 = vunpack.c.l.b16 %v91
    %v491 = vunpack.c.h.b16 %v91
    %v492 = vunpack.c.l.b16 %v92
    %v493 = vunpack.c.h.b16 %v92
    %v494 = vunpack.c.l.b16 %v93
    %v495 = vunpack.c.l.b16 %v94
    %v496 = vunpack.c.h.b16 %v94
    %v497 = vunpack.c.l.b16 %v95
    %v498 = vunpack.c.h.b16 %v95
    %v499 = vunpack.c.l.b16 %v96
    %v500 = vunpack.c.h.b16 %v96
    %v501 = vunpack.c.l.b16 %v97
    %v502 = vunpack.c.l.b16 %v98
    %v503 = vunpack.c.h.b16 %v98
    %v504 = vunpack.c.l.b16 %v99
    %v505 = vunpack.c.h.b16 %v99
    %v506 = vunpack.c.l.b16 %v100
    %v507 = vunpack.c.h.b16 %v100
    %v508 = vunpack.c.l.b16 %v101
    %v509 = vunpack.c.l.b16 %v102
    %v510 = vunpack.c.h.b16 %v102
    %v511 = vunpack.c.l.b16 %v103
    %v512 = vunpack.c.h.b16 %v103
    %v513 = vunpack.c.l.b16 %v104
    %v514 = vunpack.c.h.b16 %v104
    %v515 = vunpack.c.l.b16 %v105
    %v516 = vunpack.c.l.b16 %v106
    %v517 = vunpack.c.h.b16 %v106
    %v518 = vunpack.c.l.b16 %v107
    %v519 = vunpack.c.h.b16 %v107
    %v520 = vunpack.c.l.b16 %v108
    %v521 = vunpack.c.h.b16 %v108
    %v522 = vunpack.c.l.b16 %v109
    %v523 = vunpack.c.l.b16 %v110
    %v524 = vunpack.c.h.b16 %v110
    %v525 = vunpack.c.l.b16 %v111
    %v526 = vunpack.c.h.b16 %v111
    %v527 = vunpack.c.l.b16 %v112
    %v528 = vunpack.c.h.b16 %v112
    %v529 = vunpack.c.l.b16 %v113
    %v530 = vunpack.c.l.b16 %v114
    %v531 = vunpack.c.h.b16 %v114
    %v532 = vunpack.c.l.b16 %v115
    %v533 = vunpack.c.h.b16 %v115
    %v534 = vunpack.c.l.b16 %v116
    %v535 = vunpack.c.h.b16 %v116
    %v536 = vunpack.c.l.b16 %v117
    %v537 = vunpack.c.l.b16 %v118
    %v538 = vunpack.c.h.b16 %v118
    %v539 = vunpack.c.l.b16 %v119
    %v540 = vunpack.c.h.b16 %v119
    %v541 = vunpack.c.l.b16 %v120
    %v542 = vunpack.c.h.b16 %v120
    %v543 = vunpack.c.l.b16 %v121
    %v544 = vunpack.c.l.b16 %v122
    %v545 = vunpack.c.h.b16 %v122
    %v546 = vunpack.c.l.b16 %v123
    %v547 = vunpack.c.h.b16 %v123
    %v548 = vunpack.c.l.b16 %v124
    %v549 = vunpack.c.h.b16 %v124
    %v550 = vunpack.c.l.b16 %v125
    %v551 = vunpack.c.l.b16 %v126
    %v552 = vunpack.c.h.b16 %v126
    %v553 = vunpack.c.l.b16 %v127
    %v554 = vunpack.c.h.b16 %v127
    %v555 = vunpack.c.l.b16 %v128
    %v556 = vunpack.c.h.b16 %v128
    %v557 = vunpack.c.l.b16 %v129
    %v558 = vunpack.c.l.b16 %v130
    %v559 = vunpack.c.h.b16 %v130
    %v560 = vunpack.c.l.b16 %v131
    %v561 = vunpack.c.h.b16 %v131
    %v562 = vunpack.c.l.b16 %v132
    %v563 = vunpack.c.h.b16 %v132
    %v564 = vunpack.c.l.b16 %v133
    %v565 = vunpack.c.l.b16 %v134
    %v566 = vunpack.c.h.b16 %v134
    %v567 = vunpack.c.l.b16 %v135
    %v568 = vunpack.c.h.b16 %v135
    %v569 = vunpack.c.l.b16 %v136
    %v570 = vunpack.c.h.b16 %v136
    %v571 = vunpack.c.l.b16 %v137
    %v572 = vunpack.c.l.b16 %v138
    %v573 = vunpack.c.h.b16 %v138
    %v574 = vunpack.c.l.b16 %v139
    %v575 = vunpack.c.h.b16 %v139
    %v576 = vunpack.c.l.b16 %v140
    %v577 = vunpack.c.h.b16 %v140
    %v578 = vunpack.c.l.b16 %v141
    %v579 = vunpack.c.l.b16 %v142
    %v580 = vunpack.c.h.b16 %v142
    %v581 = vunpack.c.l.b16 %v143
    %v582 = vunpack.c.h.b16 %v143
    %v583 = vunpack.c.l.b16 %v144
    %v584 = vunpack.c.h.b16 %v144
    %v585 = vunpack.c.l.b16 %v145
    %v586 = vunpack.c.l.b16 %v146
    %v587 = vunpack.c.h.b16 %v146
    %v588 = vunpack.c.l.b16 %v147
    %v589 = vunpack.c.h.b16 %v147
    %v590 = vunpack.c.l.b16 %v148
    %v591 = vunpack.c.h.b16 %v148
    %v592 = vunpack.c.l.b16 %v149
    %v593 = vunpack.c.l.b16 %v150
    %v594 = vunpack.c.h.b16 %v150
    %v595 = vunpack.c.l.b16 %v151
    %v596 = vunpack.c.h.b16 %v151
    %v597 = vunpack.c.l.b16 %v152
    %v598 = vunpack.c.h.b16 %v152
    %v599 = vunpack.c.l.b16 %v153
    %v600 = vunpack.c.l.b16 %v154
    %v601 = vunpack.c.h.b16 %v154
    %v602 = vunpack.c.l.b16 %v155
    %v603 = vunpack.c.h.b16 %v155
    %v604 = vunpack.c.l.b16 %v156
    %v605 = vunpack.c.h.b16 %v156
    %v606 = vunpack.c.l.b16 %v157
    %v607 = vunpack.c.l.b16 %v158
    %v608 = vunpack.c.h.b16 %v158
    %v609 = vunpack.c.l.b16 %v159
    %v610 = vunpack.c.h.b16 %v159
    %v611 = vunpack.c.l.b16 %v160
    %v612 = vunpack.c.h.b16 %v160
    %v613 = vunpack.c.l.b16 %v161
    %v614 = vunpack.c.l.b16 %v162
    %v615 = vunpack.c.h.b16 %v162
    %v616 = vunpack.c.l.b16 %v163
    %v617 = vunpack.c.h.b16 %v163
    %v618 = vunpack.c.l.b16 %v164
    %v619 = vunpack.c.h.b16 %v164
    %v620 = vunpack.c.l.b16 %v165
    %v621 = vunpack.c.l.b16 %v166
    %v622 = vunpack.c.h.b16 %v166
    %v623 = vunpack.c.l.b16 %v167
    %v624 = vunpack.c.h.b16 %v167
    %v625 = vunpack.c.l.b16 %v168
    %v626 = vunpack.c.h.b16 %v168
    %v627 = vunpack.c.l.b16 %v169
    %v628 = vunpack.c.l.b16 %v170
    %v629 = vunpack.c.h.b16 %v170
    %v630 = vunpack.c.l.b16 %v171
    %v631 = vunpack.c.h.b16 %v171
    %v632 = vunpack.c.l.b16 %v172
    %v633 = vunpack.c.h.b16 %v172
    %v634 = vunpack.c.l.b16 %v173
    %v635 = vunpack.c.l.b16 %v174
    %v636 = vunpack.c.h.b16 %v174
    %v637 = vunpack.c.l.b16 %v175
    %v638 = vunpack.c.h.b16 %v175
    %v639 = vunpack.c.l.b16 %v176
    %v640 = vunpack.c.h.b16 %v176
    %v641 = vunpack.c.l.b16 %v177
    %v642 = vunpack.c.l.b16 %v178
    %v643 = vunpack.c.h.b16 %v178
    %v644 = vunpack.c.l.b16 %v179
    %v645 = vunpack.c.h.b16 %v179
    %v646 = vunpack.c.l.b16 %v180
    %v647 = vunpack.c.h.b16 %v180
    %v648 = vunpack.c.l.b16 %v181
    %v649 = vunpack.c.l.b16 %v182
    %v650 = vunpack.c.h.b16 %v182
    %v651 = vunpack.c.l.b16 %v183
    %v652 = vunpack.c.h.b16 %v183
    %v653 = vunpack.c.l.b16 %v184
    %v654 = vunpack.c.h.b16 %v184
    %v655 = vunpack.c.l.b16 %v185
    %v656 = vpack.c.b16 %v439, %v432
    %v657 = vpack.c.b16 %v440, %v433
    %v658 = vpack.c.b16 %v441, %v434
    %v659 = vpack.c.b16 %v442, %v435
    %v660 = vpack.c.b16 %v443, %v436
    %v661 = vpack.c.b16 %v444, %v437
    %v662 = vpack.c.b16 %v445, %v438
    %v663 = vpack.c.b16 %v453, %v446
    %v664 = vpack.c.b16 %v454, %v447
    %v665 = vpack.c.b16 %v455, %v448
    %v666 = vpack.c.b16 %v456, %v449
    %v667 = vpack.c.b16 %v457, %v450
    %v668 = vpack.c.b16 %v458, %v451
    %v669 = vpack.c.b16 %v459, %v452
    %v670 = vpack.c.b16 %v467, %v460
    %v671 = vpack.c.b16 %v468, %v461
    %v672 = vpack.c.b16 %v469, %v462
    %v673 = vpack.c.b16 %v470, %v463
    %v674 = vpack.c.b16 %v471, %v464
    %v675 = vpack.c.b16 %v472, %v465
    %v676 = vpack.c.b16 %v473, %v466
    %v677 = vpack.c.b16 %v481, %v474
    %v678 = vpack.c.b16 %v482, %v475
    %v679 = vpack.c.b16 %v483, %v476
    %v680 = vpack.c.b16 %v484, %v477
    %v681 = vpack.c.b16 %v485, %v478
    %v682 = vpack.c.b16 %v486, %v479
    %v683 = vpack.c.b16 %v487, %v480
    %v684 = vpack.c.b16 %v495, %v488
    %v685 = vpack.c.b16 %v496, %v489
    %v686 = vpack.c.b16 %v497, %v490
    %v687 = vpack.c.b16 %v498, %v491
    %v688 = vpack.c.b16 %v499, %v492
    %v689 = vpack.c.b16 %v500, %v493
    %v690 = vpack.c.b16 %v501, %v494
    %v691 = vpack.c.b16 %v509, %v502
    %v692 = vpack.c.b16 %v510, %v503
    %v693 = vpack.c.b16 %v511, %v504
    %v694 = vpack.c.b16 %v512, %v505
    %v695 = vpack.c.b16 %v513, %v506
    %v696 = vpack.c.b16 %v514, %v507
    %v697 = vpack.c.b16 %v515, %v508
    %v698 = vpack.c.b16 %v523, %v516
    %v699 = vpack.c.b16 %v524, %v517
    %v700 = vpack.c.b16 %v525, %v518
    %v701 = vpack.c.b16 %v526, %v519
    %v702 = vpack.c.b16 %v527, %v520
    %v703 = vpack.c.b16 %v528, %v521
    %v704 = vpack.c.b16 %v529, %v522
    %v705 = vpack.c.b16 %v537, %v530
    %v706 = vpack.c.b16 %v538, %v531
    %v707 = vpack.c.b16 %v539, %v532
    %v708 = vpack.c.b16 %v540, %v533
    %v709 = vpack.c.b16 %v541, %v534
    %v710 = vpack.c.b16 %v542, %v535
    %v711 = vpack.c.b16 %v543, %v536
    %v712 = vpack.c.b16 %v551, %v544
    %v713 = vpack.c.b16 %v552, %v545
    %v714 = vpack.c.b16 %v553, %v546
    %v715 = vpack.c.b16 %v554, %v547
    %v716 = vpack.c.b16 %v555, %v548
    %v717 = vpack.c.b16 %v556, %v549
    %v718 = vpack.c.b16 %v557, %v550
    %v719 = vpack.c.b16 %v565, %v558
    %v720 = vpack.c.b16 %v566, %v559
    %v721 = vpack.c.b16 %v567, %v560
    %v722 = vpack.c.b16 %v568, %v561
    %v723 = vpack.c.b16 %v569, %v562
    %v724 = vpack.c.b16 %v570, %v563
    %v725 = vpack.c.b16 %v571, %v564
    %v726 = vpack.c.b16 %v579, %v572
    %v727 = vpack.c.b16 %v580, %v573
    %v728 = vpack.c.b16 %v581, %v574
    %v729 = vpack.c.b16 %v582, %v575
    %v730 = vpack.c.b16 %v583, %v576
    %v731 = vpack.c.b16 %v584, %v577
    %v732 = vpack.c.b16 %v585, %v578
    %v733 = vpack.c.b16 %v593, %v586
    %v734 = vpack.c.b16 %v594, %v587
    %v735 = vpack.c.b16 %v595, %v588
    %v736 = vpack.c.b16 %v596, %v589
    %v737 = vpack.c.b16 %v597, %v590
    %v738 = vpack.c.b16 %v598, %v591
    %v739 = vpack.c.b16 %v599, %v592
    %v740 = vpack.c.b16 %v607, %v600
    %v741 = vpack.c.b16 %v608, %v601
    %v742 = vpack.c.b16 %v609, %v602
    %v743 = vpack.c.b16 %v610, %v603
    %v744 = vpack.c.b16 %v611, %v604
    %v745 = vpack.c.b16 %v612, %v605
    %v746 = vpack.c.b16 %v613, %v606
    %v747 = vpack.c.b16 %v621, %v614
    %v748 = vpack.c.b16 %v622, %v615
    %v749 = vpack.c.b16 %v623, %v616
    %v750 = vpack.c.b16 %v624, %v617
    %v751 = vpack.c.b16 %v625, %v618
    %v752 = vpack.c.b16 %v626, %v619
    %v753 = vpack.c.b16 %v627, %v620
    %v754 = vpack.c.b16 %v635, %v628
    %v755 = vpack.c.b16 %v636, %v629
    %v756 = vpack.c.b16 %v637, %v630
    %v757 = vpack.c.b16 %v638, %v631
    %v758 = vpack.c.b16 %v639, %v632
    %v759 = vpack.c.b16 %v640, %v633
    %v760 = vpack.c.b16 %v641, %v634
    %v761 = vpack.c.b16 %v649, %v642
    %v762 = vpack.c.b16 %v650, %v643
    %v763 = vpack.c.b16 %v651, %v644
    %v764 = vpack.c.b16 %v652, %v645
    %v765 = vpack.c.b16 %v653, %v646
    %v766 = vpack.c.b16 %v654, %v647
    %v767 = vpack.c.b16 %v655, %v648
    %v992 = vunpack.c.l.b16 %v186
    %v993 = vunpack.c.h.b16 %v186
    %v994 = vunpack.c.l.b16 %v187
    %v995 = vunpack.c.h.b16 %v187
    %v996 = vunpack.c.l.b16 %v188
    %v997 = vunpack.c.h.b16 %v188
    %v998 = vunpack.c.l.b16 %v189
    %v999 = vunpack.c.h.b16 %v189
    %v1000 = vunpack.c.l.b16 %v190
    %v1001 = vunpack.c.h.b16 %v190
    %v1002 = vunpack.c.l.b16 %v191
    %v1003 = vunpack.c.h.b16 %v191
    %v1004 = vunpack.c.l.b16 %v192
    %v1005 = vunpack.c.h.b16 %v192
    %v1006 = vunpack.c.l.b16 %v193
    %v1007 = vunpack.c.h.b16 %v193
    %v1008 = vunpack.c.l.b16 %v194
    %v1009 = vunpack.c.h.b16 %v194
    %v1010 = vunpack.c.l.b16 %v195
    %v1011 = vunpack.c.h.b16 %v195
    %v1012 = vunpack.c.l.b16 %v196
    %v1013 = vunpack.c.h.b16 %v196
    %v1014 = vunpack.c.l.b16 %v197
    %v1015 = vunpack.c.h.b16 %v197
    %v1016 = vunpack.c.l.b16 %v198
    %v1017 = vunpack.c.h.b16 %v198
    %v1018 = vunpack.c.l.b16 %v199
    %v1019 = vunpack.c.h.b16 %v199
    %v1020 = vunpack.c.l.b16 %v200
    %v1021 = vunpack.c.h.b16 %v200
    %v1022 = vunpack.c.l.b16 %v201
    %v1023 = vunpack.c.h.b16 %v201
    %v1024 = vunpack.c.l.b16 %v202
    %v1025 = vunpack.c.h.b16 %v202
    %v1026 = vunpack.c.l.b16 %v203
    %v1027 = vunpack.c.h.b16 %v203
    %v1028 = vunpack.c.l.b16 %v204
    %v1029 = vunpack.c.h.b16 %v204
    %v1030 = vunpack.c.l.b16 %v205
    %v1031 = vunpack.c.h.b16 %v205
    %v1032 = vunpack.c.l.b16 %v206
    %v1033 = vunpack.c.h.b16 %v206
    %v1034 = vunpack.c.l.b16 %v207
    %v1035 = vunpack.c.h.b16 %v207
    %v1036 = vunpack.c.l.b16 %v208
    %v1037 = vunpack.c.h.b16 %v208
    %v1038 = vunpack.c.l.b16 %v209
    %v1039 = vunpack.c.h.b16 %v209
    %v1040 = vunpack.c.l.b16 %v210
    %v1041 = vunpack.c.h.b16 %v210
    %v1042 = vunpack.c.l.b16 %v211
    %v1043 = vunpack.c.h.b16 %v211
    %v1044 = vunpack.c.l.b16 %v212
    %v1045 = vunpack.c.h.b16 %v212
    %v1046 = vunpack.c.l.b16 %v213
    %v1047 = vunpack.c.h.b16 %v213
    %v1048 = vunpack.c.l.b16 %v214
    %v1049 = vunpack.c.h.b16 %v214
    %v1050 = vunpack.c.l.b16 %v215
    %v1051 = vunpack.c.h.b16 %v215
    %v1052 = vunpack.c.l.b16 %v216
    %v1053 = vunpack.c.h.b16 %v216
    %v1054 = vunpack.c.l.b16 %v217
    %v1055 = vunpack.c.h.b16 %v217
    %v1056 = vunpack.c.l.b16 %v218
    %v1057 = vunpack.c.h.b16 %v218
    %v1058 = vunpack.c.l.b16 %v219
    %v1059 = vunpack.c.h.b16 %v219
    %v1060 = vunpack.c.l.b16 %v220
    %v1061 = vunpack.c.h.b16 %v220
    %v1062 = vunpack.c.l.b16 %v221
    %v1063 = vunpack.c.h.b16 %v221
    %v1064 = vunpack.c.l.b16 %v222
    %v1065 = vunpack.c.h.b16 %v222
    %v1066 = vunpack.c.l.b16 %v223
    %v1067 = vunpack.c.h.b16 %v223
    %v1068 = vunpack.c.l.b16 %v224
    %v1069 = vunpack.c.h.b16 %v224
    %v1070 = vunpack.c.l.b16 %v225
    %v1071 = vunpack.c.h.b16 %v225
    %v1072 = vunpack.c.l.b16 %v226
    %v1073 = vunpack.c.h.b16 %v226
    %v1074 = vunpack.c.l.b16 %v227
    %v1075 = vunpack.c.h.b16 %v227
    %v1076 = vunpack.c.l.b16 %v228
    %v1077 = vunpack.c.h.b16 %v228
    %v1078 = vunpack.c.l.b16 %v229
    %v1079 = vunpack.c.h.b16 %v229
    %v1080 = vunpack.c.l.b16 %v230
    %v1081 = vunpack.c.h.b16 %v230
    %v1082 = vunpack.c.l.b16 %v231
    %v1083 = vunpack.c.h.b16 %v231
    %v1084 = vunpack.c.l.b16 %v232
    %v1085 = vunpack.c.h.b16 %v232
    %v1086 = vunpack.c.l.b16 %v233
    %v1087 = vunpack.c.h.b16 %v233
    %v1088 = vunpack.c.l.b16 %v234
    %v1089 = vunpack.c.h.b16 %v234
    %v1090 = vunpack.c.l.b16 %v235
    %v1091 = vunpack.c.h.b16 %v235
    %v1092 = vunpack.c.l.b16 %v236
    %v1093 = vunpack.c.h.b16 %v236
    %v1094 = vunpack.c.l.b16 %v237
    %v1095 = vunpack.c.h.b16 %v237
    %v1096 = vunpack.c.l.b16 %v238
    %v1097 = vunpack.c.h.b16 %v238
    %v1098 = vunpack.c.l.b16 %v239
    %v1099 = vunpack.c.h.b16 %v239
    %v1100 = vunpack.c.l.b16 %v240
    %v1101 = vunpack.c.h.b16 %v240
    %v1102 = vunpack.c.l.b16 %v241
    %v1103 = vunpack.c.h.b16 %v241
    %v1104 = vunpack.c.l.b16 %v242
    %v1105 = vunpack.c.h.b16 %v242
    %v1106 = vunpack.c.l.b16 %v243
    %v1107 = vunpack.c.h.b16 %v243
    %v1108 = vunpack.c.l.b16 %v244
    %v1109 = vunpack.c.h.b16 %v244
    %v1110 = vunpack.c.l.b16 %v245
    %v1111 = vunpack.c.h.b16 %v245
    %v1112 = vunpack.c.l.b16 %v246
    %v1113 = vunpack.c.h.b16 %v246
    %v1114 = vunpack.c.l.b16 %v247
    %v1115 = vunpack.c.h.b16 %v247
    %v1116 = vunpack.c.l.b16 %v248
    %v1117 = vunpack.c.h.b16 %v248
    %v1118 = vunpack.c.l.b16 %v249
    %v1119 = vunpack.c.h.b16 %v249
    %v1120 = vunpack.c.l.b16 %v250
    %v1121 = vunpack.c.h.b16 %v250
    %v1122 = vunpack.c.l.b16 %v251
    %v1123 = vunpack.c.h.b16 %v251
    %v1124 = vunpack.c.l.b16 %v252
    %v1125 = vunpack.c.h.b16 %v252
    %v1126 = vunpack.c.l.b16 %v253
    %v1127 = vunpack.c.h.b16 %v253
    %v1128 = vunpack.c.l.b16 %v254
    %v1129 = vunpack.c.h.b16 %v254
    %v1130 = vunpack.c.l.b16 %v255
    %v1131 = vunpack.c.h.b16 %v255
    %v1132 = vunpack.c.l.b16 %v256
    %v1133 = vunpack.c.h.b16 %v256
    %v1134 = vunpack.c.l.b16 %v257
    %v1135 = vunpack.c.h.b16 %v257
    %v1136 = vunpack.c.l.b16 %v258
    %v1137 = vunpack.c.h.b16 %v258
    %v1138 = vunpack.c.l.b16 %v259
    %v1139 = vunpack.c.h.b16 %v259
    %v1140 = vunpack.c.l.b16 %v260
    %v1141 = vunpack.c.h.b16 %v260
    %v1142 = vunpack.c.l.b16 %v261
    %v1143 = vunpack.c.h.b16 %v261
    %v1144 = vunpack.c.l.b16 %v262
    %v1145 = vunpack.c.h.b16 %v262
    %v1146 = vunpack.c.l.b16 %v263
    %v1147 = vunpack.c.h.b16 %v263
    %v1148 = vunpack.c.l.b16 %v264
    %v1149 = vunpack.c.h.b16 %v264
    %v1150 = vunpack.c.l.b16 %v265
    %v1151 = vunpack.c.h.b16 %v265
    %v1152 = vunpack.c.l.b16 %v266
    %v1153 = vunpack.c.h.b16 %v266
    %v1154 = vunpack.c.l.b16 %v267
    %v1155 = vunpack.c.h.b16 %v267
    %v1156 = vunpack.c.l.b16 %v268
    %v1157 = vunpack.c.h.b16 %v268
    %v1158 = vunpack.c.l.b16 %v269
    %v1159 = vunpack.c.h.b16 %v269
    %v1160 = vunpack.c.l.b16 %v270
    %v1161 = vunpack.c.h.b16 %v270
    %v1162 = vunpack.c.l.b16 %v271
    %v1163 = vunpack.c.h.b16 %v271
    %v1164 = vunpack.c.l.b16 %v272
    %v1165 = vunpack.c.h.b16 %v272
    %v1166 = vunpack.c.l.b16 %v273
    %v1167 = vunpack.c.h.b16 %v273
    %v1168 = vunpack.c.l.b16 %v274
    %v1169 = vunpack.c.h.b16 %v274
    %v1170 = vunpack.c.l.b16 %v275
    %v1171 = vunpack.c.h.b16 %v275
    %v1172 = vunpack.c.l.b16 %v276
    %v1173 = vunpack.c.h.b16 %v276
    %v1174 = vunpack.c.l.b16 %v277
    %v1175 = vunpack.c.h.b16 %v277
    %v1176 = vunpack.c.l.b16 %v278
    %v1177 = vunpack.c.h.b16 %v278
    %v1178 = vunpack.c.l.b16 %v279
    %v1179 = vunpack.c.h.b16 %v279
    %v1180 = vunpack.c.l.b16 %v280
    %v1181 = vunpack.c.h.b16 %v280
    %v1182 = vunpack.c.l.b16 %v281
    %v1183 = vunpack.c.h.b16 %v281
    %v1184 = vunpack.c.l.b16 %v282
    %v1185 = vunpack.c.h.b16 %v282
    %v1186 = vunpack.c.l.b16 %v283
    %v1187 = vunpack.c.h.b16 %v283
    %v1188 = vunpack.c.l.b16 %v284
    %v1189 = vunpack.c.h.b16 %v284
    %v1190 = vunpack.c.l.b16 %v285
    %v1191 = vunpack.c.h.b16 %v285
    %v1192 = vunpack.c.l.b16 %v286
    %v1193 = vunpack.c.h.b16 %v286
    %v1194 = vunpack.c.l.b16 %v287
    %v1195 = vunpack.c.h.b16 %v287
    %v1196 = vunpack.c.l.b16 %v288
    %v1197 = vunpack.c.h.b16 %v288
    %v1198 = vunpack.c.l.b16 %v289
    %v1199 = vunpack.c.h.b16 %v289
    %v1200 = vunpack.c.l.b16 %v290
    %v1201 = vunpack.c.h.b16 %v290
    %v1202 = vunpack.c.l.b16 %v291
    %v1203 = vunpack.c.h.b16 %v291
    %v1204 = vunpack.c.l.b16 %v292
    %v1205 = vunpack.c.h.b16 %v292
    %v1206 = vunpack.c.l.b16 %v293
    %v1207 = vunpack.c.h.b16 %v293
    %v1208 = vunpack.c.l.b16 %v294
    %v1209 = vunpack.c.h.b16 %v294
    %v1210 = vunpack.c.l.b16 %v295
    %v1211 = vunpack.c.h.b16 %v295
    %v1212 = vunpack.c.l.b16 %v296
    %v1213 = vunpack.c.h.b16 %v296
    %v1214 = vunpack.c.l.b16 %v297
    %v1215 = vunpack.c.h.b16 %v297
    %v1216 = vpack.c.b16 %v994, %v992
    %v1217 = vpack.c.b16 %v995, %v993
    %v1218 = vpack.c.b16 %v998, %v996
    %v1219 = vpack.c.b16 %v999, %v997
    %v1220 = vpack.c.b16 %v1002, %v1000
    %v1221 = vpack.c.b16 %v1003, %v1001
    %v1222 = vpack.c.b16 %v1006, %v1004
    %v1223 = vpack.c.b16 %v1007, %v1005
    %v1224 = vpack.c.b16 %v1010, %v1008
    %v1225 = vpack.c.b16 %v1011, %v1009
    %v1226 = vpack.c.b16 %v1014, %v1012
    %v1227 = vpack.c.b16 %v1015, %v1013
    %v1228 = vpack.c.b16 %v1018, %v1016
    %v1229 = vpack.c.b16 %v1019, %v1017
    %v1230 = vpack.c.b16 %v1022, %v1020
    %v1231 = vpack.c.b16 %v1023, %v1021
    %v1232 = vpack.c.b16 %v1026, %v1024
    %v1233 = vpack.c.b16 %v1027, %v1025
    %v1234 = vpack.c.b16 %v1030, %v1028
    %v1235 = vpack.c.b16 %v1031, %v1029
    %v1236 = vpack.c.b16 %v1034, %v1032
    %v1237 = vpack.c.b16 %v1035, %v1033
    %v1238 = vpack.c.b16 %v1038, %v1036
    %v1239 = vpack.c.b16 %v1039, %v1037
    %v1240 = vpack.c.b16 %v1042, %v1040
    %v1241 = vpack.c.b16 %v1043, %v1041
    %v1242 = vpack.c.b16 %v1046, %v1044
    %v1243 = vpack.c.b16 %v1047, %v1045
    %v1244 = vpack.c.b16 %v1050, %v1048
    %v1245 = vpack.c.b16 %v1051, %v1049
    %v1246 = vpack.c.b16 %v1054, %v1052
    %v1247 = vpack.c.b16 %v1055, %v1053
    %v1248 = vpack.c.b16 %v1058, %v1056
    %v1249 = vpack.c.b16 %v1059, %v1057
    %v1250 = vpack.c.b16 %v1062, %v1060
    %v1251 = vpack.c.b16 %v1063, %v1061
    %v1252 = vpack.c.b16 %v1066, %v1064
    %v1253 = vpack.c.b16 %v1067, %v1065
    %v1254 = vpack.c.b16 %v1070, %v1068
    %v1255 = vpack.c.b16 %v1071, %v1069
    %v1256 = vpack.c.b16 %v1074, %v1072
    %v1257 = vpack.c.b16 %v1075, %v1073
    %v1258 = vpack.c.b16 %v1078, %v1076
    %v1259 = vpack.c.b16 %v1079, %v1077
    %v1260 = vpack.c.b16 %v1082, %v1080
    %v1261 = vpack.c.b16 %v1083, %v1081
    %v1262 = vpack.c.b16 %v1086, %v1084
    %v1263 = vpack.c.b16 %v1087, %v1085
    %v1264 = vpack.c.b16 %v1090, %v1088
    %v1265 = vpack.c.b16 %v1091, %v1089
    %v1266 = vpack.c.b16 %v1094, %v1092
    %v1267 = vpack.c.b16 %v1095, %v1093
    %v1268 = vpack.c.b16 %v1098, %v1096
    %v1269 = vpack.c.b16 %v1099, %v1097
    %v1270 = vpack.c.b16 %v1102, %v1100
    %v1271 = vpack.c.b16 %v1103, %v1101
    %v1272 = vpack.c.b16 %v1106, %v1104
    %v1273 = vpack.c.b16 %v1107, %v1105
    %v1274 = vpack.c.b16 %v1110, %v1108
    %v1275 = vpack.c.b16 %v1111, %v1109
    %v1276 = vpack.c.b16 %v1114, %v1112
    %v1277 = vpack.c.b16 %v1115, %v1113
    %v1278 = vpack.c.b16 %v1118, %v1116
    %v1279 = vpack.c.b16 %v1119, %v1117
    %v1280 = vpack.c.b16 %v1122, %v1120
    %v1281 = vpack.c.b16 %v1123, %v1121
    %v1282 = vpack.c.b16 %v1126, %v1124
    %v1283 = vpack.c.b16 %v1127, %v1125
    %v1284 = vpack.c.b16 %v1130, %v1128
    %v1285 = vpack.c.b16 %v1131, %v1129
    %v1286 = vpack.c.b16 %v1134, %v1132
    %v1287 = vpack.c.b16 %v1135, %v1133
    %v1288 = vpack.c.b16 %v1138, %v1136
    %v1289 = vpack.c.b16 %v1139, %v1137
    %v1290 = vpack.c.b16 %v1142, %v1140
    %v1291 = vpack.c.b16 %v1143, %v1141
    %v1292 = vpack.c.b16 %v1146, %v1144
    %v1293 = vpack.c.b16 %v1147, %v1145
    %v1294 = vpack.c.b16 %v1150, %v1148
    %v1295 = vpack.c.b16 %v1151, %v1149
    %v1296 = vpack.c.b16 %v1154, %v1152
    %v1297 = vpack.c.b16 %v1155, %v1153
    %v1298 = vpack.c.b16 %v1158, %v1156
    %v1299 = vpack.c.b16 %v1159, %v1157
    %v1300 = vpack.c.b16 %v1162, %v1160
    %v1301 = vpack.c.b16 %v1163, %v1161
    %v1302 = vpack.c.b16 %v1166, %v1164
    %v1303 = vpack.c.b16 %v1167, %v1165
    %v1304 = vpack.c.b16 %v1170, %v1168
    %v1305 = vpack.c.b16 %v1171, %v1169
    %v1306 = vpack.c.b16 %v1174, %v1172
    %v1307 = vpack.c.b16 %v1175, %v1173
    %v1308 = vpack.c.b16 %v1178, %v1176
    %v1309 = vpack.c.b16 %v1179, %v1177
    %v1310 = vpack.c.b16 %v1182, %v1180
    %v1311 = vpack.c.b16 %v1183, %v1181
    %v1312 = vpack.c.b16 %v1186, %v1184
    %v1313 = vpack.c.b16 %v1187, %v1185
    %v1314 = vpack.c.b16 %v1190, %v1188
    %v1315 = vpack.c.b16 %v1191, %v1189
    %v1316 = vpack.c.b16 %v1194, %v1192
    %v1317 = vpack.c.b16 %v1195, %v1193
    %v1318 = vpack.c.b16 %v1198, %v1196
    %v1319 = vpack.c.b16 %v1199, %v1197
    %v1320 = vpack.c.b16 %v1202, %v1200
    %v1321 = vpack.c.b16 %v1203, %v1201
    %v1322 = vpack.c.b16 %v1206, %v1204
    %v1323 = vpack.c.b16 %v1207, %v1205
    %v1324 = vpack.c.b16 %v1210, %v1208
    %v1325 = vpack.c.b16 %v1211, %v1209
    %v1326 = vpack.c.b16 %v1214, %v1212
    %v1327 = vpack.c.b16 %v1215, %v1213
    %1440 = vmatpush.bf16.msra.mxu0 %v1230
    %1441 = vmatpush.bf16.msra.mxu0 %v1228
    %1442 = vmatpush.bf16.msra.mxu0 %v1226
    %1443 = vmatpush.bf16.msra.mxu0 %v1224
    %1444 = vmatpush.bf16.msra.mxu0 %v1222
    %1445 = vmatpush.bf16.msra.mxu0 %v1220
    %1446 = vmatpush.bf16.msra.mxu0 %v1218
    %1447 = vmatpush.bf16.msra.mxu0 %v1216
    %1448 = vmatmul.bf16.gmra.mxu0 %v656
    %v1449 = vpop.f32.mrf.mxu0
    %v1450 = vadd.f32 %v300, %v1449
    %v1451 = vpop.f32.mrf.mxu0
    %v1452 = vadd.f32 %v300, %v1451
    %1453 = vmatmul.bf16.gmra.mxu0 %v663
    %v1454 = vpop.f32.mrf.mxu0
    %v1455 = vadd.f32 %v300, %v1454
    %v1456 = vpop.f32.mrf.mxu0
    %v1457 = vadd.f32 %v300, %v1456
    %1458 = vmatmul.bf16.gmra.mxu0 %v670
    %v1459 = vpop.f32.mrf.mxu0
    %v1460 = vadd.f32 %v300, %v1459
    %v1461 = vpop.f32.mrf.mxu0
    %v1462 = vadd.f32 %v300, %v1461
    %1463 = vmatmul.bf16.gmra.mxu0 %v677
    %v1464 = vpop.f32.mrf.mxu0
    %v1465 = vadd.f32 %v300, %v1464
    %v1466 = vpop.f32.mrf.mxu0
    %v1467 = vadd.f32 %v300, %v1466
    %1468 = vmatmul.bf16.gmra.mxu0 %v684
    %v1469 = vpop.f32.mrf.mxu0
    %v1470 = vadd.f32 %v300, %v1469
    %v1471 = vpop.f32.mrf.mxu0
    %v1472 = vadd.f32 %v300, %v1471
    %1473 = vmatmul.bf16.gmra.mxu0 %v691
    %v1474 = vpop.f32.mrf.mxu0
    %v1475 = vadd.f32 %v300, %v1474
    %v1476 = vpop.f32.mrf.mxu0
    %v1477 = vadd.f32 %v300, %v1476
    %1478 = vmatmul.bf16.gmra.mxu0 %v698
    %v1479 = vpop.f32.mrf.mxu0
    %v1480 = vadd.f32 %v300, %v1479
    %v1481 = vpop.f32.mrf.mxu0
    %v1482 = vadd.f32 %v300, %v1481
    %1483 = vmatmul.bf16.gmra.mxu0 %v705
    %v1484 = vpop.f32.mrf.mxu0
    %v1485 = vadd.f32 %v300, %v1484
    %v1486 = vpop.f32.mrf.mxu0
    %v1487 = vadd.f32 %v300, %v1486
    %1488 = vmatmul.bf16.gmra.mxu0 %v712
    %v1489 = vpop.f32.mrf.mxu0
    %v1490 = vadd.f32 %v300, %v1489
    %v1491 = vpop.f32.mrf.mxu0
    %v1492 = vadd.f32 %v300, %v1491
    %1493 = vmatmul.bf16.gmra.mxu0 %v719
    %v1494 = vpop.f32.mrf.mxu0
    %v1495 = vadd.f32 %v300, %v1494
    %v1496 = vpop.f32.mrf.mxu0
    %v1497 = vadd.f32 %v300, %v1496
    %1498 = vmatmul.bf16.gmra.mxu0 %v726
    %v1499 = vpop.f32.mrf.mxu0
    %v1500 = vadd.f32 %v300, %v1499
    %v1501 = vpop.f32.mrf.mxu0
    %v1502 = vadd.f32 %v300, %v1501
    %1503 = vmatmul.bf16.gmra.mxu0 %v733
    %v1504 = vpop.f32.mrf.mxu0
    %v1505 = vadd.f32 %v300, %v1504
    %v1506 = vpop.f32.mrf.mxu0
    %v1507 = vadd.f32 %v300, %v1506
    %1508 = vmatmul.bf16.gmra.mxu0 %v740
    %v1509 = vpop.f32.mrf.mxu0
    %v1510 = vadd.f32 %v300, %v1509
    %v1511 = vpop.f32.mrf.mxu0
    %v1512 = vadd.f32 %v300, %v1511
    %1513 = vmatmul.bf16.gmra.mxu0 %v747
    %v1514 = vpop.f32.mrf.mxu0
    %v1515 = vadd.f32 %v300, %v1514
    %v1516 = vpop.f32.mrf.mxu0
    %v1517 = vadd.f32 %v300, %v1516
    %1518 = vmatmul.bf16.gmra.mxu0 %v754
    %v1519 = vpop.f32.mrf.mxu0
    %v1520 = vadd.f32 %v300, %v1519
    %v1521 = vpop.f32.mrf.mxu0
    %v1522 = vadd.f32 %v300, %v1521
    %1523 = vmatmul.bf16.gmra.mxu0 %v761
    %v1524 = vpop.f32.mrf.mxu0
    %v1525 = vadd.f32 %v300, %v1524
    %v1526 = vpop.f32.mrf.mxu0
    %v1527 = vadd.f32 %v300, %v1526
    %1528 = vdwg.mxu0
    %1529 = vmatpush.bf16.msra.mxu0 %v1246
    %1530 = vmatpush.bf16.msra.mxu0 %v1244
    %1531 = vmatpush.bf16.msra.mxu0 %v1242
    %1532 = vmatpush.bf16.msra.mxu0 %v1240
    %1533 = vmatpush.bf16.msra.mxu0 %v1238
    %1534 = vmatpush.bf16.msra.mxu0 %v1236
    %1535 = vmatpush.bf16.msra.mxu0 %v1234
    %1536 = vmatpush.bf16.msra.mxu0 %v1232
    %1537 = vmatmul.bf16.gmra.mxu0 %v657
    %v1538 = vpop.f32.mrf.mxu0
    %v1539 = vadd.f32 %v1450, %v1538
    %v1540 = vpop.f32.mrf.mxu0
    %v1541 = vadd.f32 %v1452, %v1540
    %1542 = vmatmul.bf16.gmra.mxu0 %v664
    %v1543 = vpop.f32.mrf.mxu0
    %v1544 = vadd.f32 %v1455, %v1543
    %v1545 = vpop.f32.mrf.mxu0
    %v1546 = vadd.f32 %v1457, %v1545
    %1547 = vmatmul.bf16.gmra.mxu0 %v671
    %v1548 = vpop.f32.mrf.mxu0
    %v1549 = vadd.f32 %v1460, %v1548
    %v1550 = vpop.f32.mrf.mxu0
    %v1551 = vadd.f32 %v1462, %v1550
    %1552 = vmatmul.bf16.gmra.mxu0 %v678
    %v1553 = vpop.f32.mrf.mxu0
    %v1554 = vadd.f32 %v1465, %v1553
    %v1555 = vpop.f32.mrf.mxu0
    %v1556 = vadd.f32 %v1467, %v1555
    %1557 = vmatmul.bf16.gmra.mxu0 %v685
    %v1558 = vpop.f32.mrf.mxu0
    %v1559 = vadd.f32 %v1470, %v1558
    %v1560 = vpop.f32.mrf.mxu0
    %v1561 = vadd.f32 %v1472, %v1560
    %1562 = vmatmul.bf16.gmra.mxu0 %v692
    %v1563 = vpop.f32.mrf.mxu0
    %v1564 = vadd.f32 %v1475, %v1563
    %v1565 = vpop.f32.mrf.mxu0
    %v1566 = vadd.f32 %v1477, %v1565
    %1567 = vmatmul.bf16.gmra.mxu0 %v699
    %v1568 = vpop.f32.mrf.mxu0
    %v1569 = vadd.f32 %v1480, %v1568
    %v1570 = vpop.f32.mrf.mxu0
    %v1571 = vadd.f32 %v1482, %v1570
    %1572 = vmatmul.bf16.gmra.mxu0 %v706
    %v1573 = vpop.f32.mrf.mxu0
    %v1574 = vadd.f32 %v1485, %v1573
    %v1575 = vpop.f32.mrf.mxu0
    %v1576 = vadd.f32 %v1487, %v1575
    %1577 = vmatmul.bf16.gmra.mxu0 %v713
    %v1578 = vpop.f32.mrf.mxu0
    %v1579 = vadd.f32 %v1490, %v1578
    %v1580 = vpop.f32.mrf.mxu0
    %v1581 = vadd.f32 %v1492, %v1580
    %1582 = vmatmul.bf16.gmra.mxu0 %v720
    %v1583 = vpop.f32.mrf.mxu0
    %v1584 = vadd.f32 %v1495, %v1583
    %v1585 = vpop.f32.mrf.mxu0
    %v1586 = vadd.f32 %v1497, %v1585
    %1587 = vmatmul.bf16.gmra.mxu0 %v727
    %v1588 = vpop.f32.mrf.mxu0
    %v1589 = vadd.f32 %v1500, %v1588
    %v1590 = vpop.f32.mrf.mxu0
    %v1591 = vadd.f32 %v1502, %v1590
    %1592 = vmatmul.bf16.gmra.mxu0 %v734
    %v1593 = vpop.f32.mrf.mxu0
    %v1594 = vadd.f32 %v1505, %v1593
    %v1595 = vpop.f32.mrf.mxu0
    %v1596 = vadd.f32 %v1507, %v1595
    %1597 = vmatmul.bf16.gmra.mxu0 %v741
    %v1598 = vpop.f32.mrf.mxu0
    %v1599 = vadd.f32 %v1510, %v1598
    %v1600 = vpop.f32.mrf.mxu0
    %v1601 = vadd.f32 %v1512, %v1600
    %1602 = vmatmul.bf16.gmra.mxu0 %v748
    %v1603 = vpop.f32.mrf.mxu0
    %v1604 = vadd.f32 %v1515, %v1603
    %v1605 = vpop.f32.mrf.mxu0
    %v1606 = vadd.f32 %v1517, %v1605
    %1607 = vmatmul.bf16.gmra.mxu0 %v755
    %v1608 = vpop.f32.mrf.mxu0
    %v1609 = vadd.f32 %v1520, %v1608
    %v1610 = vpop.f32.mrf.mxu0
    %v1611 = vadd.f32 %v1522, %v1610
    %1612 = vmatmul.bf16.gmra.mxu0 %v762
    %v1613 = vpop.f32.mrf.mxu0
    %v1614 = vadd.f32 %v1525, %v1613
    %v1615 = vpop.f32.mrf.mxu0
    %v1616 = vadd.f32 %v1527, %v1615
    %1617 = vdwg.mxu0
    %1618 = vmatpush.bf16.msra.mxu0 %v1262
    %1619 = vmatpush.bf16.msra.mxu0 %v1260
    %1620 = vmatpush.bf16.msra.mxu0 %v1258
    %1621 = vmatpush.bf16.msra.mxu0 %v1256
    %1622 = vmatpush.bf16.msra.mxu0 %v1254
    %1623 = vmatpush.bf16.msra.mxu0 %v1252
    %1624 = vmatpush.bf16.msra.mxu0 %v1250
    %1625 = vmatpush.bf16.msra.mxu0 %v1248
    %1626 = vmatmul.bf16.gmra.mxu0 %v658
    %v1627 = vpop.f32.mrf.mxu0
    %v1628 = vadd.f32 %v1539, %v1627
    %v1629 = vpop.f32.mrf.mxu0
    %v1630 = vadd.f32 %v1541, %v1629
    %1631 = vmatmul.bf16.gmra.mxu0 %v665
    %v1632 = vpop.f32.mrf.mxu0
    %v1633 = vadd.f32 %v1544, %v1632
    %v1634 = vpop.f32.mrf.mxu0
    %v1635 = vadd.f32 %v1546, %v1634
    %1636 = vmatmul.bf16.gmra.mxu0 %v672
    %v1637 = vpop.f32.mrf.mxu0
    %v1638 = vadd.f32 %v1549, %v1637
    %v1639 = vpop.f32.mrf.mxu0
    %v1640 = vadd.f32 %v1551, %v1639
    %1641 = vmatmul.bf16.gmra.mxu0 %v679
    %v1642 = vpop.f32.mrf.mxu0
    %v1643 = vadd.f32 %v1554, %v1642
    %v1644 = vpop.f32.mrf.mxu0
    %v1645 = vadd.f32 %v1556, %v1644
    %1646 = vmatmul.bf16.gmra.mxu0 %v686
    %v1647 = vpop.f32.mrf.mxu0
    %v1648 = vadd.f32 %v1559, %v1647
    %v1649 = vpop.f32.mrf.mxu0
    %v1650 = vadd.f32 %v1561, %v1649
    %1651 = vmatmul.bf16.gmra.mxu0 %v693
    %v1652 = vpop.f32.mrf.mxu0
    %v1653 = vadd.f32 %v1564, %v1652
    %v1654 = vpop.f32.mrf.mxu0
    %v1655 = vadd.f32 %v1566, %v1654
    %1656 = vmatmul.bf16.gmra.mxu0 %v700
    %v1657 = vpop.f32.mrf.mxu0
    %v1658 = vadd.f32 %v1569, %v1657
    %v1659 = vpop.f32.mrf.mxu0
    %v1660 = vadd.f32 %v1571, %v1659
    %1661 = vmatmul.bf16.gmra.mxu0 %v707
    %v1662 = vpop.f32.mrf.mxu0
    %v1663 = vadd.f32 %v1574, %v1662
    %v1664 = vpop.f32.mrf.mxu0
    %v1665 = vadd.f32 %v1576, %v1664
    %1666 = vmatmul.bf16.gmra.mxu0 %v714
    %v1667 = vpop.f32.mrf.mxu0
    %v1668 = vadd.f32 %v1579, %v1667
    %v1669 = vpop.f32.mrf.mxu0
    %v1670 = vadd.f32 %v1581, %v1669
    %1671 = vmatmul.bf16.gmra.mxu0 %v721
    %v1672 = vpop.f32.mrf.mxu0
    %v1673 = vadd.f32 %v1584, %v1672
    %v1674 = vpop.f32.mrf.mxu0
    %v1675 = vadd.f32 %v1586, %v1674
    %1676 = vmatmul.bf16.gmra.mxu0 %v728
    %v1677 = vpop.f32.mrf.mxu0
    %v1678 = vadd.f32 %v1589, %v1677
    %v1679 = vpop.f32.mrf.mxu0
    %v1680 = vadd.f32 %v1591, %v1679
    %1681 = vmatmul.bf16.gmra.mxu0 %v735
    %v1682 = vpop.f32.mrf.mxu0
    %v1683 = vadd.f32 %v1594, %v1682
    %v1684 = vpop.f32.mrf.mxu0
    %v1685 = vadd.f32 %v1596, %v1684
    %1686 = vmatmul.bf16.gmra.mxu0 %v742
    %v1687 = vpop.f32.mrf.mxu0
    %v1688 = vadd.f32 %v1599, %v1687
    %v1689 = vpop.f32.mrf.mxu0
    %v1690 = vadd.f32 %v1601, %v1689
    %1691 = vmatmul.bf16.gmra.mxu0 %v749
    %v1692 = vpop.f32.mrf.mxu0
    %v1693 = vadd.f32 %v1604, %v1692
    %v1694 = vpop.f32.mrf.mxu0
    %v1695 = vadd.f32 %v1606, %v1694
    %1696 = vmatmul.bf16.gmra.mxu0 %v756
    %v1697 = vpop.f32.mrf.mxu0
    %v1698 = vadd.f32 %v1609, %v1697
    %v1699 = vpop.f32.mrf.mxu0
    %v1700 = vadd.f32 %v1611, %v1699
    %1701 = vmatmul.bf16.gmra.mxu0 %v763
    %v1702 = vpop.f32.mrf.mxu0
    %v1703 = vadd.f32 %v1614, %v1702
    %v1704 = vpop.f32.mrf.mxu0
    %v1705 = vadd.f32 %v1616, %v1704
    %1706 = vdwg.mxu0
    %1707 = vmatpush.bf16.msra.mxu0 %v1278
    %1708 = vmatpush.bf16.msra.mxu0 %v1276
    %1709 = vmatpush.bf16.msra.mxu0 %v1274
    %1710 = vmatpush.bf16.msra.mxu0 %v1272
    %1711 = vmatpush.bf16.msra.mxu0 %v1270
    %1712 = vmatpush.bf16.msra.mxu0 %v1268
    %1713 = vmatpush.bf16.msra.mxu0 %v1266
    %1714 = vmatpush.bf16.msra.mxu0 %v1264
    %1715 = vmatmul.bf16.gmra.mxu0 %v659
    %v1716 = vpop.f32.mrf.mxu0
    %v1717 = vadd.f32 %v1628, %v1716
    %v1718 = vpop.f32.mrf.mxu0
    %v1719 = vadd.f32 %v1630, %v1718
    %1720 = vmatmul.bf16.gmra.mxu0 %v666
    %v1721 = vpop.f32.mrf.mxu0
    %v1722 = vadd.f32 %v1633, %v1721
    %v1723 = vpop.f32.mrf.mxu0
    %v1724 = vadd.f32 %v1635, %v1723
    %1725 = vmatmul.bf16.gmra.mxu0 %v673
    %v1726 = vpop.f32.mrf.mxu0
    %v1727 = vadd.f32 %v1638, %v1726
    %v1728 = vpop.f32.mrf.mxu0
    %v1729 = vadd.f32 %v1640, %v1728
    %1730 = vmatmul.bf16.gmra.mxu0 %v680
    %v1731 = vpop.f32.mrf.mxu0
    %v1732 = vadd.f32 %v1643, %v1731
    %v1733 = vpop.f32.mrf.mxu0
    %v1734 = vadd.f32 %v1645, %v1733
    %1735 = vmatmul.bf16.gmra.mxu0 %v687
    %v1736 = vpop.f32.mrf.mxu0
    %v1737 = vadd.f32 %v1648, %v1736
    %v1738 = vpop.f32.mrf.mxu0
    %v1739 = vadd.f32 %v1650, %v1738
    %1740 = vmatmul.bf16.gmra.mxu0 %v694
    %v1741 = vpop.f32.mrf.mxu0
    %v1742 = vadd.f32 %v1653, %v1741
    %v1743 = vpop.f32.mrf.mxu0
    %v1744 = vadd.f32 %v1655, %v1743
    %1745 = vmatmul.bf16.gmra.mxu0 %v701
    %v1746 = vpop.f32.mrf.mxu0
    %v1747 = vadd.f32 %v1658, %v1746
    %v1748 = vpop.f32.mrf.mxu0
    %v1749 = vadd.f32 %v1660, %v1748
    %1750 = vmatmul.bf16.gmra.mxu0 %v708
    %v1751 = vpop.f32.mrf.mxu0
    %v1752 = vadd.f32 %v1663, %v1751
    %v1753 = vpop.f32.mrf.mxu0
    %v1754 = vadd.f32 %v1665, %v1753
    %1755 = vmatmul.bf16.gmra.mxu0 %v715
    %v1756 = vpop.f32.mrf.mxu0
    %v1757 = vadd.f32 %v1668, %v1756
    %v1758 = vpop.f32.mrf.mxu0
    %v1759 = vadd.f32 %v1670, %v1758
    %1760 = vmatmul.bf16.gmra.mxu0 %v722
    %v1761 = vpop.f32.mrf.mxu0
    %v1762 = vadd.f32 %v1673, %v1761
    %v1763 = vpop.f32.mrf.mxu0
    %v1764 = vadd.f32 %v1675, %v1763
    %1765 = vmatmul.bf16.gmra.mxu0 %v729
    %v1766 = vpop.f32.mrf.mxu0
    %v1767 = vadd.f32 %v1678, %v1766
    %v1768 = vpop.f32.mrf.mxu0
    %v1769 = vadd.f32 %v1680, %v1768
    %1770 = vmatmul.bf16.gmra.mxu0 %v736
    %v1771 = vpop.f32.mrf.mxu0
    %v1772 = vadd.f32 %v1683, %v1771
    %v1773 = vpop.f32.mrf.mxu0
    %v1774 = vadd.f32 %v1685, %v1773
    %1775 = vmatmul.bf16.gmra.mxu0 %v743
    %v1776 = vpop.f32.mrf.mxu0
    %v1777 = vadd.f32 %v1688, %v1776
    %v1778 = vpop.f32.mrf.mxu0
    %v1779 = vadd.f32 %v1690, %v1778
    %1780 = vmatmul.bf16.gmra.mxu0 %v750
    %v1781 = vpop.f32.mrf.mxu0
    %v1782 = vadd.f32 %v1693, %v1781
    %v1783 = vpop.f32.mrf.mxu0
    %v1784 = vadd.f32 %v1695, %v1783
    %1785 = vmatmul.bf16.gmra.mxu0 %v757
    %v1786 = vpop.f32.mrf.mxu0
    %v1787 = vadd.f32 %v1698, %v1786
    %v1788 = vpop.f32.mrf.mxu0
    %v1789 = vadd.f32 %v1700, %v1788
    %1790 = vmatmul.bf16.gmra.mxu0 %v764
    %v1791 = vpop.f32.mrf.mxu0
    %v1792 = vadd.f32 %v1703, %v1791
    %v1793 = vpop.f32.mrf.mxu0
    %v1794 = vadd.f32 %v1705, %v1793
    %1795 = vdwg.mxu0
    %1796 = vmatpush.bf16.msra.mxu0 %v1294
    %1797 = vmatpush.bf16.msra.mxu0 %v1292
    %1798 = vmatpush.bf16.msra.mxu0 %v1290
    %1799 = vmatpush.bf16.msra.mxu0 %v1288
    %1800 = vmatpush.bf16.msra.mxu0 %v1286
    %1801 = vmatpush.bf16.msra.mxu0 %v1284
    %1802 = vmatpush.bf16.msra.mxu0 %v1282
    %1803 = vmatpush.bf16.msra.mxu0 %v1280
    %1804 = vmatmul.bf16.gmra.mxu0 %v660
    %v1805 = vpop.f32.mrf.mxu0
    %v1806 = vadd.f32 %v1717, %v1805
    %v1807 = vpop.f32.mrf.mxu0
    %v1808 = vadd.f32 %v1719, %v1807
    %1809 = vmatmul.bf16.gmra.mxu0 %v667
    %v1810 = vpop.f32.mrf.mxu0
    %v1811 = vadd.f32 %v1722, %v1810
    %v1812 = vpop.f32.mrf.mxu0
    %v1813 = vadd.f32 %v1724, %v1812
    %1814 = vmatmul.bf16.gmra.mxu0 %v674
    %v1815 = vpop.f32.mrf.mxu0
    %v1816 = vadd.f32 %v1727, %v1815
    %v1817 = vpop.f32.mrf.mxu0
    %v1818 = vadd.f32 %v1729, %v1817
    %1819 = vmatmul.bf16.gmra.mxu0 %v681
    %v1820 = vpop.f32.mrf.mxu0
    %v1821 = vadd.f32 %v1732, %v1820
    %v1822 = vpop.f32.mrf.mxu0
    %v1823 = vadd.f32 %v1734, %v1822
    %1824 = vmatmul.bf16.gmra.mxu0 %v688
    %v1825 = vpop.f32.mrf.mxu0
    %v1826 = vadd.f32 %v1737, %v1825
    %v1827 = vpop.f32.mrf.mxu0
    %v1828 = vadd.f32 %v1739, %v1827
    %1829 = vmatmul.bf16.gmra.mxu0 %v695
    %v1830 = vpop.f32.mrf.mxu0
    %v1831 = vadd.f32 %v1742, %v1830
    %v1832 = vpop.f32.mrf.mxu0
    %v1833 = vadd.f32 %v1744, %v1832
    %1834 = vmatmul.bf16.gmra.mxu0 %v702
    %v1835 = vpop.f32.mrf.mxu0
    %v1836 = vadd.f32 %v1747, %v1835
    %v1837 = vpop.f32.mrf.mxu0
    %v1838 = vadd.f32 %v1749, %v1837
    %1839 = vmatmul.bf16.gmra.mxu0 %v709
    %v1840 = vpop.f32.mrf.mxu0
    %v1841 = vadd.f32 %v1752, %v1840
    %v1842 = vpop.f32.mrf.mxu0
    %v1843 = vadd.f32 %v1754, %v1842
    %1844 = vmatmul.bf16.gmra.mxu0 %v716
    %v1845 = vpop.f32.mrf.mxu0
    %v1846 = vadd.f32 %v1757, %v1845
    %v1847 = vpop.f32.mrf.mxu0
    %v1848 = vadd.f32 %v1759, %v1847
    %1849 = vmatmul.bf16.gmra.mxu0 %v723
    %v1850 = vpop.f32.mrf.mxu0
    %v1851 = vadd.f32 %v1762, %v1850
    %v1852 = vpop.f32.mrf.mxu0
    %v1853 = vadd.f32 %v1764, %v1852
    %1854 = vmatmul.bf16.gmra.mxu0 %v730
    %v1855 = vpop.f32.mrf.mxu0
    %v1856 = vadd.f32 %v1767, %v1855
    %v1857 = vpop.f32.mrf.mxu0
    %v1858 = vadd.f32 %v1769, %v1857
    %1859 = vmatmul.bf16.gmra.mxu0 %v737
    %v1860 = vpop.f32.mrf.mxu0
    %v1861 = vadd.f32 %v1772, %v1860
    %v1862 = vpop.f32.mrf.mxu0
    %v1863 = vadd.f32 %v1774, %v1862
    %1864 = vmatmul.bf16.gmra.mxu0 %v744
    %v1865 = vpop.f32.mrf.mxu0
    %v1866 = vadd.f32 %v1777, %v1865
    %v1867 = vpop.f32.mrf.mxu0
    %v1868 = vadd.f32 %v1779, %v1867
    %1869 = vmatmul.bf16.gmra.mxu0 %v751
    %v1870 = vpop.f32.mrf.mxu0
    %v1871 = vadd.f32 %v1782, %v1870
    %v1872 = vpop.f32.mrf.mxu0
    %v1873 = vadd.f32 %v1784, %v1872
    %1874 = vmatmul.bf16.gmra.mxu0 %v758
    %v1875 = vpop.f32.mrf.mxu0
    %v1876 = vadd.f32 %v1787, %v1875
    %v1877 = vpop.f32.mrf.mxu0
    %v1878 = vadd.f32 %v1789, %v1877
    %1879 = vmatmul.bf16.gmra.mxu0 %v765
    %v1880 = vpop.f32.mrf.mxu0
    %v1881 = vadd.f32 %v1792, %v1880
    %v1882 = vpop.f32.mrf.mxu0
    %v1883 = vadd.f32 %v1794, %v1882
    %1884 = vdwg.mxu0
    %1885 = vmatpush.bf16.msra.mxu0 %v1310
    %1886 = vmatpush.bf16.msra.mxu0 %v1308
    %1887 = vmatpush.bf16.msra.mxu0 %v1306
    %1888 = vmatpush.bf16.msra.mxu0 %v1304
    %1889 = vmatpush.bf16.msra.mxu0 %v1302
    %1890 = vmatpush.bf16.msra.mxu0 %v1300
    %1891 = vmatpush.bf16.msra.mxu0 %v1298
    %1892 = vmatpush.bf16.msra.mxu0 %v1296
    %1893 = vmatmul.bf16.gmra.mxu0 %v661
    %v1894 = vpop.f32.mrf.mxu0
    %v1895 = vadd.f32 %v1806, %v1894
    %v1896 = vpop.f32.mrf.mxu0
    %v1897 = vadd.f32 %v1808, %v1896
    %1898 = vmatmul.bf16.gmra.mxu0 %v668
    %v1899 = vpop.f32.mrf.mxu0
    %v1900 = vadd.f32 %v1811, %v1899
    %v1901 = vpop.f32.mrf.mxu0
    %v1902 = vadd.f32 %v1813, %v1901
    %1903 = vmatmul.bf16.gmra.mxu0 %v675
    %v1904 = vpop.f32.mrf.mxu0
    %v1905 = vadd.f32 %v1816, %v1904
    %v1906 = vpop.f32.mrf.mxu0
    %v1907 = vadd.f32 %v1818, %v1906
    %1908 = vmatmul.bf16.gmra.mxu0 %v682
    %v1909 = vpop.f32.mrf.mxu0
    %v1910 = vadd.f32 %v1821, %v1909
    %v1911 = vpop.f32.mrf.mxu0
    %v1912 = vadd.f32 %v1823, %v1911
    %1913 = vmatmul.bf16.gmra.mxu0 %v689
    %v1914 = vpop.f32.mrf.mxu0
    %v1915 = vadd.f32 %v1826, %v1914
    %v1916 = vpop.f32.mrf.mxu0
    %v1917 = vadd.f32 %v1828, %v1916
    %1918 = vmatmul.bf16.gmra.mxu0 %v696
    %v1919 = vpop.f32.mrf.mxu0
    %v1920 = vadd.f32 %v1831, %v1919
    %v1921 = vpop.f32.mrf.mxu0
    %v1922 = vadd.f32 %v1833, %v1921
    %1923 = vmatmul.bf16.gmra.mxu0 %v703
    %v1924 = vpop.f32.mrf.mxu0
    %v1925 = vadd.f32 %v1836, %v1924
    %v1926 = vpop.f32.mrf.mxu0
    %v1927 = vadd.f32 %v1838, %v1926
    %1928 = vmatmul.bf16.gmra.mxu0 %v710
    %v1929 = vpop.f32.mrf.mxu0
    %v1930 = vadd.f32 %v1841, %v1929
    %v1931 = vpop.f32.mrf.mxu0
    %v1932 = vadd.f32 %v1843, %v1931
    %1933 = vmatmul.bf16.gmra.mxu0 %v717
    %v1934 = vpop.f32.mrf.mxu0
    %v1935 = vadd.f32 %v1846, %v1934
    %v1936 = vpop.f32.mrf.mxu0
    %v1937 = vadd.f32 %v1848, %v1936
    %1938 = vmatmul.bf16.gmra.mxu0 %v724
    %v1939 = vpop.f32.mrf.mxu0
    %v1940 = vadd.f32 %v1851, %v1939
    %v1941 = vpop.f32.mrf.mxu0
    %v1942 = vadd.f32 %v1853, %v1941
    %1943 = vmatmul.bf16.gmra.mxu0 %v731
    %v1944 = vpop.f32.mrf.mxu0
    %v1945 = vadd.f32 %v1856, %v1944
    %v1946 = vpop.f32.mrf.mxu0
    %v1947 = vadd.f32 %v1858, %v1946
    %1948 = vmatmul.bf16.gmra.mxu0 %v738
    %v1949 = vpop.f32.mrf.mxu0
    %v1950 = vadd.f32 %v1861, %v1949
    %v1951 = vpop.f32.mrf.mxu0
    %v1952 = vadd.f32 %v1863, %v1951
    %1953 = vmatmul.bf16.gmra.mxu0 %v745
    %v1954 = vpop.f32.mrf.mxu0
    %v1955 = vadd.f32 %v1866, %v1954
    %v1956 = vpop.f32.mrf.mxu0
    %v1957 = vadd.f32 %v1868, %v1956
    %1958 = vmatmul.bf16.gmra.mxu0 %v752
    %v1959 = vpop.f32.mrf.mxu0
    %v1960 = vadd.f32 %v1871, %v1959
    %v1961 = vpop.f32.mrf.mxu0
    %v1962 = vadd.f32 %v1873, %v1961
    %1963 = vmatmul.bf16.gmra.mxu0 %v759
    %v1964 = vpop.f32.mrf.mxu0
    %v1965 = vadd.f32 %v1876, %v1964
    %v1966 = vpop.f32.mrf.mxu0
    %v1967 = vadd.f32 %v1878, %v1966
    %1968 = vmatmul.bf16.gmra.mxu0 %v766
    %v1969 = vpop.f32.mrf.mxu0
    %v1970 = vadd.f32 %v1881, %v1969
    %v1971 = vpop.f32.mrf.mxu0
    %v1972 = vadd.f32 %v1883, %v1971
    %1973 = vdwg.mxu0
    %1974 = vmatpush.bf16.msra.mxu0 %v1326
    %1975 = vmatpush.bf16.msra.mxu0 %v1324
    %1976 = vmatpush.bf16.msra.mxu0 %v1322
    %1977 = vmatpush.bf16.msra.mxu0 %v1320
    %1978 = vmatpush.bf16.msra.mxu0 %v1318
    %1979 = vmatpush.bf16.msra.mxu0 %v1316
    %1980 = vmatpush.bf16.msra.mxu0 %v1314
    %1981 = vmatpush.bf16.msra.mxu0 %v1312
    %1982 = vmatmul.bf16.gmra.mxu0 %v662
    %v1983 = vpop.f32.mrf.mxu0
    %v1984 = vadd.f32 %v1895, %v1983
    %v1985 = vpop.f32.mrf.mxu0
    %v1986 = vadd.f32 %v1897, %v1985
    %1987 = vmatmul.bf16.gmra.mxu0 %v669
    %v1988 = vpop.f32.mrf.mxu0
    %v1989 = vadd.f32 %v1900, %v1988
    %v1990 = vpop.f32.mrf.mxu0
    %v1991 = vadd.f32 %v1902, %v1990
    %1992 = vmatmul.bf16.gmra.mxu0 %v676
    %v1993 = vpop.f32.mrf.mxu0
    %v1994 = vadd.f32 %v1905, %v1993
    %v1995 = vpop.f32.mrf.mxu0
    %v1996 = vadd.f32 %v1907, %v1995
    %1997 = vmatmul.bf16.gmra.mxu0 %v683
    %v1998 = vpop.f32.mrf.mxu0
    %v1999 = vadd.f32 %v1910, %v1998
    %v2000 = vpop.f32.mrf.mxu0
    %v2001 = vadd.f32 %v1912, %v2000
    %2002 = vmatmul.bf16.gmra.mxu0 %v690
    %v2003 = vpop.f32.mrf.mxu0
    %v2004 = vadd.f32 %v1915, %v2003
    %v2005 = vpop.f32.mrf.mxu0
    %v2006 = vadd.f32 %v1917, %v2005
    %2007 = vmatmul.bf16.gmra.mxu0 %v697
    %v2008 = vpop.f32.mrf.mxu0
    %v2009 = vadd.f32 %v1920, %v2008
    %v2010 = vpop.f32.mrf.mxu0
    %v2011 = vadd.f32 %v1922, %v2010
    %2012 = vmatmul.bf16.gmra.mxu0 %v704
    %v2013 = vpop.f32.mrf.mxu0
    %v2014 = vadd.f32 %v1925, %v2013
    %v2015 = vpop.f32.mrf.mxu0
    %v2016 = vadd.f32 %v1927, %v2015
    %2017 = vmatmul.bf16.gmra.mxu0 %v711
    %v2018 = vpop.f32.mrf.mxu0
    %v2019 = vadd.f32 %v1930, %v2018
    %v2020 = vpop.f32.mrf.mxu0
    %v2021 = vadd.f32 %v1932, %v2020
    %2022 = vmatmul.bf16.gmra.mxu0 %v718
    %v2023 = vpop.f32.mrf.mxu0
    %v2024 = vadd.f32 %v1935, %v2023
    %v2025 = vpop.f32.mrf.mxu0
    %v2026 = vadd.f32 %v1937, %v2025
    %2027 = vmatmul.bf16.gmra.mxu0 %v725
    %v2028 = vpop.f32.mrf.mxu0
    %v2029 = vadd.f32 %v1940, %v2028
    %v2030 = vpop.f32.mrf.mxu0
    %v2031 = vadd.f32 %v1942, %v2030
    %2032 = vmatmul.bf16.gmra.mxu0 %v732
    %v2033 = vpop.f32.mrf.mxu0
    %v2034 = vadd.f32 %v1945, %v2033
    %v2035 = vpop.f32.mrf.mxu0
    %v2036 = vadd.f32 %v1947, %v2035
    %2037 = vmatmul.bf16.gmra.mxu0 %v739
    %v2038 = vpop.f32.mrf.mxu0
    %v2039 = vadd.f32 %v1950, %v2038
    %v2040 = vpop.f32.mrf.mxu0
    %v2041 = vadd.f32 %v1952, %v2040
    %2042 = vmatmul.bf16.gmra.mxu0 %v746
    %v2043 = vpop.f32.mrf.mxu0
    %v2044 = vadd.f32 %v1955, %v2043
    %v2045 = vpop.f32.mrf.mxu0
    %v2046 = vadd.f32 %v1957, %v2045
    %2047 = vmatmul.bf16.gmra.mxu0 %v753
    %v2048 = vpop.f32.mrf.mxu0
    %v2049 = vadd.f32 %v1960, %v2048
    %v2050 = vpop.f32.mrf.mxu0
    %v2051 = vadd.f32 %v1962, %v2050
    %2052 = vmatmul.bf16.gmra.mxu0 %v760
    %v2053 = vpop.f32.mrf.mxu0
    %v2054 = vadd.f32 %v1965, %v2053
    %v2055 = vpop.f32.mrf.mxu0
    %v2056 = vadd.f32 %v1967, %v2055
    %2057 = vmatmul.bf16.gmra.mxu0 %v767
    %v2058 = vpop.f32.mrf.mxu0
    %v2059 = vadd.f32 %v1970, %v2058
    %v2060 = vpop.f32.mrf.mxu0
    %v2061 = vadd.f32 %v1972, %v2060
    %2062 = vdwg.mxu0
    %2063 = vmatpush.bf16.msra.mxu0 %v1231
    %2064 = vmatpush.bf16.msra.mxu0 %v1229
    %2065 = vmatpush.bf16.msra.mxu0 %v1227
    %2066 = vmatpush.bf16.msra.mxu0 %v1225
    %2067 = vmatpush.bf16.msra.mxu0 %v1223
    %2068 = vmatpush.bf16.msra.mxu0 %v1221
    %2069 = vmatpush.bf16.msra.mxu0 %v1219
    %2070 = vmatpush.bf16.msra.mxu0 %v1217
    %2071 = vmatmul.bf16.gmra.mxu0 %v656
    %v2072 = vpop.f32.mrf.mxu0
    %v2073 = vadd.f32 %v301, %v2072
    %v2074 = vpop.f32.mrf.mxu0
    %v2075 = vadd.f32 %v301, %v2074
    %2076 = vmatmul.bf16.gmra.mxu0 %v663
    %v2077 = vpop.f32.mrf.mxu0
    %v2078 = vadd.f32 %v301, %v2077
    %v2079 = vpop.f32.mrf.mxu0
    %v2080 = vadd.f32 %v301, %v2079
    %2081 = vmatmul.bf16.gmra.mxu0 %v670
    %v2082 = vpop.f32.mrf.mxu0
    %v2083 = vadd.f32 %v301, %v2082
    %v2084 = vpop.f32.mrf.mxu0
    %v2085 = vadd.f32 %v301, %v2084
    %2086 = vmatmul.bf16.gmra.mxu0 %v677
    %v2087 = vpop.f32.mrf.mxu0
    %v2088 = vadd.f32 %v301, %v2087
    %v2089 = vpop.f32.mrf.mxu0
    %v2090 = vadd.f32 %v301, %v2089
    %2091 = vmatmul.bf16.gmra.mxu0 %v684
    %v2092 = vpop.f32.mrf.mxu0
    %v2093 = vadd.f32 %v301, %v2092
    %v2094 = vpop.f32.mrf.mxu0
    %v2095 = vadd.f32 %v301, %v2094
    %2096 = vmatmul.bf16.gmra.mxu0 %v691
    %v2097 = vpop.f32.mrf.mxu0
    %v2098 = vadd.f32 %v301, %v2097
    %v2099 = vpop.f32.mrf.mxu0
    %v2100 = vadd.f32 %v301, %v2099
    %2101 = vmatmul.bf16.gmra.mxu0 %v698
    %v2102 = vpop.f32.mrf.mxu0
    %v2103 = vadd.f32 %v301, %v2102
    %v2104 = vpop.f32.mrf.mxu0
    %v2105 = vadd.f32 %v301, %v2104
    %2106 = vmatmul.bf16.gmra.mxu0 %v705
    %v2107 = vpop.f32.mrf.mxu0
    %v2108 = vadd.f32 %v301, %v2107
    %v2109 = vpop.f32.mrf.mxu0
    %v2110 = vadd.f32 %v301, %v2109
    %2111 = vmatmul.bf16.gmra.mxu0 %v712
    %v2112 = vpop.f32.mrf.mxu0
    %v2113 = vadd.f32 %v301, %v2112
    %v2114 = vpop.f32.mrf.mxu0
    %v2115 = vadd.f32 %v301, %v2114
    %2116 = vmatmul.bf16.gmra.mxu0 %v719
    %v2117 = vpop.f32.mrf.mxu0
    %v2118 = vadd.f32 %v301, %v2117
    %v2119 = vpop.f32.mrf.mxu0
    %v2120 = vadd.f32 %v301, %v2119
    %2121 = vmatmul.bf16.gmra.mxu0 %v726
    %v2122 = vpop.f32.mrf.mxu0
    %v2123 = vadd.f32 %v301, %v2122
    %v2124 = vpop.f32.mrf.mxu0
    %v2125 = vadd.f32 %v301, %v2124
    %2126 = vmatmul.bf16.gmra.mxu0 %v733
    %v2127 = vpop.f32.mrf.mxu0
    %v2128 = vadd.f32 %v301, %v2127
    %v2129 = vpop.f32.mrf.mxu0
    %v2130 = vadd.f32 %v301, %v2129
    %2131 = vmatmul.bf16.gmra.mxu0 %v740
    %v2132 = vpop.f32.mrf.mxu0
    %v2133 = vadd.f32 %v301, %v2132
    %v2134 = vpop.f32.mrf.mxu0
    %v2135 = vadd.f32 %v301, %v2134
    %2136 = vmatmul.bf16.gmra.mxu0 %v747
    %v2137 = vpop.f32.mrf.mxu0
    %v2138 = vadd.f32 %v301, %v2137
    %v2139 = vpop.f32.mrf.mxu0
    %v2140 = vadd.f32 %v301, %v2139
    %2141 = vmatmul.bf16.gmra.mxu0 %v754
    %v2142 = vpop.f32.mrf.mxu0
    %v2143 = vadd.f32 %v301, %v2142
    %v2144 = vpop.f32.mrf.mxu0
    %v2145 = vadd.f32 %v301, %v2144
    %2146 = vmatmul.bf16.gmra.mxu0 %v761
    %v2147 = vpop.f32.mrf.mxu0
    %v2148 = vadd.f32 %v301, %v2147
    %v2149 = vpop.f32.mrf.mxu0
    %v2150 = vadd.f32 %v301, %v2149
    %2151 = vdwg.mxu0
    %2152 = vmatpush.bf16.msra.mxu0 %v1247
    %2153 = vmatpush.bf16.msra.mxu0 %v1245
    %2154 = vmatpush.bf16.msra.mxu0 %v1243
    %2155 = vmatpush.bf16.msra.mxu0 %v1241
    %2156 = vmatpush.bf16.msra.mxu0 %v1239
    %2157 = vmatpush.bf16.msra.mxu0 %v1237
    %2158 = vmatpush.bf16.msra.mxu0 %v1235
    %2159 = vmatpush.bf16.msra.mxu0 %v1233
    %2160 = vmatmul.bf16.gmra.mxu0 %v657
    %v2161 = vpop.f32.mrf.mxu0
    %v2162 = vadd.f32 %v2073, %v2161
    %v2163 = vpop.f32.mrf.mxu0
    %v2164 = vadd.f32 %v2075, %v2163
    %2165 = vmatmul.bf16.gmra.mxu0 %v664
    %v2166 = vpop.f32.mrf.mxu0
    %v2167 = vadd.f32 %v2078, %v2166
    %v2168 = vpop.f32.mrf.mxu0
    %v2169 = vadd.f32 %v2080, %v2168
    %2170 = vmatmul.bf16.gmra.mxu0 %v671
    %v2171 = vpop.f32.mrf.mxu0
    %v2172 = vadd.f32 %v2083, %v2171
    %v2173 = vpop.f32.mrf.mxu0
    %v2174 = vadd.f32 %v2085, %v2173
    %2175 = vmatmul.bf16.gmra.mxu0 %v678
    %v2176 = vpop.f32.mrf.mxu0
    %v2177 = vadd.f32 %v2088, %v2176
    %v2178 = vpop.f32.mrf.mxu0
    %v2179 = vadd.f32 %v2090, %v2178
    %2180 = vmatmul.bf16.gmra.mxu0 %v685
    %v2181 = vpop.f32.mrf.mxu0
    %v2182 = vadd.f32 %v2093, %v2181
    %v2183 = vpop.f32.mrf.mxu0
    %v2184 = vadd.f32 %v2095, %v2183
    %2185 = vmatmul.bf16.gmra.mxu0 %v692
    %v2186 = vpop.f32.mrf.mxu0
    %v2187 = vadd.f32 %v2098, %v2186
    %v2188 = vpop.f32.mrf.mxu0
    %v2189 = vadd.f32 %v2100, %v2188
    %2190 = vmatmul.bf16.gmra.mxu0 %v699
    %v2191 = vpop.f32.mrf.mxu0
    %v2192 = vadd.f32 %v2103, %v2191
    %v2193 = vpop.f32.mrf.mxu0
    %v2194 = vadd.f32 %v2105, %v2193
    %2195 = vmatmul.bf16.gmra.mxu0 %v706
    %v2196 = vpop.f32.mrf.mxu0
    %v2197 = vadd.f32 %v2108, %v2196
    %v2198 = vpop.f32.mrf.mxu0
    %v2199 = vadd.f32 %v2110, %v2198
    %2200 = vmatmul.bf16.gmra.mxu0 %v713
    %v2201 = vpop.f32.mrf.mxu0
    %v2202 = vadd.f32 %v2113, %v2201
    %v2203 = vpop.f32.mrf.mxu0
    %v2204 = vadd.f32 %v2115, %v2203
    %2205 = vmatmul.bf16.gmra.mxu0 %v720
    %v2206 = vpop.f32.mrf.mxu0
    %v2207 = vadd.f32 %v2118, %v2206
    %v2208 = vpop.f32.mrf.mxu0
    %v2209 = vadd.f32 %v2120, %v2208
    %2210 = vmatmul.bf16.gmra.mxu0 %v727
    %v2211 = vpop.f32.mrf.mxu0
    %v2212 = vadd.f32 %v2123, %v2211
    %v2213 = vpop.f32.mrf.mxu0
    %v2214 = vadd.f32 %v2125, %v2213
    %2215 = vmatmul.bf16.gmra.mxu0 %v734
    %v2216 = vpop.f32.mrf.mxu0
    %v2217 = vadd.f32 %v2128, %v2216
    %v2218 = vpop.f32.mrf.mxu0
    %v2219 = vadd.f32 %v2130, %v2218
    %2220 = vmatmul.bf16.gmra.mxu0 %v741
    %v2221 = vpop.f32.mrf.mxu0
    %v2222 = vadd.f32 %v2133, %v2221
    %v2223 = vpop.f32.mrf.mxu0
    %v2224 = vadd.f32 %v2135, %v2223
    %2225 = vmatmul.bf16.gmra.mxu0 %v748
    %v2226 = vpop.f32.mrf.mxu0
    %v2227 = vadd.f32 %v2138, %v2226
    %v2228 = vpop.f32.mrf.mxu0
    %v2229 = vadd.f32 %v2140, %v2228
    %2230 = vmatmul.bf16.gmra.mxu0 %v755
    %v2231 = vpop.f32.mrf.mxu0
    %v2232 = vadd.f32 %v2143, %v2231
    %v2233 = vpop.f32.mrf.mxu0
    %v2234 = vadd.f32 %v2145, %v2233
    %2235 = vmatmul.bf16.gmra.mxu0 %v762
    %v2236 = vpop.f32.mrf.mxu0
    %v2237 = vadd.f32 %v2148, %v2236
    %v2238 = vpop.f32.mrf.mxu0
    %v2239 = vadd.f32 %v2150, %v2238
    %2240 = vdwg.mxu0
    %2241 = vmatpush.bf16.msra.mxu0 %v1263
    %2242 = vmatpush.bf16.msra.mxu0 %v1261
    %2243 = vmatpush.bf16.msra.mxu0 %v1259
    %2244 = vmatpush.bf16.msra.mxu0 %v1257
    %2245 = vmatpush.bf16.msra.mxu0 %v1255
    %2246 = vmatpush.bf16.msra.mxu0 %v1253
    %2247 = vmatpush.bf16.msra.mxu0 %v1251
    %2248 = vmatpush.bf16.msra.mxu0 %v1249
    %2249 = vmatmul.bf16.gmra.mxu0 %v658
    %v2250 = vpop.f32.mrf.mxu0
    %v2251 = vadd.f32 %v2162, %v2250
    %v2252 = vpop.f32.mrf.mxu0
    %v2253 = vadd.f32 %v2164, %v2252
    %2254 = vmatmul.bf16.gmra.mxu0 %v665
    %v2255 = vpop.f32.mrf.mxu0
    %v2256 = vadd.f32 %v2167, %v2255
    %v2257 = vpop.f32.mrf.mxu0
    %v2258 = vadd.f32 %v2169, %v2257
    %2259 = vmatmul.bf16.gmra.mxu0 %v672
    %v2260 = vpop.f32.mrf.mxu0
    %v2261 = vadd.f32 %v2172, %v2260
    %v2262 = vpop.f32.mrf.mxu0
    %v2263 = vadd.f32 %v2174, %v2262
    %2264 = vmatmul.bf16.gmra.mxu0 %v679
    %v2265 = vpop.f32.mrf.mxu0
    %v2266 = vadd.f32 %v2177, %v2265
    %v2267 = vpop.f32.mrf.mxu0
    %v2268 = vadd.f32 %v2179, %v2267
    %2269 = vmatmul.bf16.gmra.mxu0 %v686
    %v2270 = vpop.f32.mrf.mxu0
    %v2271 = vadd.f32 %v2182, %v2270
    %v2272 = vpop.f32.mrf.mxu0
    %v2273 = vadd.f32 %v2184, %v2272
    %2274 = vmatmul.bf16.gmra.mxu0 %v693
    %v2275 = vpop.f32.mrf.mxu0
    %v2276 = vadd.f32 %v2187, %v2275
    %v2277 = vpop.f32.mrf.mxu0
    %v2278 = vadd.f32 %v2189, %v2277
    %2279 = vmatmul.bf16.gmra.mxu0 %v700
    %v2280 = vpop.f32.mrf.mxu0
    %v2281 = vadd.f32 %v2192, %v2280
    %v2282 = vpop.f32.mrf.mxu0
    %v2283 = vadd.f32 %v2194, %v2282
    %2284 = vmatmul.bf16.gmra.mxu0 %v707
    %v2285 = vpop.f32.mrf.mxu0
    %v2286 = vadd.f32 %v2197, %v2285
    %v2287 = vpop.f32.mrf.mxu0
    %v2288 = vadd.f32 %v2199, %v2287
    %2289 = vmatmul.bf16.gmra.mxu0 %v714
    %v2290 = vpop.f32.mrf.mxu0
    %v2291 = vadd.f32 %v2202, %v2290
    %v2292 = vpop.f32.mrf.mxu0
    %v2293 = vadd.f32 %v2204, %v2292
    %2294 = vmatmul.bf16.gmra.mxu0 %v721
    %v2295 = vpop.f32.mrf.mxu0
    %v2296 = vadd.f32 %v2207, %v2295
    %v2297 = vpop.f32.mrf.mxu0
    %v2298 = vadd.f32 %v2209, %v2297
    %2299 = vmatmul.bf16.gmra.mxu0 %v728
    %v2300 = vpop.f32.mrf.mxu0
    %v2301 = vadd.f32 %v2212, %v2300
    %v2302 = vpop.f32.mrf.mxu0
    %v2303 = vadd.f32 %v2214, %v2302
    %2304 = vmatmul.bf16.gmra.mxu0 %v735
    %v2305 = vpop.f32.mrf.mxu0
    %v2306 = vadd.f32 %v2217, %v2305
    %v2307 = vpop.f32.mrf.mxu0
    %v2308 = vadd.f32 %v2219, %v2307
    %2309 = vmatmul.bf16.gmra.mxu0 %v742
    %v2310 = vpop.f32.mrf.mxu0
    %v2311 = vadd.f32 %v2222, %v2310
    %v2312 = vpop.f32.mrf.mxu0
    %v2313 = vadd.f32 %v2224, %v2312
    %2314 = vmatmul.bf16.gmra.mxu0 %v749
    %v2315 = vpop.f32.mrf.mxu0
    %v2316 = vadd.f32 %v2227, %v2315
    %v2317 = vpop.f32.mrf.mxu0
    %v2318 = vadd.f32 %v2229, %v2317
    %2319 = vmatmul.bf16.gmra.mxu0 %v756
    %v2320 = vpop.f32.mrf.mxu0
    %v2321 = vadd.f32 %v2232, %v2320
    %v2322 = vpop.f32.mrf.mxu0
    %v2323 = vadd.f32 %v2234, %v2322
    %2324 = vmatmul.bf16.gmra.mxu0 %v763
    %v2325 = vpop.f32.mrf.mxu0
    %v2326 = vadd.f32 %v2237, %v2325
    %v2327 = vpop.f32.mrf.mxu0
    %v2328 = vadd.f32 %v2239, %v2327
    %2329 = vdwg.mxu0
    %2330 = vmatpush.bf16.msra.mxu0 %v1279
    %2331 = vmatpush.bf16.msra.mxu0 %v1277
    %2332 = vmatpush.bf16.msra.mxu0 %v1275
    %2333 = vmatpush.bf16.msra.mxu0 %v1273
    %2334 = vmatpush.bf16.msra.mxu0 %v1271
    %2335 = vmatpush.bf16.msra.mxu0 %v1269
    %2336 = vmatpush.bf16.msra.mxu0 %v1267
    %2337 = vmatpush.bf16.msra.mxu0 %v1265
    %2338 = vmatmul.bf16.gmra.mxu0 %v659
    %v2339 = vpop.f32.mrf.mxu0
    %v2340 = vadd.f32 %v2251, %v2339
    %v2341 = vpop.f32.mrf.mxu0
    %v2342 = vadd.f32 %v2253, %v2341
    %2343 = vmatmul.bf16.gmra.mxu0 %v666
    %v2344 = vpop.f32.mrf.mxu0
    %v2345 = vadd.f32 %v2256, %v2344
    %v2346 = vpop.f32.mrf.mxu0
    %v2347 = vadd.f32 %v2258, %v2346
    %2348 = vmatmul.bf16.gmra.mxu0 %v673
    %v2349 = vpop.f32.mrf.mxu0
    %v2350 = vadd.f32 %v2261, %v2349
    %v2351 = vpop.f32.mrf.mxu0
    %v2352 = vadd.f32 %v2263, %v2351
    %2353 = vmatmul.bf16.gmra.mxu0 %v680
    %v2354 = vpop.f32.mrf.mxu0
    %v2355 = vadd.f32 %v2266, %v2354
    %v2356 = vpop.f32.mrf.mxu0
    %v2357 = vadd.f32 %v2268, %v2356
    %2358 = vmatmul.bf16.gmra.mxu0 %v687
    %v2359 = vpop.f32.mrf.mxu0
    %v2360 = vadd.f32 %v2271, %v2359
    %v2361 = vpop.f32.mrf.mxu0
    %v2362 = vadd.f32 %v2273, %v2361
    %2363 = vmatmul.bf16.gmra.mxu0 %v694
    %v2364 = vpop.f32.mrf.mxu0
    %v2365 = vadd.f32 %v2276, %v2364
    %v2366 = vpop.f32.mrf.mxu0
    %v2367 = vadd.f32 %v2278, %v2366
    %2368 = vmatmul.bf16.gmra.mxu0 %v701
    %v2369 = vpop.f32.mrf.mxu0
    %v2370 = vadd.f32 %v2281, %v2369
    %v2371 = vpop.f32.mrf.mxu0
    %v2372 = vadd.f32 %v2283, %v2371
    %2373 = vmatmul.bf16.gmra.mxu0 %v708
    %v2374 = vpop.f32.mrf.mxu0
    %v2375 = vadd.f32 %v2286, %v2374
    %v2376 = vpop.f32.mrf.mxu0
    %v2377 = vadd.f32 %v2288, %v2376
    %2378 = vmatmul.bf16.gmra.mxu0 %v715
    %v2379 = vpop.f32.mrf.mxu0
    %v2380 = vadd.f32 %v2291, %v2379
    %v2381 = vpop.f32.mrf.mxu0
    %v2382 = vadd.f32 %v2293, %v2381
    %2383 = vmatmul.bf16.gmra.mxu0 %v722
    %v2384 = vpop.f32.mrf.mxu0
    %v2385 = vadd.f32 %v2296, %v2384
    %v2386 = vpop.f32.mrf.mxu0
    %v2387 = vadd.f32 %v2298, %v2386
    %2388 = vmatmul.bf16.gmra.mxu0 %v729
    %v2389 = vpop.f32.mrf.mxu0
    %v2390 = vadd.f32 %v2301, %v2389
    %v2391 = vpop.f32.mrf.mxu0
    %v2392 = vadd.f32 %v2303, %v2391
    %2393 = vmatmul.bf16.gmra.mxu0 %v736
    %v2394 = vpop.f32.mrf.mxu0
    %v2395 = vadd.f32 %v2306, %v2394
    %v2396 = vpop.f32.mrf.mxu0
    %v2397 = vadd.f32 %v2308, %v2396
    %2398 = vmatmul.bf16.gmra.mxu0 %v743
    %v2399 = vpop.f32.mrf.mxu0
    %v2400 = vadd.f32 %v2311, %v2399
    %v2401 = vpop.f32.mrf.mxu0
    %v2402 = vadd.f32 %v2313, %v2401
    %2403 = vmatmul.bf16.gmra.mxu0 %v750
    %v2404 = vpop.f32.mrf.mxu0
    %v2405 = vadd.f32 %v2316, %v2404
    %v2406 = vpop.f32.mrf.mxu0
    %v2407 = vadd.f32 %v2318, %v2406
    %2408 = vmatmul.bf16.gmra.mxu0 %v757
    %v2409 = vpop.f32.mrf.mxu0
    %v2410 = vadd.f32 %v2321, %v2409
    %v2411 = vpop.f32.mrf.mxu0
    %v2412 = vadd.f32 %v2323, %v2411
    %2413 = vmatmul.bf16.gmra.mxu0 %v764
    %v2414 = vpop.f32.mrf.mxu0
    %v2415 = vadd.f32 %v2326, %v2414
    %v2416 = vpop.f32.mrf.mxu0
    %v2417 = vadd.f32 %v2328, %v2416
    %2418 = vdwg.mxu0
    %2419 = vmatpush.bf16.msra.mxu0 %v1295
    %2420 = vmatpush.bf16.msra.mxu0 %v1293
    %2421 = vmatpush.bf16.msra.mxu0 %v1291
    %2422 = vmatpush.bf16.msra.mxu0 %v1289
    %2423 = vmatpush.bf16.msra.mxu0 %v1287
    %2424 = vmatpush.bf16.msra.mxu0 %v1285
    %2425 = vmatpush.bf16.msra.mxu0 %v1283
    %2426 = vmatpush.bf16.msra.mxu0 %v1281
    %2427 = vmatmul.bf16.gmra.mxu0 %v660
    %v2428 = vpop.f32.mrf.mxu0
    %v2429 = vadd.f32 %v2340, %v2428
    %v2430 = vpop.f32.mrf.mxu0
    %v2431 = vadd.f32 %v2342, %v2430
    %2432 = vmatmul.bf16.gmra.mxu0 %v667
    %v2433 = vpop.f32.mrf.mxu0
    %v2434 = vadd.f32 %v2345, %v2433
    %v2435 = vpop.f32.mrf.mxu0
    %v2436 = vadd.f32 %v2347, %v2435
    %2437 = vmatmul.bf16.gmra.mxu0 %v674
    %v2438 = vpop.f32.mrf.mxu0
    %v2439 = vadd.f32 %v2350, %v2438
    %v2440 = vpop.f32.mrf.mxu0
    %v2441 = vadd.f32 %v2352, %v2440
    %2442 = vmatmul.bf16.gmra.mxu0 %v681
    %v2443 = vpop.f32.mrf.mxu0
    %v2444 = vadd.f32 %v2355, %v2443
    %v2445 = vpop.f32.mrf.mxu0
    %v2446 = vadd.f32 %v2357, %v2445
    %2447 = vmatmul.bf16.gmra.mxu0 %v688
    %v2448 = vpop.f32.mrf.mxu0
    %v2449 = vadd.f32 %v2360, %v2448
    %v2450 = vpop.f32.mrf.mxu0
    %v2451 = vadd.f32 %v2362, %v2450
    %2452 = vmatmul.bf16.gmra.mxu0 %v695
    %v2453 = vpop.f32.mrf.mxu0
    %v2454 = vadd.f32 %v2365, %v2453
    %v2455 = vpop.f32.mrf.mxu0
    %v2456 = vadd.f32 %v2367, %v2455
    %2457 = vmatmul.bf16.gmra.mxu0 %v702
    %v2458 = vpop.f32.mrf.mxu0
    %v2459 = vadd.f32 %v2370, %v2458
    %v2460 = vpop.f32.mrf.mxu0
    %v2461 = vadd.f32 %v2372, %v2460
    %2462 = vmatmul.bf16.gmra.mxu0 %v709
    %v2463 = vpop.f32.mrf.mxu0
    %v2464 = vadd.f32 %v2375, %v2463
    %v2465 = vpop.f32.mrf.mxu0
    %v2466 = vadd.f32 %v2377, %v2465
    %2467 = vmatmul.bf16.gmra.mxu0 %v716
    %v2468 = vpop.f32.mrf.mxu0
    %v2469 = vadd.f32 %v2380, %v2468
    %v2470 = vpop.f32.mrf.mxu0
    %v2471 = vadd.f32 %v2382, %v2470
    %2472 = vmatmul.bf16.gmra.mxu0 %v723
    %v2473 = vpop.f32.mrf.mxu0
    %v2474 = vadd.f32 %v2385, %v2473
    %v2475 = vpop.f32.mrf.mxu0
    %v2476 = vadd.f32 %v2387, %v2475
    %2477 = vmatmul.bf16.gmra.mxu0 %v730
    %v2478 = vpop.f32.mrf.mxu0
    %v2479 = vadd.f32 %v2390, %v2478
    %v2480 = vpop.f32.mrf.mxu0
    %v2481 = vadd.f32 %v2392, %v2480
    %2482 = vmatmul.bf16.gmra.mxu0 %v737
    %v2483 = vpop.f32.mrf.mxu0
    %v2484 = vadd.f32 %v2395, %v2483
    %v2485 = vpop.f32.mrf.mxu0
    %v2486 = vadd.f32 %v2397, %v2485
    %2487 = vmatmul.bf16.gmra.mxu0 %v744
    %v2488 = vpop.f32.mrf.mxu0
    %v2489 = vadd.f32 %v2400, %v2488
    %v2490 = vpop.f32.mrf.mxu0
    %v2491 = vadd.f32 %v2402, %v2490
    %2492 = vmatmul.bf16.gmra.mxu0 %v751
    %v2493 = vpop.f32.mrf.mxu0
    %v2494 = vadd.f32 %v2405, %v2493
    %v2495 = vpop.f32.mrf.mxu0
    %v2496 = vadd.f32 %v2407, %v2495
    %2497 = vmatmul.bf16.gmra.mxu0 %v758
    %v2498 = vpop.f32.mrf.mxu0
    %v2499 = vadd.f32 %v2410, %v2498
    %v2500 = vpop.f32.mrf.mxu0
    %v2501 = vadd.f32 %v2412, %v2500
    %2502 = vmatmul.bf16.gmra.mxu0 %v765
    %v2503 = vpop.f32.mrf.mxu0
    %v2504 = vadd.f32 %v2415, %v2503
    %v2505 = vpop.f32.mrf.mxu0
    %v2506 = vadd.f32 %v2417, %v2505
    %2507 = vdwg.mxu0
    %2508 = vmatpush.bf16.msra.mxu0 %v1311
    %2509 = vmatpush.bf16.msra.mxu0 %v1309
    %2510 = vmatpush.bf16.msra.mxu0 %v1307
    %2511 = vmatpush.bf16.msra.mxu0 %v1305
    %2512 = vmatpush.bf16.msra.mxu0 %v1303
    %2513 = vmatpush.bf16.msra.mxu0 %v1301
    %2514 = vmatpush.bf16.msra.mxu0 %v1299
    %2515 = vmatpush.bf16.msra.mxu0 %v1297
    %2516 = vmatmul.bf16.gmra.mxu0 %v661
    %v2517 = vpop.f32.mrf.mxu0
    %v2518 = vadd.f32 %v2429, %v2517
    %v2519 = vpop.f32.mrf.mxu0
    %v2520 = vadd.f32 %v2431, %v2519
    %2521 = vmatmul.bf16.gmra.mxu0 %v668
    %v2522 = vpop.f32.mrf.mxu0
    %v2523 = vadd.f32 %v2434, %v2522
    %v2524 = vpop.f32.mrf.mxu0
    %v2525 = vadd.f32 %v2436, %v2524
    %2526 = vmatmul.bf16.gmra.mxu0 %v675
    %v2527 = vpop.f32.mrf.mxu0
    %v2528 = vadd.f32 %v2439, %v2527
    %v2529 = vpop.f32.mrf.mxu0
    %v2530 = vadd.f32 %v2441, %v2529
    %2531 = vmatmul.bf16.gmra.mxu0 %v682
    %v2532 = vpop.f32.mrf.mxu0
    %v2533 = vadd.f32 %v2444, %v2532
    %v2534 = vpop.f32.mrf.mxu0
    %v2535 = vadd.f32 %v2446, %v2534
    %2536 = vmatmul.bf16.gmra.mxu0 %v689
    %v2537 = vpop.f32.mrf.mxu0
    %v2538 = vadd.f32 %v2449, %v2537
    %v2539 = vpop.f32.mrf.mxu0
    %v2540 = vadd.f32 %v2451, %v2539
    %2541 = vmatmul.bf16.gmra.mxu0 %v696
    %v2542 = vpop.f32.mrf.mxu0
    %v2543 = vadd.f32 %v2454, %v2542
    %v2544 = vpop.f32.mrf.mxu0
    %v2545 = vadd.f32 %v2456, %v2544
    %2546 = vmatmul.bf16.gmra.mxu0 %v703
    %v2547 = vpop.f32.mrf.mxu0
    %v2548 = vadd.f32 %v2459, %v2547
    %v2549 = vpop.f32.mrf.mxu0
    %v2550 = vadd.f32 %v2461, %v2549
    %2551 = vmatmul.bf16.gmra.mxu0 %v710
    %v2552 = vpop.f32.mrf.mxu0
    %v2553 = vadd.f32 %v2464, %v2552
    %v2554 = vpop.f32.mrf.mxu0
    %v2555 = vadd.f32 %v2466, %v2554
    %2556 = vmatmul.bf16.gmra.mxu0 %v717
    %v2557 = vpop.f32.mrf.mxu0
    %v2558 = vadd.f32 %v2469, %v2557
    %v2559 = vpop.f32.mrf.mxu0
    %v2560 = vadd.f32 %v2471, %v2559
    %2561 = vmatmul.bf16.gmra.mxu0 %v724
    %v2562 = vpop.f32.mrf.mxu0
    %v2563 = vadd.f32 %v2474, %v2562
    %v2564 = vpop.f32.mrf.mxu0
    %v2565 = vadd.f32 %v2476, %v2564
    %2566 = vmatmul.bf16.gmra.mxu0 %v731
    %v2567 = vpop.f32.mrf.mxu0
    %v2568 = vadd.f32 %v2479, %v2567
    %v2569 = vpop.f32.mrf.mxu0
    %v2570 = vadd.f32 %v2481, %v2569
    %2571 = vmatmul.bf16.gmra.mxu0 %v738
    %v2572 = vpop.f32.mrf.mxu0
    %v2573 = vadd.f32 %v2484, %v2572
    %v2574 = vpop.f32.mrf.mxu0
    %v2575 = vadd.f32 %v2486, %v2574
    %2576 = vmatmul.bf16.gmra.mxu0 %v745
    %v2577 = vpop.f32.mrf.mxu0
    %v2578 = vadd.f32 %v2489, %v2577
    %v2579 = vpop.f32.mrf.mxu0
    %v2580 = vadd.f32 %v2491, %v2579
    %2581 = vmatmul.bf16.gmra.mxu0 %v752
    %v2582 = vpop.f32.mrf.mxu0
    %v2583 = vadd.f32 %v2494, %v2582
    %v2584 = vpop.f32.mrf.mxu0
    %v2585 = vadd.f32 %v2496, %v2584
    %2586 = vmatmul.bf16.gmra.mxu0 %v759
    %v2587 = vpop.f32.mrf.mxu0
    %v2588 = vadd.f32 %v2499, %v2587
    %v2589 = vpop.f32.mrf.mxu0
    %v2590 = vadd.f32 %v2501, %v2589
    %2591 = vmatmul.bf16.gmra.mxu0 %v766
    %v2592 = vpop.f32.mrf.mxu0
    %v2593 = vadd.f32 %v2504, %v2592
    %v2594 = vpop.f32.mrf.mxu0
    %v2595 = vadd.f32 %v2506, %v2594
    %2596 = vdwg.mxu0
    %2597 = vmatpush.bf16.msra.mxu0 %v1327
    %2598 = vmatpush.bf16.msra.mxu0 %v1325
    %2599 = vmatpush.bf16.msra.mxu0 %v1323
    %2600 = vmatpush.bf16.msra.mxu0 %v1321
    %2601 = vmatpush.bf16.msra.mxu0 %v1319
    %2602 = vmatpush.bf16.msra.mxu0 %v1317
    %2603 = vmatpush.bf16.msra.mxu0 %v1315
    %2604 = vmatpush.bf16.msra.mxu0 %v1313
    %2605 = vmatmul.bf16.gmra.mxu0 %v662
    %v2606 = vpop.f32.mrf.mxu0
    %v2607 = vadd.f32 %v2518, %v2606
    %v2608 = vpop.f32.mrf.mxu0
    %v2609 = vadd.f32 %v2520, %v2608
    %2610 = vmatmul.bf16.gmra.mxu0 %v669
    %v2611 = vpop.f32.mrf.mxu0
    %v2612 = vadd.f32 %v2523, %v2611
    %v2613 = vpop.f32.mrf.mxu0
    %v2614 = vadd.f32 %v2525, %v2613
    %2615 = vmatmul.bf16.gmra.mxu0 %v676
    %v2616 = vpop.f32.mrf.mxu0
    %v2617 = vadd.f32 %v2528, %v2616
    %v2618 = vpop.f32.mrf.mxu0
    %v2619 = vadd.f32 %v2530, %v2618
    %2620 = vmatmul.bf16.gmra.mxu0 %v683
    %v2621 = vpop.f32.mrf.mxu0
    %v2622 = vadd.f32 %v2533, %v2621
    %v2623 = vpop.f32.mrf.mxu0
    %v2624 = vadd.f32 %v2535, %v2623
    %2625 = vmatmul.bf16.gmra.mxu0 %v690
    %v2626 = vpop.f32.mrf.mxu0
    %v2627 = vadd.f32 %v2538, %v2626
    %v2628 = vpop.f32.mrf.mxu0
    %v2629 = vadd.f32 %v2540, %v2628
    %2630 = vmatmul.bf16.gmra.mxu0 %v697
    %v2631 = vpop.f32.mrf.mxu0
    %v2632 = vadd.f32 %v2543, %v2631
    %v2633 = vpop.f32.mrf.mxu0
    %v2634 = vadd.f32 %v2545, %v2633
    %2635 = vmatmul.bf16.gmra.mxu0 %v704
    %v2636 = vpop.f32.mrf.mxu0
    %v2637 = vadd.f32 %v2548, %v2636
    %v2638 = vpop.f32.mrf.mxu0
    %v2639 = vadd.f32 %v2550, %v2638
    %2640 = vmatmul.bf16.gmra.mxu0 %v711
    %v2641 = vpop.f32.mrf.mxu0
    %v2642 = vadd.f32 %v2553, %v2641
    %v2643 = vpop.f32.mrf.mxu0
    %v2644 = vadd.f32 %v2555, %v2643
    %2645 = vmatmul.bf16.gmra.mxu0 %v718
    %v2646 = vpop.f32.mrf.mxu0
    %v2647 = vadd.f32 %v2558, %v2646
    %v2648 = vpop.f32.mrf.mxu0
    %v2649 = vadd.f32 %v2560, %v2648
    %2650 = vmatmul.bf16.gmra.mxu0 %v725
    %v2651 = vpop.f32.mrf.mxu0
    %v2652 = vadd.f32 %v2563, %v2651
    %v2653 = vpop.f32.mrf.mxu0
    %v2654 = vadd.f32 %v2565, %v2653
    %2655 = vmatmul.bf16.gmra.mxu0 %v732
    %v2656 = vpop.f32.mrf.mxu0
    %v2657 = vadd.f32 %v2568, %v2656
    %v2658 = vpop.f32.mrf.mxu0
    %v2659 = vadd.f32 %v2570, %v2658
    %2660 = vmatmul.bf16.gmra.mxu0 %v739
    %v2661 = vpop.f32.mrf.mxu0
    %v2662 = vadd.f32 %v2573, %v2661
    %v2663 = vpop.f32.mrf.mxu0
    %v2664 = vadd.f32 %v2575, %v2663
    %2665 = vmatmul.bf16.gmra.mxu0 %v746
    %v2666 = vpop.f32.mrf.mxu0
    %v2667 = vadd.f32 %v2578, %v2666
    %v2668 = vpop.f32.mrf.mxu0
    %v2669 = vadd.f32 %v2580, %v2668
    %2670 = vmatmul.bf16.gmra.mxu0 %v753
    %v2671 = vpop.f32.mrf.mxu0
    %v2672 = vadd.f32 %v2583, %v2671
    %v2673 = vpop.f32.mrf.mxu0
    %v2674 = vadd.f32 %v2585, %v2673
    %2675 = vmatmul.bf16.gmra.mxu0 %v760
    %v2676 = vpop.f32.mrf.mxu0
    %v2677 = vadd.f32 %v2588, %v2676
    %v2678 = vpop.f32.mrf.mxu0
    %v2679 = vadd.f32 %v2590, %v2678
    %2680 = vmatmul.bf16.gmra.mxu0 %v767
    %v2681 = vpop.f32.mrf.mxu0
    %v2682 = vadd.f32 %v2593, %v2681
    %v2683 = vpop.f32.mrf.mxu0
    %v2684 = vadd.f32 %v2595, %v2683
    %2685 = vdwg.mxu0
    %v2686 = vmax.f32 %v1984, 0.0
    %v2687 = vmax.f32 %v2607, 0.0
    %v2688 = vmax.f32 %v1986, 0.0
    %v2689 = vmax.f32 %v2609, 0.0
    %v2690 = vmax.f32 %v1989, 0.0
    %v2691 = vmax.f32 %v2612, 0.0
    %v2692 = vmax.f32 %v1991, 0.0
    %v2693 = vmax.f32 %v2614, 0.0
    %v2694 = vmax.f32 %v1994, 0.0
    %v2695 = vmax.f32 %v2617, 0.0
    %v2696 = vmax.f32 %v1996, 0.0
    %v2697 = vmax.f32 %v2619, 0.0
    %v2698 = vmax.f32 %v1999, 0.0
    %v2699 = vmax.f32 %v2622, 0.0
    %v2700 = vmax.f32 %v2001, 0.0
    %v2701 = vmax.f32 %v2624, 0.0
    %v2702 = vmax.f32 %v2004, 0.0
    %v2703 = vmax.f32 %v2627, 0.0
    %v2704 = vmax.f32 %v2006, 0.0
    %v2705 = vmax.f32 %v2629, 0.0
    %v2706 = vmax.f32 %v2009, 0.0
    %v2707 = vmax.f32 %v2632, 0.0
    %v2708 = vmax.f32 %v2011, 0.0
    %v2709 = vmax.f32 %v2634, 0.0
    %v2710 = vmax.f32 %v2014, 0.0
    %v2711 = vmax.f32 %v2637, 0.0
    %v2712 = vmax.f32 %v2016, 0.0
    %v2713 = vmax.f32 %v2639, 0.0
    %v2714 = vmax.f32 %v2019, 0.0
    %v2715 = vmax.f32 %v2642, 0.0
    %v2716 = vmax.f32 %v2021, 0.0
    %v2717 = vmax.f32 %v2644, 0.0
    %v2718 = vmax.f32 %v2024, 0.0
    %v2719 = vmax.f32 %v2647, 0.0
    %v2720 = vmax.f32 %v2026, 0.0
    %v2721 = vmax.f32 %v2649, 0.0
    %v2722 = vmax.f32 %v2029, 0.0
    %v2723 = vmax.f32 %v2652, 0.0
    %v2724 = vmax.f32 %v2031, 0.0
    %v2725 = vmax.f32 %v2654, 0.0
    %v2726 = vmax.f32 %v2034, 0.0
    %v2727 = vmax.f32 %v2657, 0.0
    %v2728 = vmax.f32 %v2036, 0.0
    %v2729 = vmax.f32 %v2659, 0.0
    %v2730 = vmax.f32 %v2039, 0.0
    %v2731 = vmax.f32 %v2662, 0.0
    %v2732 = vmax.f32 %v2041, 0.0
    %v2733 = vmax.f32 %v2664, 0.0
    %v2734 = vmax.f32 %v2044, 0.0
    %v2735 = vmax.f32 %v2667, 0.0
    %v2736 = vmax.f32 %v2046, 0.0
    %v2737 = vmax.f32 %v2669, 0.0
    %v2738 = vmax.f32 %v2049, 0.0
    %v2739 = vmax.f32 %v2672, 0.0
    %v2740 = vmax.f32 %v2051, 0.0
    %v2741 = vmax.f32 %v2674, 0.0
    %v2742 = vmax.f32 %v2054, 0.0
    %v2743 = vmax.f32 %v2677, 0.0
    %v2744 = vmax.f32 %v2056, 0.0
    %v2745 = vmax.f32 %v2679, 0.0
    %v2746 = vmax.f32 %v2059, 0.0
    %v2747 = vmax.f32 %v2682, 0.0
    %v2748 = vmax.f32 %v2061, 0.0
    %v2749 = vmax.f32 %v2684, 0.0
    %v2750 = vpack.c.bf16 %v2688, %v2686
    %v2751 = vpack.c.bf16 %v2689, %v2687
    %v2752 = vpack.c.bf16 %v2692, %v2690
    %v2753 = vpack.c.bf16 %v2693, %v2691
    %v2754 = vpack.c.bf16 %v2696, %v2694
    %v2755 = vpack.c.bf16 %v2697, %v2695
    %v2756 = vpack.c.bf16 %v2700, %v2698
    %v2757 = vpack.c.bf16 %v2701, %v2699
    %v2758 = vpack.c.bf16 %v2704, %v2702
    %v2759 = vpack.c.bf16 %v2705, %v2703
    %v2760 = vpack.c.bf16 %v2708, %v2706
    %v2761 = vpack.c.bf16 %v2709, %v2707
    %v2762 = vpack.c.bf16 %v2712, %v2710
    %v2763 = vpack.c.bf16 %v2713, %v2711
    %v2764 = vpack.c.bf16 %v2716, %v2714
    %v2765 = vpack.c.bf16 %v2717, %v2715
    %v2766 = vpack.c.bf16 %v2720, %v2718
    %v2767 = vpack.c.bf16 %v2721, %v2719
    %v2768 = vpack.c.bf16 %v2724, %v2722
    %v2769 = vpack.c.bf16 %v2725, %v2723
    %v2770 = vpack.c.bf16 %v2728, %v2726
    %v2771 = vpack.c.bf16 %v2729, %v2727
    %v2772 = vpack.c.bf16 %v2732, %v2730
    %v2773 = vpack.c.bf16 %v2733, %v2731
    %v2774 = vpack.c.bf16 %v2736, %v2734
    %v2775 = vpack.c.bf16 %v2737, %v2735
    %v2776 = vpack.c.bf16 %v2740, %v2738
    %v2777 = vpack.c.bf16 %v2741, %v2739
    %v2778 = vpack.c.bf16 %v2744, %v2742
    %v2779 = vpack.c.bf16 %v2745, %v2743
    %v2780 = vpack.c.bf16 %v2748, %v2746
    %v2781 = vpack.c.bf16 %v2749, %v2747
    %v2782 = vld [vmem:[#allocation2] sm:$0xff]
    %v2783 = vld [vmem:[#allocation2 + $0x8] sm:$0xff]
    %v2784 = vld [vmem:[#allocation2 + $0x10] sm:$0xff]
    %v2785 = vld [vmem:[#allocation2 + $0x18] sm:$0xff]
    %v2786 = vld [vmem:[#allocation2 + $0x20] sm:$0xff]
    %v2787 = vld [vmem:[#allocation2 + $0x28] sm:$0xff]
    %v2788 = vld [vmem:[#allocation2 + $0x30] sm:$0xff]
    %v2789 = vld [vmem:[#allocation2 + $0x38] sm:$0xff]
    %v2790 = vld [vmem:[#allocation2 + $0x40] sm:$0xff]
    %v2791 = vld [vmem:[#allocation2 + $0x48] sm:$0xff]
    %v2792 = vld [vmem:[#allocation2 + $0x50] sm:$0xff]
    %v2793 = vld [vmem:[#allocation2 + $0x58] sm:$0xff]
    %v2794 = vld [vmem:[#allocation2 + $0x60] sm:$0xff]
    %v2795 = vld [vmem:[#allocation2 + $0x68] sm:$0xff]
    %v2796 = vld [vmem:[#allocation2 + $0x70] sm:$0xff]
    %v2797 = vld [vmem:[#allocation2 + $0x78] sm:$0xff]
    %v2798 = vld [vmem:[#allocation2 + $0x80] sm:$0xff]
    %v2799 = vld [vmem:[#allocation2 + $0x88] sm:$0xff]
    %v2800 = vld [vmem:[#allocation2 + $0x90] sm:$0xff]
    %v2801 = vld [vmem:[#allocation2 + $0x98] sm:$0xff]
    %v2802 = vld [vmem:[#allocation2 + $0xa0] sm:$0xff]
    %v2803 = vld [vmem:[#allocation2 + $0xa8] sm:$0xff]
    %v2804 = vld [vmem:[#allocation2 + $0xb0] sm:$0xff]
    %v2805 = vld [vmem:[#allocation2 + $0xb8] sm:$0xff]
    %v2806 = vld [vmem:[#allocation2 + $0xc0] sm:$0xff]
    %v2807 = vld [vmem:[#allocation2 + $0xc8] sm:$0xff]
    %v2808 = vld [vmem:[#allocation2 + $0xd0] sm:$0xff]
    %v2809 = vld [vmem:[#allocation2 + $0xd8] sm:$0xff]
    %v2810 = vld [vmem:[#allocation2 + $0xe0] sm:$0xff]
    %v2811 = vld [vmem:[#allocation2 + $0xe8] sm:$0xff]
    %v2812 = vld [vmem:[#allocation2 + $0xf0] sm:$0xff]
    %v2813 = vld [vmem:[#allocation2 + $0xf8] sm:$0xff]
    %v2814 = vld [vmem:[%s4] sm:$0x3]
    %v2816 = vperm.slane %v2814, 0
    %v2817 = vperm.slane %v2814, 1
    %v2852 = vunpack.c.l.b16 %v2782
    %v2853 = vunpack.c.h.b16 %v2782
    %v2854 = vunpack.c.l.b16 %v2783
    %v2855 = vunpack.c.h.b16 %v2783
    %v2856 = vunpack.c.l.b16 %v2784
    %v2857 = vunpack.c.h.b16 %v2784
    %v2858 = vunpack.c.l.b16 %v2785
    %v2859 = vunpack.c.h.b16 %v2785
    %v2860 = vunpack.c.l.b16 %v2786
    %v2861 = vunpack.c.h.b16 %v2786
    %v2862 = vunpack.c.l.b16 %v2787
    %v2863 = vunpack.c.h.b16 %v2787
    %v2864 = vunpack.c.l.b16 %v2788
    %v2865 = vunpack.c.h.b16 %v2788
    %v2866 = vunpack.c.l.b16 %v2789
    %v2867 = vunpack.c.h.b16 %v2789
    %v2868 = vunpack.c.l.b16 %v2790
    %v2869 = vunpack.c.h.b16 %v2790
    %v2870 = vunpack.c.l.b16 %v2791
    %v2871 = vunpack.c.h.b16 %v2791
    %v2872 = vunpack.c.l.b16 %v2792
    %v2873 = vunpack.c.h.b16 %v2792
    %v2874 = vunpack.c.l.b16 %v2793
    %v2875 = vunpack.c.h.b16 %v2793
    %v2876 = vunpack.c.l.b16 %v2794
    %v2877 = vunpack.c.h.b16 %v2794
    %v2878 = vunpack.c.l.b16 %v2795
    %v2879 = vunpack.c.h.b16 %v2795
    %v2880 = vunpack.c.l.b16 %v2796
    %v2881 = vunpack.c.h.b16 %v2796
    %v2882 = vunpack.c.l.b16 %v2797
    %v2883 = vunpack.c.h.b16 %v2797
    %v2884 = vunpack.c.l.b16 %v2798
    %v2885 = vunpack.c.h.b16 %v2798
    %v2886 = vunpack.c.l.b16 %v2799
    %v2887 = vunpack.c.h.b16 %v2799
    %v2888 = vunpack.c.l.b16 %v2800
    %v2889 = vunpack.c.h.b16 %v2800
    %v2890 = vunpack.c.l.b16 %v2801
    %v2891 = vunpack.c.h.b16 %v2801
    %v2892 = vunpack.c.l.b16 %v2802
    %v2893 = vunpack.c.h.b16 %v2802
    %v2894 = vunpack.c.l.b16 %v2803
    %v2895 = vunpack.c.h.b16 %v2803
    %v2896 = vunpack.c.l.b16 %v2804
    %v2897 = vunpack.c.h.b16 %v2804
    %v2898 = vunpack.c.l.b16 %v2805
    %v2899 = vunpack.c.h.b16 %v2805
    %v2900 = vunpack.c.l.b16 %v2806
    %v2901 = vunpack.c.h.b16 %v2806
    %v2902 = vunpack.c.l.b16 %v2807
    %v2903 = vunpack.c.h.b16 %v2807
    %v2904 = vunpack.c.l.b16 %v2808
    %v2905 = vunpack.c.h.b16 %v2808
    %v2906 = vunpack.c.l.b16 %v2809
    %v2907 = vunpack.c.h.b16 %v2809
    %v2908 = vunpack.c.l.b16 %v2810
    %v2909 = vunpack.c.h.b16 %v2810
    %v2910 = vunpack.c.l.b16 %v2811
    %v2911 = vunpack.c.h.b16 %v2811
    %v2912 = vunpack.c.l.b16 %v2812
    %v2913 = vunpack.c.h.b16 %v2812
    %v2914 = vunpack.c.l.b16 %v2813
    %v2915 = vunpack.c.h.b16 %v2813
    %v2916 = vpack.c.b16 %v2854, %v2852
    %v2917 = vpack.c.b16 %v2855, %v2853
    %v2918 = vpack.c.b16 %v2858, %v2856
    %v2919 = vpack.c.b16 %v2859, %v2857
    %v2920 = vpack.c.b16 %v2862, %v2860
    %v2921 = vpack.c.b16 %v2863, %v2861
    %v2922 = vpack.c.b16 %v2866, %v2864
    %v2923 = vpack.c.b16 %v2867, %v2865
    %v2924 = vpack.c.b16 %v2870, %v2868
    %v2925 = vpack.c.b16 %v2871, %v2869
    %v2926 = vpack.c.b16 %v2874, %v2872
    %v2927 = vpack.c.b16 %v2875, %v2873
    %v2928 = vpack.c.b16 %v2878, %v2876
    %v2929 = vpack.c.b16 %v2879, %v2877
    %v2930 = vpack.c.b16 %v2882, %v2880
    %v2931 = vpack.c.b16 %v2883, %v2881
    %v2932 = vpack.c.b16 %v2886, %v2884
    %v2933 = vpack.c.b16 %v2887, %v2885
    %v2934 = vpack.c.b16 %v2890, %v2888
    %v2935 = vpack.c.b16 %v2891, %v2889
    %v2936 = vpack.c.b16 %v2894, %v2892
    %v2937 = vpack.c.b16 %v2895, %v2893
    %v2938 = vpack.c.b16 %v2898, %v2896
    %v2939 = vpack.c.b16 %v2899, %v2897
    %v2940 = vpack.c.b16 %v2902, %v2900
    %v2941 = vpack.c.b16 %v2903, %v2901
    %v2942 = vpack.c.b16 %v2906, %v2904
    %v2943 = vpack.c.b16 %v2907, %v2905
    %v2944 = vpack.c.b16 %v2910, %v2908
    %v2945 = vpack.c.b16 %v2911, %v2909
    %v2946 = vpack.c.b16 %v2914, %v2912
    %v2947 = vpack.c.b16 %v2915, %v2913
    %2980 = vmatpush.bf16.msra.mxu0 %v2930
    %2981 = vmatpush.bf16.msra.mxu0 %v2928
    %2982 = vmatpush.bf16.msra.mxu0 %v2926
    %2983 = vmatpush.bf16.msra.mxu0 %v2924
    %2984 = vmatpush.bf16.msra.mxu0 %v2922
    %2985 = vmatpush.bf16.msra.mxu0 %v2920
    %2986 = vmatpush.bf16.msra.mxu0 %v2918
    %2987 = vmatpush.bf16.msra.mxu0 %v2916
    %2988 = vmatmul.bf16.gmra.mxu0 %v2750
    %v2989 = vpop.f32.mrf.mxu0
    %v2990 = vadd.f32 %v2816, %v2989
    %v2991 = vpop.f32.mrf.mxu0
    %v2992 = vadd.f32 %v2816, %v2991
    %2993 = vmatmul.bf16.gmra.mxu0 %v2752
    %v2994 = vpop.f32.mrf.mxu0
    %v2995 = vadd.f32 %v2816, %v2994
    %v2996 = vpop.f32.mrf.mxu0
    %v2997 = vadd.f32 %v2816, %v2996
    %2998 = vmatmul.bf16.gmra.mxu0 %v2754
    %v2999 = vpop.f32.mrf.mxu0
    %v3000 = vadd.f32 %v2816, %v2999
    %v3001 = vpop.f32.mrf.mxu0
    %v3002 = vadd.f32 %v2816, %v3001
    %3003 = vmatmul.bf16.gmra.mxu0 %v2756
    %v3004 = vpop.f32.mrf.mxu0
    %v3005 = vadd.f32 %v2816, %v3004
    %v3006 = vpop.f32.mrf.mxu0
    %v3007 = vadd.f32 %v2816, %v3006
    %3008 = vmatmul.bf16.gmra.mxu0 %v2758
    %v3009 = vpop.f32.mrf.mxu0
    %v3010 = vadd.f32 %v2816, %v3009
    %v3011 = vpop.f32.mrf.mxu0
    %v3012 = vadd.f32 %v2816, %v3011
    %3013 = vmatmul.bf16.gmra.mxu0 %v2760
    %v3014 = vpop.f32.mrf.mxu0
    %v3015 = vadd.f32 %v2816, %v3014
    %v3016 = vpop.f32.mrf.mxu0
    %v3017 = vadd.f32 %v2816, %v3016
    %3018 = vmatmul.bf16.gmra.mxu0 %v2762
    %v3019 = vpop.f32.mrf.mxu0
    %v3020 = vadd.f32 %v2816, %v3019
    %v3021 = vpop.f32.mrf.mxu0
    %v3022 = vadd.f32 %v2816, %v3021
    %3023 = vmatmul.bf16.gmra.mxu0 %v2764
    %v3024 = vpop.f32.mrf.mxu0
    %v3025 = vadd.f32 %v2816, %v3024
    %v3026 = vpop.f32.mrf.mxu0
    %v3027 = vadd.f32 %v2816, %v3026
    %3028 = vmatmul.bf16.gmra.mxu0 %v2766
    %v3029 = vpop.f32.mrf.mxu0
    %v3030 = vadd.f32 %v2816, %v3029
    %v3031 = vpop.f32.mrf.mxu0
    %v3032 = vadd.f32 %v2816, %v3031
    %3033 = vmatmul.bf16.gmra.mxu0 %v2768
    %v3034 = vpop.f32.mrf.mxu0
    %v3035 = vadd.f32 %v2816, %v3034
    %v3036 = vpop.f32.mrf.mxu0
    %v3037 = vadd.f32 %v2816, %v3036
    %3038 = vmatmul.bf16.gmra.mxu0 %v2770
    %v3039 = vpop.f32.mrf.mxu0
    %v3040 = vadd.f32 %v2816, %v3039
    %v3041 = vpop.f32.mrf.mxu0
    %v3042 = vadd.f32 %v2816, %v3041
    %3043 = vmatmul.bf16.gmra.mxu0 %v2772
    %v3044 = vpop.f32.mrf.mxu0
    %v3045 = vadd.f32 %v2816, %v3044
    %v3046 = vpop.f32.mrf.mxu0
    %v3047 = vadd.f32 %v2816, %v3046
    %3048 = vmatmul.bf16.gmra.mxu0 %v2774
    %v3049 = vpop.f32.mrf.mxu0
    %v3050 = vadd.f32 %v2816, %v3049
    %v3051 = vpop.f32.mrf.mxu0
    %v3052 = vadd.f32 %v2816, %v3051
    %3053 = vmatmul.bf16.gmra.mxu0 %v2776
    %v3054 = vpop.f32.mrf.mxu0
    %v3055 = vadd.f32 %v2816, %v3054
    %v3056 = vpop.f32.mrf.mxu0
    %v3057 = vadd.f32 %v2816, %v3056
    %3058 = vmatmul.bf16.gmra.mxu0 %v2778
    %v3059 = vpop.f32.mrf.mxu0
    %v3060 = vadd.f32 %v2816, %v3059
    %v3061 = vpop.f32.mrf.mxu0
    %v3062 = vadd.f32 %v2816, %v3061
    %3063 = vmatmul.bf16.gmra.mxu0 %v2780
    %v3064 = vpop.f32.mrf.mxu0
    %v3065 = vadd.f32 %v2816, %v3064
    %v3066 = vpop.f32.mrf.mxu0
    %v3067 = vadd.f32 %v2816, %v3066
    %3068 = vdwg.mxu0
    %3069 = vmatpush.bf16.msra.mxu0 %v2946
    %3070 = vmatpush.bf16.msra.mxu0 %v2944
    %3071 = vmatpush.bf16.msra.mxu0 %v2942
    %3072 = vmatpush.bf16.msra.mxu0 %v2940
    %3073 = vmatpush.bf16.msra.mxu0 %v2938
    %3074 = vmatpush.bf16.msra.mxu0 %v2936
    %3075 = vmatpush.bf16.msra.mxu0 %v2934
    %3076 = vmatpush.bf16.msra.mxu0 %v2932
    %3077 = vmatmul.bf16.gmra.mxu0 %v2751
    %v3078 = vpop.f32.mrf.mxu0
    %v3079 = vadd.f32 %v2990, %v3078
    %v3080 = vpop.f32.mrf.mxu0
    %v3081 = vadd.f32 %v2992, %v3080
    %3082 = vmatmul.bf16.gmra.mxu0 %v2753
    %v3083 = vpop.f32.mrf.mxu0
    %v3084 = vadd.f32 %v2995, %v3083
    %v3085 = vpop.f32.mrf.mxu0
    %v3086 = vadd.f32 %v2997, %v3085
    %3087 = vmatmul.bf16.gmra.mxu0 %v2755
    %v3088 = vpop.f32.mrf.mxu0
    %v3089 = vadd.f32 %v3000, %v3088
    %v3090 = vpop.f32.mrf.mxu0
    %v3091 = vadd.f32 %v3002, %v3090
    %3092 = vmatmul.bf16.gmra.mxu0 %v2757
    %v3093 = vpop.f32.mrf.mxu0
    %v3094 = vadd.f32 %v3005, %v3093
    %v3095 = vpop.f32.mrf.mxu0
    %v3096 = vadd.f32 %v3007, %v3095
    %3097 = vmatmul.bf16.gmra.mxu0 %v2759
    %v3098 = vpop.f32.mrf.mxu0
    %v3099 = vadd.f32 %v3010, %v3098
    %v3100 = vpop.f32.mrf.mxu0
    %v3101 = vadd.f32 %v3012, %v3100
    %3102 = vmatmul.bf16.gmra.mxu0 %v2761
    %v3103 = vpop.f32.mrf.mxu0
    %v3104 = vadd.f32 %v3015, %v3103
    %v3105 = vpop.f32.mrf.mxu0
    %v3106 = vadd.f32 %v3017, %v3105
    %3107 = vmatmul.bf16.gmra.mxu0 %v2763
    %v3108 = vpop.f32.mrf.mxu0
    %v3109 = vadd.f32 %v3020, %v3108
    %v3110 = vpop.f32.mrf.mxu0
    %v3111 = vadd.f32 %v3022, %v3110
    %3112 = vmatmul.bf16.gmra.mxu0 %v2765
    %v3113 = vpop.f32.mrf.mxu0
    %v3114 = vadd.f32 %v3025, %v3113
    %v3115 = vpop.f32.mrf.mxu0
    %v3116 = vadd.f32 %v3027, %v3115
    %3117 = vmatmul.bf16.gmra.mxu0 %v2767
    %v3118 = vpop.f32.mrf.mxu0
    %v3119 = vadd.f32 %v3030, %v3118
    %v3120 = vpop.f32.mrf.mxu0
    %v3121 = vadd.f32 %v3032, %v3120
    %3122 = vmatmul.bf16.gmra.mxu0 %v2769
    %v3123 = vpop.f32.mrf.mxu0
    %v3124 = vadd.f32 %v3035, %v3123
    %v3125 = vpop.f32.mrf.mxu0
    %v3126 = vadd.f32 %v3037, %v3125
    %3127 = vmatmul.bf16.gmra.mxu0 %v2771
    %v3128 = vpop.f32.mrf.mxu0
    %v3129 = vadd.f32 %v3040, %v3128
    %v3130 = vpop.f32.mrf.mxu0
    %v3131 = vadd.f32 %v3042, %v3130
    %3132 = vmatmul.bf16.gmra.mxu0 %v2773
    %v3133 = vpop.f32.mrf.mxu0
    %v3134 = vadd.f32 %v3045, %v3133
    %v3135 = vpop.f32.mrf.mxu0
    %v3136 = vadd.f32 %v3047, %v3135
    %3137 = vmatmul.bf16.gmra.mxu0 %v2775
    %v3138 = vpop.f32.mrf.mxu0
    %v3139 = vadd.f32 %v3050, %v3138
    %v3140 = vpop.f32.mrf.mxu0
    %v3141 = vadd.f32 %v3052, %v3140
    %3142 = vmatmul.bf16.gmra.mxu0 %v2777
    %v3143 = vpop.f32.mrf.mxu0
    %v3144 = vadd.f32 %v3055, %v3143
    %v3145 = vpop.f32.mrf.mxu0
    %v3146 = vadd.f32 %v3057, %v3145
    %3147 = vmatmul.bf16.gmra.mxu0 %v2779
    %v3148 = vpop.f32.mrf.mxu0
    %v3149 = vadd.f32 %v3060, %v3148
    %v3150 = vpop.f32.mrf.mxu0
    %v3151 = vadd.f32 %v3062, %v3150
    %3152 = vmatmul.bf16.gmra.mxu0 %v2781
    %v3153 = vpop.f32.mrf.mxu0
    %v3154 = vadd.f32 %v3065, %v3153
    %v3155 = vpop.f32.mrf.mxu0
    %v3156 = vadd.f32 %v3067, %v3155
    %3157 = vdwg.mxu0
    %3158 = vmatpush.bf16.msra.mxu0 %v2931
    %3159 = vmatpush.bf16.msra.mxu0 %v2929
    %3160 = vmatpush.bf16.msra.mxu0 %v2927
    %3161 = vmatpush.bf16.msra.mxu0 %v2925
    %3162 = vmatpush.bf16.msra.mxu0 %v2923
    %3163 = vmatpush.bf16.msra.mxu0 %v2921
    %3164 = vmatpush.bf16.msra.mxu0 %v2919
    %3165 = vmatpush.bf16.msra.mxu0 %v2917
    %3166 = vmatmul.bf16.gmra.mxu0 %v2750
    %v3167 = vpop.f32.mrf.mxu0
    %v3168 = vadd.f32 %v2817, %v3167
    %v3169 = vpop.f32.mrf.mxu0
    %v3170 = vadd.f32 %v2817, %v3169
    %3171 = vmatmul.bf16.gmra.mxu0 %v2752
    %v3172 = vpop.f32.mrf.mxu0
    %v3173 = vadd.f32 %v2817, %v3172
    %v3174 = vpop.f32.mrf.mxu0
    %v3175 = vadd.f32 %v2817, %v3174
    %3176 = vmatmul.bf16.gmra.mxu0 %v2754
    %v3177 = vpop.f32.mrf.mxu0
    %v3178 = vadd.f32 %v2817, %v3177
    %v3179 = vpop.f32.mrf.mxu0
    %v3180 = vadd.f32 %v2817, %v3179
    %3181 = vmatmul.bf16.gmra.mxu0 %v2756
    %v3182 = vpop.f32.mrf.mxu0
    %v3183 = vadd.f32 %v2817, %v3182
    %v3184 = vpop.f32.mrf.mxu0
    %v3185 = vadd.f32 %v2817, %v3184
    %3186 = vmatmul.bf16.gmra.mxu0 %v2758
    %v3187 = vpop.f32.mrf.mxu0
    %v3188 = vadd.f32 %v2817, %v3187
    %v3189 = vpop.f32.mrf.mxu0
    %v3190 = vadd.f32 %v2817, %v3189
    %3191 = vmatmul.bf16.gmra.mxu0 %v2760
    %v3192 = vpop.f32.mrf.mxu0
    %v3193 = vadd.f32 %v2817, %v3192
    %v3194 = vpop.f32.mrf.mxu0
    %v3195 = vadd.f32 %v2817, %v3194
    %3196 = vmatmul.bf16.gmra.mxu0 %v2762
    %v3197 = vpop.f32.mrf.mxu0
    %v3198 = vadd.f32 %v2817, %v3197
    %v3199 = vpop.f32.mrf.mxu0
    %v3200 = vadd.f32 %v2817, %v3199
    %3201 = vmatmul.bf16.gmra.mxu0 %v2764
    %v3202 = vpop.f32.mrf.mxu0
    %v3203 = vadd.f32 %v2817, %v3202
    %v3204 = vpop.f32.mrf.mxu0
    %v3205 = vadd.f32 %v2817, %v3204
    %3206 = vmatmul.bf16.gmra.mxu0 %v2766
    %v3207 = vpop.f32.mrf.mxu0
    %v3208 = vadd.f32 %v2817, %v3207
    %v3209 = vpop.f32.mrf.mxu0
    %v3210 = vadd.f32 %v2817, %v3209
    %3211 = vmatmul.bf16.gmra.mxu0 %v2768
    %v3212 = vpop.f32.mrf.mxu0
    %v3213 = vadd.f32 %v2817, %v3212
    %v3214 = vpop.f32.mrf.mxu0
    %v3215 = vadd.f32 %v2817, %v3214
    %3216 = vmatmul.bf16.gmra.mxu0 %v2770
    %v3217 = vpop.f32.mrf.mxu0
    %v3218 = vadd.f32 %v2817, %v3217
    %v3219 = vpop.f32.mrf.mxu0
    %v3220 = vadd.f32 %v2817, %v3219
    %3221 = vmatmul.bf16.gmra.mxu0 %v2772
    %v3222 = vpop.f32.mrf.mxu0
    %v3223 = vadd.f32 %v2817, %v3222
    %v3224 = vpop.f32.mrf.mxu0
    %v3225 = vadd.f32 %v2817, %v3224
    %3226 = vmatmul.bf16.gmra.mxu0 %v2774
    %v3227 = vpop.f32.mrf.mxu0
    %v3228 = vadd.f32 %v2817, %v3227
    %v3229 = vpop.f32.mrf.mxu0
    %v3230 = vadd.f32 %v2817, %v3229
    %3231 = vmatmul.bf16.gmra.mxu0 %v2776
    %v3232 = vpop.f32.mrf.mxu0
    %v3233 = vadd.f32 %v2817, %v3232
    %v3234 = vpop.f32.mrf.mxu0
    %v3235 = vadd.f32 %v2817, %v3234
    %3236 = vmatmul.bf16.gmra.mxu0 %v2778
    %v3237 = vpop.f32.mrf.mxu0
    %v3238 = vadd.f32 %v2817, %v3237
    %v3239 = vpop.f32.mrf.mxu0
    %v3240 = vadd.f32 %v2817, %v3239
    %3241 = vmatmul.bf16.gmra.mxu0 %v2780
    %v3242 = vpop.f32.mrf.mxu0
    %v3243 = vadd.f32 %v2817, %v3242
    %v3244 = vpop.f32.mrf.mxu0
    %v3245 = vadd.f32 %v2817, %v3244
    %3246 = vdwg.mxu0
    %3247 = vmatpush.bf16.msra.mxu0 %v2947
    %3248 = vmatpush.bf16.msra.mxu0 %v2945
    %3249 = vmatpush.bf16.msra.mxu0 %v2943
    %3250 = vmatpush.bf16.msra.mxu0 %v2941
    %3251 = vmatpush.bf16.msra.mxu0 %v2939
    %3252 = vmatpush.bf16.msra.mxu0 %v2937
    %3253 = vmatpush.bf16.msra.mxu0 %v2935
    %3254 = vmatpush.bf16.msra.mxu0 %v2933
    %3255 = vmatmul.bf16.gmra.mxu0 %v2751
    %v3256 = vpop.f32.mrf.mxu0
    %v3257 = vadd.f32 %v3168, %v3256
    %v3258 = vpop.f32.mrf.mxu0
    %v3259 = vadd.f32 %v3170, %v3258
    %3260 = vmatmul.bf16.gmra.mxu0 %v2753
    %v3261 = vpop.f32.mrf.mxu0
    %v3262 = vadd.f32 %v3173, %v3261
    %v3263 = vpop.f32.mrf.mxu0
    %v3264 = vadd.f32 %v3175, %v3263
    %3265 = vmatmul.bf16.gmra.mxu0 %v2755
    %v3266 = vpop.f32.mrf.mxu0
    %v3267 = vadd.f32 %v3178, %v3266
    %v3268 = vpop.f32.mrf.mxu0
    %v3269 = vadd.f32 %v3180, %v3268
    %3270 = vmatmul.bf16.gmra.mxu0 %v2757
    %v3271 = vpop.f32.mrf.mxu0
    %v3272 = vadd.f32 %v3183, %v3271
    %v3273 = vpop.f32.mrf.mxu0
    %v3274 = vadd.f32 %v3185, %v3273
    %3275 = vmatmul.bf16.gmra.mxu0 %v2759
    %v3276 = vpop.f32.mrf.mxu0
    %v3277 = vadd.f32 %v3188, %v3276
    %v3278 = vpop.f32.mrf.mxu0
    %v3279 = vadd.f32 %v3190, %v3278
    %3280 = vmatmul.bf16.gmra.mxu0 %v2761
    %v3281 = vpop.f32.mrf.mxu0
    %v3282 = vadd.f32 %v3193, %v3281
    %v3283 = vpop.f32.mrf.mxu0
    %v3284 = vadd.f32 %v3195, %v3283
    %3285 = vmatmul.bf16.gmra.mxu0 %v2763
    %v3286 = vpop.f32.mrf.mxu0
    %v3287 = vadd.f32 %v3198, %v3286
    %v3288 = vpop.f32.mrf.mxu0
    %v3289 = vadd.f32 %v3200, %v3288
    %3290 = vmatmul.bf16.gmra.mxu0 %v2765
    %v3291 = vpop.f32.mrf.mxu0
    %v3292 = vadd.f32 %v3203, %v3291
    %v3293 = vpop.f32.mrf.mxu0
    %v3294 = vadd.f32 %v3205, %v3293
    %3295 = vmatmul.bf16.gmra.mxu0 %v2767
    %v3296 = vpop.f32.mrf.mxu0
    %v3297 = vadd.f32 %v3208, %v3296
    %v3298 = vpop.f32.mrf.mxu0
    %v3299 = vadd.f32 %v3210, %v3298
    %3300 = vmatmul.bf16.gmra.mxu0 %v2769
    %v3301 = vpop.f32.mrf.mxu0
    %v3302 = vadd.f32 %v3213, %v3301
    %v3303 = vpop.f32.mrf.mxu0
    %v3304 = vadd.f32 %v3215, %v3303
    %3305 = vmatmul.bf16.gmra.mxu0 %v2771
    %v3306 = vpop.f32.mrf.mxu0
    %v3307 = vadd.f32 %v3218, %v3306
    %v3308 = vpop.f32.mrf.mxu0
    %v3309 = vadd.f32 %v3220, %v3308
    %3310 = vmatmul.bf16.gmra.mxu0 %v2773
    %v3311 = vpop.f32.mrf.mxu0
    %v3312 = vadd.f32 %v3223, %v3311
    %v3313 = vpop.f32.mrf.mxu0
    %v3314 = vadd.f32 %v3225, %v3313
    %3315 = vmatmul.bf16.gmra.mxu0 %v2775
    %v3316 = vpop.f32.mrf.mxu0
    %v3317 = vadd.f32 %v3228, %v3316
    %v3318 = vpop.f32.mrf.mxu0
    %v3319 = vadd.f32 %v3230, %v3318
    %3320 = vmatmul.bf16.gmra.mxu0 %v2777
    %v3321 = vpop.f32.mrf.mxu0
    %v3322 = vadd.f32 %v3233, %v3321
    %v3323 = vpop.f32.mrf.mxu0
    %v3324 = vadd.f32 %v3235, %v3323
    %3325 = vmatmul.bf16.gmra.mxu0 %v2779
    %v3326 = vpop.f32.mrf.mxu0
    %v3327 = vadd.f32 %v3238, %v3326
    %v3328 = vpop.f32.mrf.mxu0
    %v3329 = vadd.f32 %v3240, %v3328
    %3330 = vmatmul.bf16.gmra.mxu0 %v2781
    %v3331 = vpop.f32.mrf.mxu0
    %v3332 = vadd.f32 %v3243, %v3331
    %v3333 = vpop.f32.mrf.mxu0
    %v3334 = vadd.f32 %v3245, %v3333
    %3335 = vdwg.mxu0
    %v3336 = vmax.f32 %v3079, 0.0
    %v3337 = vmax.f32 %v3257, 0.0
    %v3338 = vmax.f32 %v3081, 0.0
    %v3339 = vmax.f32 %v3259, 0.0
    %v3340 = vmax.f32 %v3084, 0.0
    %v3341 = vmax.f32 %v3262, 0.0
    %v3342 = vmax.f32 %v3086, 0.0
    %v3343 = vmax.f32 %v3264, 0.0
    %v3344 = vmax.f32 %v3089, 0.0
    %v3345 = vmax.f32 %v3267, 0.0
    %v3346 = vmax.f32 %v3091, 0.0
    %v3347 = vmax.f32 %v3269, 0.0
    %v3348 = vmax.f32 %v3094, 0.0
    %v3349 = vmax.f32 %v3272, 0.0
    %v3350 = vmax.f32 %v3096, 0.0
    %v3351 = vmax.f32 %v3274, 0.0
    %v3352 = vmax.f32 %v3099, 0.0
    %v3353 = vmax.f32 %v3277, 0.0
    %v3354 = vmax.f32 %v3101, 0.0
    %v3355 = vmax.f32 %v3279, 0.0
    %v3356 = vmax.f32 %v3104, 0.0
    %v3357 = vmax.f32 %v3282, 0.0
    %v3358 = vmax.f32 %v3106, 0.0
    %v3359 = vmax.f32 %v3284, 0.0
    %v3360 = vmax.f32 %v3109, 0.0
    %v3361 = vmax.f32 %v3287, 0.0
    %v3362 = vmax.f32 %v3111, 0.0
    %v3363 = vmax.f32 %v3289, 0.0
    %v3364 = vmax.f32 %v3114, 0.0
    %v3365 = vmax.f32 %v3292, 0.0
    %v3366 = vmax.f32 %v3116, 0.0
    %v3367 = vmax.f32 %v3294, 0.0
    %v3368 = vmax.f32 %v3119, 0.0
    %v3369 = vmax.f32 %v3297, 0.0
    %v3370 = vmax.f32 %v3121, 0.0
    %v3371 = vmax.f32 %v3299, 0.0
    %v3372 = vmax.f32 %v3124, 0.0
    %v3373 = vmax.f32 %v3302, 0.0
    %v3374 = vmax.f32 %v3126, 0.0
    %v3375 = vmax.f32 %v3304, 0.0
    %v3376 = vmax.f32 %v3129, 0.0
    %v3377 = vmax.f32 %v3307, 0.0
    %v3378 = vmax.f32 %v3131, 0.0
    %v3379 = vmax.f32 %v3309, 0.0
    %v3380 = vmax.f32 %v3134, 0.0
    %v3381 = vmax.f32 %v3312, 0.0
    %v3382 = vmax.f32 %v3136, 0.0
    %v3383 = vmax.f32 %v3314, 0.0
    %v3384 = vmax.f32 %v3139, 0.0
    %v3385 = vmax.f32 %v3317, 0.0
    %v3386 = vmax.f32 %v3141, 0.0
    %v3387 = vmax.f32 %v3319, 0.0
    %v3388 = vmax.f32 %v3144, 0.0
    %v3389 = vmax.f32 %v3322, 0.0
    %v3390 = vmax.f32 %v3146, 0.0
    %v3391 = vmax.f32 %v3324, 0.0
    %v3392 = vmax.f32 %v3149, 0.0
    %v3393 = vmax.f32 %v3327, 0.0
    %v3394 = vmax.f32 %v3151, 0.0
    %v3395 = vmax.f32 %v3329, 0.0
    %v3396 = vmax.f32 %v3154, 0.0
    %v3397 = vmax.f32 %v3332, 0.0
    %v3398 = vmax.f32 %v3156, 0.0
    %v3399 = vmax.f32 %v3334, 0.0
    %v3400 = vpack.c.bf16 %v3338, %v3336
    %v3401 = vpack.c.bf16 %v3339, %v3337
    %v3402 = vpack.c.bf16 %v3342, %v3340
    %v3403 = vpack.c.bf16 %v3343, %v3341
    %v3404 = vpack.c.bf16 %v3346, %v3344
    %v3405 = vpack.c.bf16 %v3347, %v3345
    %v3406 = vpack.c.bf16 %v3350, %v3348
    %v3407 = vpack.c.bf16 %v3351, %v3349
    %v3408 = vpack.c.bf16 %v3354, %v3352
    %v3409 = vpack.c.bf16 %v3355, %v3353
    %v3410 = vpack.c.bf16 %v3358, %v3356
    %v3411 = vpack.c.bf16 %v3359, %v3357
    %v3412 = vpack.c.bf16 %v3362, %v3360
    %v3413 = vpack.c.bf16 %v3363, %v3361
    %v3414 = vpack.c.bf16 %v3366, %v3364
    %v3415 = vpack.c.bf16 %v3367, %v3365
    %v3416 = vpack.c.bf16 %v3370, %v3368
    %v3417 = vpack.c.bf16 %v3371, %v3369
    %v3418 = vpack.c.bf16 %v3374, %v3372
    %v3419 = vpack.c.bf16 %v3375, %v3373
    %v3420 = vpack.c.bf16 %v3378, %v3376
    %v3421 = vpack.c.bf16 %v3379, %v3377
    %v3422 = vpack.c.bf16 %v3382, %v3380
    %v3423 = vpack.c.bf16 %v3383, %v3381
    %v3424 = vpack.c.bf16 %v3386, %v3384
    %v3425 = vpack.c.bf16 %v3387, %v3385
    %v3426 = vpack.c.bf16 %v3390, %v3388
    %v3427 = vpack.c.bf16 %v3391, %v3389
    %v3428 = vpack.c.bf16 %v3394, %v3392
    %v3429 = vpack.c.bf16 %v3395, %v3393
    %v3430 = vpack.c.bf16 %v3398, %v3396
    %v3431 = vpack.c.bf16 %v3399, %v3397
    %v3432 = vld [vmem:[#allocation4] sm:$0xf]
    %v3433 = vld [vmem:[#allocation4 + $0x4] sm:$0xf]
    %v3434 = vld [vmem:[#allocation4 + $0x8] sm:$0xf]
    %v3435 = vld [vmem:[#allocation4 + $0xc] sm:$0xf]
    %v3436 = vld [vmem:[#allocation4 + $0x10] sm:$0xf]
    %v3437 = vld [vmem:[#allocation4 + $0x14] sm:$0xf]
    %v3438 = vld [vmem:[#allocation4 + $0x18] sm:$0xf]
    %v3439 = vld [vmem:[#allocation4 + $0x1c] sm:$0xf]
    %v3440 = vld [vmem:[#allocation4 + $0x20] sm:$0xf]
    %v3441 = vld [vmem:[#allocation4 + $0x24] sm:$0xf]
    %v3442 = vld [vmem:[#allocation4 + $0x28] sm:$0xf]
    %v3443 = vld [vmem:[#allocation4 + $0x2c] sm:$0xf]
    %v3444 = vld [vmem:[#allocation4 + $0x30] sm:$0xf]
    %v3445 = vld [vmem:[#allocation4 + $0x34] sm:$0xf]
    %v3446 = vld [vmem:[#allocation4 + $0x38] sm:$0xf]
    %v3447 = vld [vmem:[#allocation4 + $0x3c] sm:$0xf]
    %v3448 = vld [vmem:[#allocation4 + $0x40] sm:$0xf]
    %v3449 = vld [vmem:[#allocation4 + $0x44] sm:$0xf]
    %v3450 = vld [vmem:[#allocation4 + $0x48] sm:$0xf]
    %v3451 = vld [vmem:[#allocation4 + $0x4c] sm:$0xf]
    %v3452 = vld [vmem:[#allocation4 + $0x50] sm:$0xf]
    %v3453 = vld [vmem:[#allocation4 + $0x54] sm:$0xf]
    %v3454 = vld [vmem:[#allocation4 + $0x58] sm:$0xf]
    %v3455 = vld [vmem:[#allocation4 + $0x5c] sm:$0xf]
    %v3456 = vld [vmem:[#allocation4 + $0x60] sm:$0xf]
    %v3457 = vld [vmem:[#allocation4 + $0x64] sm:$0xf]
    %v3458 = vld [vmem:[#allocation4 + $0x68] sm:$0xf]
    %v3459 = vld [vmem:[#allocation4 + $0x6c] sm:$0xf]
    %v3460 = vld [vmem:[#allocation4 + $0x70] sm:$0xf]
    %v3461 = vld [vmem:[#allocation4 + $0x74] sm:$0xf]
    %v3462 = vld [vmem:[#allocation4 + $0x78] sm:$0xf]
    %v3463 = vld [vmem:[#allocation4 + $0x7c] sm:$0xf]
    %v3464 = vld [vmem:[%s6] sm:$0x1]
    %v3466 = vperm.slane %v3464, 0
    %v3500 = vunpack.c.l.b16 %v3432
    %v3501 = vunpack.c.l.b16 %v3433
    %v3502 = vunpack.c.l.b16 %v3434
    %v3503 = vunpack.c.l.b16 %v3435
    %v3504 = vunpack.c.l.b16 %v3436
    %v3505 = vunpack.c.l.b16 %v3437
    %v3506 = vunpack.c.l.b16 %v3438
    %v3507 = vunpack.c.l.b16 %v3439
    %v3508 = vunpack.c.l.b16 %v3440
    %v3509 = vunpack.c.l.b16 %v3441
    %v3510 = vunpack.c.l.b16 %v3442
    %v3511 = vunpack.c.l.b16 %v3443
    %v3512 = vunpack.c.l.b16 %v3444
    %v3513 = vunpack.c.l.b16 %v3445
    %v3514 = vunpack.c.l.b16 %v3446
    %v3515 = vunpack.c.l.b16 %v3447
    %v3516 = vunpack.c.l.b16 %v3448
    %v3517 = vunpack.c.l.b16 %v3449
    %v3518 = vunpack.c.l.b16 %v3450
    %v3519 = vunpack.c.l.b16 %v3451
    %v3520 = vunpack.c.l.b16 %v3452
    %v3521 = vunpack.c.l.b16 %v3453
    %v3522 = vunpack.c.l.b16 %v3454
    %v3523 = vunpack.c.l.b16 %v3455
    %v3524 = vunpack.c.l.b16 %v3456
    %v3525 = vunpack.c.l.b16 %v3457
    %v3526 = vunpack.c.l.b16 %v3458
    %v3527 = vunpack.c.l.b16 %v3459
    %v3528 = vunpack.c.l.b16 %v3460
    %v3529 = vunpack.c.l.b16 %v3461
    %v3530 = vunpack.c.l.b16 %v3462
    %v3531 = vunpack.c.l.b16 %v3463
    %v3532 = vpack.c.b16 %v3501, %v3500
    %v3533 = vpack.c.b16 %v3503, %v3502
    %v3534 = vpack.c.b16 %v3505, %v3504
    %v3535 = vpack.c.b16 %v3507, %v3506
    %v3536 = vpack.c.b16 %v3509, %v3508
    %v3537 = vpack.c.b16 %v3511, %v3510
    %v3538 = vpack.c.b16 %v3513, %v3512
    %v3539 = vpack.c.b16 %v3515, %v3514
    %v3540 = vpack.c.b16 %v3517, %v3516
    %v3541 = vpack.c.b16 %v3519, %v3518
    %v3542 = vpack.c.b16 %v3521, %v3520
    %v3543 = vpack.c.b16 %v3523, %v3522
    %v3544 = vpack.c.b16 %v3525, %v3524
    %v3545 = vpack.c.b16 %v3527, %v3526
    %v3546 = vpack.c.b16 %v3529, %v3528
    %v3547 = vpack.c.b16 %v3531, %v3530
    %3564 = vmatpush.bf16.msra.mxu0 %v3539
    %3565 = vmatpush.bf16.msra.mxu0 %v3538
    %3566 = vmatpush.bf16.msra.mxu0 %v3537
    %3567 = vmatpush.bf16.msra.mxu0 %v3536
    %3568 = vmatpush.bf16.msra.mxu0 %v3535
    %3569 = vmatpush.bf16.msra.mxu0 %v3534
    %3570 = vmatpush.bf16.msra.mxu0 %v3533
    %3571 = vmatpush.bf16.msra.mxu0 %v3532
    %3572 = vmatmul.bf16.gmra.mxu0 %v3400
    %v3573 = vpop.f32.mrf.mxu0
    %v3574 = vadd.f32 %v3466, %v3573
    %v3575 = vpop.f32.mrf.mxu0
    %v3576 = vadd.f32 %v3466, %v3575
    %3577 = vmatmul.bf16.gmra.mxu0 %v3402
    %v3578 = vpop.f32.mrf.mxu0
    %v3579 = vadd.f32 %v3466, %v3578
    %v3580 = vpop.f32.mrf.mxu0
    %v3581 = vadd.f32 %v3466, %v3580
    %3582 = vmatmul.bf16.gmra.mxu0 %v3404
    %v3583 = vpop.f32.mrf.mxu0
    %v3584 = vadd.f32 %v3466, %v3583
    %v3585 = vpop.f32.mrf.mxu0
    %v3586 = vadd.f32 %v3466, %v3585
    %3587 = vmatmul.bf16.gmra.mxu0 %v3406
    %v3588 = vpop.f32.mrf.mxu0
    %v3589 = vadd.f32 %v3466, %v3588
    %v3590 = vpop.f32.mrf.mxu0
    %v3591 = vadd.f32 %v3466, %v3590
    %3592 = vmatmul.bf16.gmra.mxu0 %v3408
    %v3593 = vpop.f32.mrf.mxu0
    %v3594 = vadd.f32 %v3466, %v3593
    %v3595 = vpop.f32.mrf.mxu0
    %v3596 = vadd.f32 %v3466, %v3595
    %3597 = vmatmul.bf16.gmra.mxu0 %v3410
    %v3598 = vpop.f32.mrf.mxu0
    %v3599 = vadd.f32 %v3466, %v3598
    %v3600 = vpop.f32.mrf.mxu0
    %v3601 = vadd.f32 %v3466, %v3600
    %3602 = vmatmul.bf16.gmra.mxu0 %v3412
    %v3603 = vpop.f32.mrf.mxu0
    %v3604 = vadd.f32 %v3466, %v3603
    %v3605 = vpop.f32.mrf.mxu0
    %v3606 = vadd.f32 %v3466, %v3605
    %3607 = vmatmul.bf16.gmra.mxu0 %v3414
    %v3608 = vpop.f32.mrf.mxu0
    %v3609 = vadd.f32 %v3466, %v3608
    %v3610 = vpop.f32.mrf.mxu0
    %v3611 = vadd.f32 %v3466, %v3610
    %3612 = vmatmul.bf16.gmra.mxu0 %v3416
    %v3613 = vpop.f32.mrf.mxu0
    %v3614 = vadd.f32 %v3466, %v3613
    %v3615 = vpop.f32.mrf.mxu0
    %v3616 = vadd.f32 %v3466, %v3615
    %3617 = vmatmul.bf16.gmra.mxu0 %v3418
    %v3618 = vpop.f32.mrf.mxu0
    %v3619 = vadd.f32 %v3466, %v3618
    %v3620 = vpop.f32.mrf.mxu0
    %v3621 = vadd.f32 %v3466, %v3620
    %3622 = vmatmul.bf16.gmra.mxu0 %v3420
    %v3623 = vpop.f32.mrf.mxu0
    %v3624 = vadd.f32 %v3466, %v3623
    %v3625 = vpop.f32.mrf.mxu0
    %v3626 = vadd.f32 %v3466, %v3625
    %3627 = vmatmul.bf16.gmra.mxu0 %v3422
    %v3628 = vpop.f32.mrf.mxu0
    %v3629 = vadd.f32 %v3466, %v3628
    %v3630 = vpop.f32.mrf.mxu0
    %v3631 = vadd.f32 %v3466, %v3630
    %3632 = vmatmul.bf16.gmra.mxu0 %v3424
    %v3633 = vpop.f32.mrf.mxu0
    %v3634 = vadd.f32 %v3466, %v3633
    %v3635 = vpop.f32.mrf.mxu0
    %v3636 = vadd.f32 %v3466, %v3635
    %3637 = vmatmul.bf16.gmra.mxu0 %v3426
    %v3638 = vpop.f32.mrf.mxu0
    %v3639 = vadd.f32 %v3466, %v3638
    %v3640 = vpop.f32.mrf.mxu0
    %v3641 = vadd.f32 %v3466, %v3640
    %3642 = vmatmul.bf16.gmra.mxu0 %v3428
    %v3643 = vpop.f32.mrf.mxu0
    %v3644 = vadd.f32 %v3466, %v3643
    %v3645 = vpop.f32.mrf.mxu0
    %v3646 = vadd.f32 %v3466, %v3645
    %3647 = vmatmul.bf16.gmra.mxu0 %v3430
    %v3648 = vpop.f32.mrf.mxu0
    %v3649 = vadd.f32 %v3466, %v3648
    %v3650 = vpop.f32.mrf.mxu0
    %v3651 = vadd.f32 %v3466, %v3650
    %3652 = vdwg.mxu0
    %3653 = vmatpush.bf16.msra.mxu0 %v3547
    %3654 = vmatpush.bf16.msra.mxu0 %v3546
    %3655 = vmatpush.bf16.msra.mxu0 %v3545
    %3656 = vmatpush.bf16.msra.mxu0 %v3544
    %3657 = vmatpush.bf16.msra.mxu0 %v3543
    %3658 = vmatpush.bf16.msra.mxu0 %v3542
    %3659 = vmatpush.bf16.msra.mxu0 %v3541
    %3660 = vmatpush.bf16.msra.mxu0 %v3540
    %3661 = vmatmul.bf16.gmra.mxu0 %v3401
    %v3662 = vpop.f32.mrf.mxu0
    %v3663 = vadd.f32 %v3574, %v3662
    %v3664 = vpop.f32.mrf.mxu0
    %v3665 = vadd.f32 %v3576, %v3664
    %3666 = vmatmul.bf16.gmra.mxu0 %v3403
    %v3667 = vpop.f32.mrf.mxu0
    %v3668 = vadd.f32 %v3579, %v3667
    %v3669 = vpop.f32.mrf.mxu0
    %v3670 = vadd.f32 %v3581, %v3669
    %3671 = vmatmul.bf16.gmra.mxu0 %v3405
    %v3672 = vpop.f32.mrf.mxu0
    %v3673 = vadd.f32 %v3584, %v3672
    %v3674 = vpop.f32.mrf.mxu0
    %v3675 = vadd.f32 %v3586, %v3674
    %3676 = vmatmul.bf16.gmra.mxu0 %v3407
    %v3677 = vpop.f32.mrf.mxu0
    %v3678 = vadd.f32 %v3589, %v3677
    %v3679 = vpop.f32.mrf.mxu0
    %v3680 = vadd.f32 %v3591, %v3679
    %3681 = vmatmul.bf16.gmra.mxu0 %v3409
    %v3682 = vpop.f32.mrf.mxu0
    %v3683 = vadd.f32 %v3594, %v3682
    %v3684 = vpop.f32.mrf.mxu0
    %v3685 = vadd.f32 %v3596, %v3684
    %3686 = vmatmul.bf16.gmra.mxu0 %v3411
    %v3687 = vpop.f32.mrf.mxu0
    %v3688 = vadd.f32 %v3599, %v3687
    %v3689 = vpop.f32.mrf.mxu0
    %v3690 = vadd.f32 %v3601, %v3689
    %3691 = vmatmul.bf16.gmra.mxu0 %v3413
    %v3692 = vpop.f32.mrf.mxu0
    %v3693 = vadd.f32 %v3604, %v3692
    %v3694 = vpop.f32.mrf.mxu0
    %v3695 = vadd.f32 %v3606, %v3694
    %3696 = vmatmul.bf16.gmra.mxu0 %v3415
    %v3697 = vpop.f32.mrf.mxu0
    %v3698 = vadd.f32 %v3609, %v3697
    %v3699 = vpop.f32.mrf.mxu0
    %v3700 = vadd.f32 %v3611, %v3699
    %3701 = vmatmul.bf16.gmra.mxu0 %v3417
    %v3702 = vpop.f32.mrf.mxu0
    %v3703 = vadd.f32 %v3614, %v3702
    %v3704 = vpop.f32.mrf.mxu0
    %v3705 = vadd.f32 %v3616, %v3704
    %3706 = vmatmul.bf16.gmra.mxu0 %v3419
    %v3707 = vpop.f32.mrf.mxu0
    %v3708 = vadd.f32 %v3619, %v3707
    %v3709 = vpop.f32.mrf.mxu0
    %v3710 = vadd.f32 %v3621, %v3709
    %3711 = vmatmul.bf16.gmra.mxu0 %v3421
    %v3712 = vpop.f32.mrf.mxu0
    %v3713 = vadd.f32 %v3624, %v3712
    %v3714 = vpop.f32.mrf.mxu0
    %v3715 = vadd.f32 %v3626, %v3714
    %3716 = vmatmul.bf16.gmra.mxu0 %v3423
    %v3717 = vpop.f32.mrf.mxu0
    %v3718 = vadd.f32 %v3629, %v3717
    %v3719 = vpop.f32.mrf.mxu0
    %v3720 = vadd.f32 %v3631, %v3719
    %3721 = vmatmul.bf16.gmra.mxu0 %v3425
    %v3722 = vpop.f32.mrf.mxu0
    %v3723 = vadd.f32 %v3634, %v3722
    %v3724 = vpop.f32.mrf.mxu0
    %v3725 = vadd.f32 %v3636, %v3724
    %3726 = vmatmul.bf16.gmra.mxu0 %v3427
    %v3727 = vpop.f32.mrf.mxu0
    %v3728 = vadd.f32 %v3639, %v3727
    %v3729 = vpop.f32.mrf.mxu0
    %v3730 = vadd.f32 %v3641, %v3729
    %3731 = vmatmul.bf16.gmra.mxu0 %v3429
    %v3732 = vpop.f32.mrf.mxu0
    %v3733 = vadd.f32 %v3644, %v3732
    %v3734 = vpop.f32.mrf.mxu0
    %v3735 = vadd.f32 %v3646, %v3734
    %3736 = vmatmul.bf16.gmra.mxu0 %v3431
    %v3737 = vpop.f32.mrf.mxu0
    %v3738 = vadd.f32 %v3649, %v3737
    %v3739 = vpop.f32.mrf.mxu0
    %v3740 = vadd.f32 %v3651, %v3739
    %3741 = vdwg.mxu0
    %v3742 = vlaneseq
    %v3743 = vand.u32 %v3742, 127
    %vm3744 = vcmp.lt.s32.totalorder %v3743, 10
    %v3745 = vsel %vm3744, %v3663, -1e+30
    %v3746 = vsel %vm3744, %v3665, -1e+30
    %v3747 = vsel %vm3744, %v3668, -1e+30
    %v3748 = vsel %vm3744, %v3670, -1e+30
    %v3749 = vsel %vm3744, %v3673, -1e+30
    %v3750 = vsel %vm3744, %v3675, -1e+30
    %v3751 = vsel %vm3744, %v3678, -1e+30
    %v3752 = vsel %vm3744, %v3680, -1e+30
    %v3753 = vsel %vm3744, %v3683, -1e+30
    %v3754 = vsel %vm3744, %v3685, -1e+30
    %v3755 = vsel %vm3744, %v3688, -1e+30
    %v3756 = vsel %vm3744, %v3690, -1e+30
    %v3757 = vsel %vm3744, %v3693, -1e+30
    %v3758 = vsel %vm3744, %v3695, -1e+30
    %v3759 = vsel %vm3744, %v3698, -1e+30
    %v3760 = vsel %vm3744, %v3700, -1e+30
    %v3761 = vsel %vm3744, %v3703, -1e+30
    %v3762 = vsel %vm3744, %v3705, -1e+30
    %v3763 = vsel %vm3744, %v3708, -1e+30
    %v3764 = vsel %vm3744, %v3710, -1e+30
    %v3765 = vsel %vm3744, %v3713, -1e+30
    %v3766 = vsel %vm3744, %v3715, -1e+30
    %v3767 = vsel %vm3744, %v3718, -1e+30
    %v3768 = vsel %vm3744, %v3720, -1e+30
    %v3769 = vsel %vm3744, %v3723, -1e+30
    %v3770 = vsel %vm3744, %v3725, -1e+30
    %v3771 = vsel %vm3744, %v3728, -1e+30
    %v3772 = vsel %vm3744, %v3730, -1e+30
    %v3773 = vsel %vm3744, %v3733, -1e+30
    %v3774 = vsel %vm3744, %v3735, -1e+30
    %v3775 = vsel %vm3744, %v3738, -1e+30
    %v3776 = vsel %vm3744, %v3740, -1e+30
    %3777 = vmax.xlane.f32.xlu0 %v3745
    %v3778 = vpop.xlane.xlu0 %3777
    %3779 = vmax.xlane.f32.xlu0 %v3746
    %v3780 = vpop.xlane.xlu0 %3779
    %3781 = vmax.xlane.f32.xlu0 %v3747
    %v3782 = vpop.xlane.xlu0 %3781
    %3783 = vmax.xlane.f32.xlu0 %v3748
    %v3784 = vpop.xlane.xlu0 %3783
    %3785 = vmax.xlane.f32.xlu0 %v3749
    %v3786 = vpop.xlane.xlu0 %3785
    %3787 = vmax.xlane.f32.xlu0 %v3750
    %v3788 = vpop.xlane.xlu0 %3787
    %3789 = vmax.xlane.f32.xlu0 %v3751
    %v3790 = vpop.xlane.xlu0 %3789
    %3791 = vmax.xlane.f32.xlu0 %v3752
    %v3792 = vpop.xlane.xlu0 %3791
    %3793 = vmax.xlane.f32.xlu0 %v3753
    %v3794 = vpop.xlane.xlu0 %3793
    %3795 = vmax.xlane.f32.xlu0 %v3754
    %v3796 = vpop.xlane.xlu0 %3795
    %3797 = vmax.xlane.f32.xlu0 %v3755
    %v3798 = vpop.xlane.xlu0 %3797
    %3799 = vmax.xlane.f32.xlu0 %v3756
    %v3800 = vpop.xlane.xlu0 %3799
    %3801 = vmax.xlane.f32.xlu0 %v3757
    %v3802 = vpop.xlane.xlu0 %3801
    %3803 = vmax.xlane.f32.xlu0 %v3758
    %v3804 = vpop.xlane.xlu0 %3803
    %3805 = vmax.xlane.f32.xlu0 %v3759
    %v3806 = vpop.xlane.xlu0 %3805
    %3807 = vmax.xlane.f32.xlu0 %v3760
    %v3808 = vpop.xlane.xlu0 %3807
    %3809 = vmax.xlane.f32.xlu0 %v3761
    %v3810 = vpop.xlane.xlu0 %3809
    %3811 = vmax.xlane.f32.xlu0 %v3762
    %v3812 = vpop.xlane.xlu0 %3811
    %3813 = vmax.xlane.f32.xlu0 %v3763
    %v3814 = vpop.xlane.xlu0 %3813
    %3815 = vmax.xlane.f32.xlu0 %v3764
    %v3816 = vpop.xlane.xlu0 %3815
    %3817 = vmax.xlane.f32.xlu0 %v3765
    %v3818 = vpop.xlane.xlu0 %3817
    %3819 = vmax.xlane.f32.xlu0 %v3766
    %v3820 = vpop.xlane.xlu0 %3819
    %3821 = vmax.xlane.f32.xlu0 %v3767
    %v3822 = vpop.xlane.xlu0 %3821
    %3823 = vmax.xlane.f32.xlu0 %v3768
    %v3824 = vpop.xlane.xlu0 %3823
    %3825 = vmax.xlane.f32.xlu0 %v3769
    %v3826 = vpop.xlane.xlu0 %3825
    %3827 = vmax.xlane.f32.xlu0 %v3770
    %v3828 = vpop.xlane.xlu0 %3827
    %3829 = vmax.xlane.f32.xlu0 %v3771
    %v3830 = vpop.xlane.xlu0 %3829
    %3831 = vmax.xlane.f32.xlu0 %v3772
    %v3832 = vpop.xlane.xlu0 %3831
    %3833 = vmax.xlane.f32.xlu0 %v3773
    %v3834 = vpop.xlane.xlu0 %3833
    %3835 = vmax.xlane.f32.xlu0 %v3774
    %v3836 = vpop.xlane.xlu0 %3835
    %3837 = vmax.xlane.f32.xlu0 %v3775
    %v3838 = vpop.xlane.xlu0 %3837
    %3839 = vmax.xlane.f32.xlu0 %v3776
    %v3840 = vpop.xlane.xlu0 %3839
    %v3841 = vsub.f32 %v3745, %v3778
    %v3842 = vsub.f32 %v3746, %v3780
    %v3843 = vsub.f32 %v3747, %v3782
    %v3844 = vsub.f32 %v3748, %v3784
    %v3845 = vsub.f32 %v3749, %v3786
    %v3846 = vsub.f32 %v3750, %v3788
    %v3847 = vsub.f32 %v3751, %v3790
    %v3848 = vsub.f32 %v3752, %v3792
    %v3849 = vsub.f32 %v3753, %v3794
    %v3850 = vsub.f32 %v3754, %v3796
    %v3851 = vsub.f32 %v3755, %v3798
    %v3852 = vsub.f32 %v3756, %v3800
    %v3853 = vsub.f32 %v3757, %v3802
    %v3854 = vsub.f32 %v3758, %v3804
    %v3855 = vsub.f32 %v3759, %v3806
    %v3856 = vsub.f32 %v3760, %v3808
    %v3857 = vsub.f32 %v3761, %v3810
    %v3858 = vsub.f32 %v3762, %v3812
    %v3859 = vsub.f32 %v3763, %v3814
    %v3860 = vsub.f32 %v3764, %v3816
    %v3861 = vsub.f32 %v3765, %v3818
    %v3862 = vsub.f32 %v3766, %v3820
    %v3863 = vsub.f32 %v3767, %v3822
    %v3864 = vsub.f32 %v3768, %v3824
    %v3865 = vsub.f32 %v3769, %v3826
    %v3866 = vsub.f32 %v3770, %v3828
    %v3867 = vsub.f32 %v3771, %v3830
    %v3868 = vsub.f32 %v3772, %v3832
    %v3869 = vsub.f32 %v3773, %v3834
    %v3870 = vsub.f32 %v3774, %v3836
    %v3871 = vsub.f32 %v3775, %v3838
    %v3872 = vsub.f32 %v3776, %v3840
    %v3873 = vmul.f32 %v3841, 1.442695
    %v3874 = vpow.pop %v3873
    %v3875 = vmul.f32 %v3842, 1.442695
    %v3876 = vpow.pop %v3875
    %v3877 = vmul.f32 %v3843, 1.442695
    %v3878 = vpow.pop %v3877
    %v3879 = vmul.f32 %v3844, 1.442695
    %v3880 = vpow.pop %v3879
    %v3881 = vmul.f32 %v3845, 1.442695
    %v3882 = vpow.pop %v3881
    %v3883 = vmul.f32 %v3846, 1.442695
    %v3884 = vpow.pop %v3883
    %v3885 = vmul.f32 %v3847, 1.442695
    %v3886 = vpow.pop %v3885
    %v3887 = vmul.f32 %v3848, 1.442695
    %v3888 = vpow.pop %v3887
    %v3889 = vmul.f32 %v3849, 1.442695
    %v3890 = vpow.pop %v3889
    %v3891 = vmul.f32 %v3850, 1.442695
    %v3892 = vpow.pop %v3891
    %v3893 = vmul.f32 %v3851, 1.442695
    %v3894 = vpow.pop %v3893
    %v3895 = vmul.f32 %v3852, 1.442695
    %v3896 = vpow.pop %v3895
    %v3897 = vmul.f32 %v3853, 1.442695
    %v3898 = vpow.pop %v3897
    %v3899 = vmul.f32 %v3854, 1.442695
    %v3900 = vpow.pop %v3899
    %v3901 = vmul.f32 %v3855, 1.442695
    %v3902 = vpow.pop %v3901
    %v3903 = vmul.f32 %v3856, 1.442695
    %v3904 = vpow.pop %v3903
    %v3905 = vmul.f32 %v3857, 1.442695
    %v3906 = vpow.pop %v3905
    %v3907 = vmul.f32 %v3858, 1.442695
    %v3908 = vpow.pop %v3907
    %v3909 = vmul.f32 %v3859, 1.442695
    %v3910 = vpow.pop %v3909
    %v3911 = vmul.f32 %v3860, 1.442695
    %v3912 = vpow.pop %v3911
    %v3913 = vmul.f32 %v3861, 1.442695
    %v3914 = vpow.pop %v3913
    %v3915 = vmul.f32 %v3862, 1.442695
    %v3916 = vpow.pop %v3915
    %v3917 = vmul.f32 %v3863, 1.442695
    %v3918 = vpow.pop %v3917
    %v3919 = vmul.f32 %v3864, 1.442695
    %v3920 = vpow.pop %v3919
    %v3921 = vmul.f32 %v3865, 1.442695
    %v3922 = vpow.pop %v3921
    %v3923 = vmul.f32 %v3866, 1.442695
    %v3924 = vpow.pop %v3923
    %v3925 = vmul.f32 %v3867, 1.442695
    %v3926 = vpow.pop %v3925
    %v3927 = vmul.f32 %v3868, 1.442695
    %v3928 = vpow.pop %v3927
    %v3929 = vmul.f32 %v3869, 1.442695
    %v3930 = vpow.pop %v3929
    %v3931 = vmul.f32 %v3870, 1.442695
    %v3932 = vpow.pop %v3931
    %v3933 = vmul.f32 %v3871, 1.442695
    %v3934 = vpow.pop %v3933
    %v3935 = vmul.f32 %v3872, 1.442695
    %v3936 = vpow.pop %v3935
    %3937 = vadd.xlane.f32.xlu0 %v3874
    %v3938 = vpop.xlane.xlu0 %3937
    %3939 = vadd.xlane.f32.xlu0 %v3876
    %v3940 = vpop.xlane.xlu0 %3939
    %3941 = vadd.xlane.f32.xlu0 %v3878
    %v3942 = vpop.xlane.xlu0 %3941
    %3943 = vadd.xlane.f32.xlu0 %v3880
    %v3944 = vpop.xlane.xlu0 %3943
    %3945 = vadd.xlane.f32.xlu0 %v3882
    %v3946 = vpop.xlane.xlu0 %3945
    %3947 = vadd.xlane.f32.xlu0 %v3884
    %v3948 = vpop.xlane.xlu0 %3947
    %3949 = vadd.xlane.f32.xlu0 %v3886
    %v3950 = vpop.xlane.xlu0 %3949
    %3951 = vadd.xlane.f32.xlu0 %v3888
    %v3952 = vpop.xlane.xlu0 %3951
    %3953 = vadd.xlane.f32.xlu0 %v3890
    %v3954 = vpop.xlane.xlu0 %3953
    %3955 = vadd.xlane.f32.xlu0 %v3892
    %v3956 = vpop.xlane.xlu0 %3955
    %3957 = vadd.xlane.f32.xlu0 %v3894
    %v3958 = vpop.xlane.xlu0 %3957
    %3959 = vadd.xlane.f32.xlu0 %v3896
    %v3960 = vpop.xlane.xlu0 %3959
    %3961 = vadd.xlane.f32.xlu0 %v3898
    %v3962 = vpop.xlane.xlu0 %3961
    %3963 = vadd.xlane.f32.xlu0 %v3900
    %v3964 = vpop.xlane.xlu0 %3963
    %3965 = vadd.xlane.f32.xlu0 %v3902
    %v3966 = vpop.xlane.xlu0 %3965
    %3967 = vadd.xlane.f32.xlu0 %v3904
    %v3968 = vpop.xlane.xlu0 %3967
    %3969 = vadd.xlane.f32.xlu0 %v3906
    %v3970 = vpop.xlane.xlu0 %3969
    %3971 = vadd.xlane.f32.xlu0 %v3908
    %v3972 = vpop.xlane.xlu0 %3971
    %3973 = vadd.xlane.f32.xlu0 %v3910
    %v3974 = vpop.xlane.xlu0 %3973
    %3975 = vadd.xlane.f32.xlu0 %v3912
    %v3976 = vpop.xlane.xlu0 %3975
    %3977 = vadd.xlane.f32.xlu0 %v3914
    %v3978 = vpop.xlane.xlu0 %3977
    %3979 = vadd.xlane.f32.xlu0 %v3916
    %v3980 = vpop.xlane.xlu0 %3979
    %3981 = vadd.xlane.f32.xlu0 %v3918
    %v3982 = vpop.xlane.xlu0 %3981
    %3983 = vadd.xlane.f32.xlu0 %v3920
    %v3984 = vpop.xlane.xlu0 %3983
    %3985 = vadd.xlane.f32.xlu0 %v3922
    %v3986 = vpop.xlane.xlu0 %3985
    %3987 = vadd.xlane.f32.xlu0 %v3924
    %v3988 = vpop.xlane.xlu0 %3987
    %3989 = vadd.xlane.f32.xlu0 %v3926
    %v3990 = vpop.xlane.xlu0 %3989
    %3991 = vadd.xlane.f32.xlu0 %v3928
    %v3992 = vpop.xlane.xlu0 %3991
    %3993 = vadd.xlane.f32.xlu0 %v3930
    %v3994 = vpop.xlane.xlu0 %3993
    %3995 = vadd.xlane.f32.xlu0 %v3932
    %v3996 = vpop.xlane.xlu0 %3995
    %3997 = vadd.xlane.f32.xlu0 %v3934
    %v3998 = vpop.xlane.xlu0 %3997
    %3999 = vadd.xlane.f32.xlu0 %v3936
    %v4000 = vpop.xlane.xlu0 %3999
    %v4001 = vlog2.pop %v3938
    %v4002 = vmul.f32 %v4001, 0.6931472
    %v4003 = vlog2.pop %v3940
    %v4004 = vmul.f32 %v4003, 0.6931472
    %v4005 = vlog2.pop %v3942
    %v4006 = vmul.f32 %v4005, 0.6931472
    %v4007 = vlog2.pop %v3944
    %v4008 = vmul.f32 %v4007, 0.6931472
    %v4009 = vlog2.pop %v3946
    %v4010 = vmul.f32 %v4009, 0.6931472
    %v4011 = vlog2.pop %v3948
    %v4012 = vmul.f32 %v4011, 0.6931472
    %v4013 = vlog2.pop %v3950
    %v4014 = vmul.f32 %v4013, 0.6931472
    %v4015 = vlog2.pop %v3952
    %v4016 = vmul.f32 %v4015, 0.6931472
    %v4017 = vlog2.pop %v3954
    %v4018 = vmul.f32 %v4017, 0.6931472
    %v4019 = vlog2.pop %v3956
    %v4020 = vmul.f32 %v4019, 0.6931472
    %v4021 = vlog2.pop %v3958
    %v4022 = vmul.f32 %v4021, 0.6931472
    %v4023 = vlog2.pop %v3960
    %v4024 = vmul.f32 %v4023, 0.6931472
    %v4025 = vlog2.pop %v3962
    %v4026 = vmul.f32 %v4025, 0.6931472
    %v4027 = vlog2.pop %v3964
    %v4028 = vmul.f32 %v4027, 0.6931472
    %v4029 = vlog2.pop %v3966
    %v4030 = vmul.f32 %v4029, 0.6931472
    %v4031 = vlog2.pop %v3968
    %v4032 = vmul.f32 %v4031, 0.6931472
    %v4033 = vlog2.pop %v3970
    %v4034 = vmul.f32 %v4033, 0.6931472
    %v4035 = vlog2.pop %v3972
    %v4036 = vmul.f32 %v4035, 0.6931472
    %v4037 = vlog2.pop %v3974
    %v4038 = vmul.f32 %v4037, 0.6931472
    %v4039 = vlog2.pop %v3976
    %v4040 = vmul.f32 %v4039, 0.6931472
    %v4041 = vlog2.pop %v3978
    %v4042 = vmul.f32 %v4041, 0.6931472
    %v4043 = vlog2.pop %v3980
    %v4044 = vmul.f32 %v4043, 0.6931472
    %v4045 = vlog2.pop %v3982
    %v4046 = vmul.f32 %v4045, 0.6931472
    %v4047 = vlog2.pop %v3984
    %v4048 = vmul.f32 %v4047, 0.6931472
    %v4049 = vlog2.pop %v3986
    %v4050 = vmul.f32 %v4049, 0.6931472
    %v4051 = vlog2.pop %v3988
    %v4052 = vmul.f32 %v4051, 0.6931472
    %v4053 = vlog2.pop %v3990
    %v4054 = vmul.f32 %v4053, 0.6931472
    %v4055 = vlog2.pop %v3992
    %v4056 = vmul.f32 %v4055, 0.6931472
    %v4057 = vlog2.pop %v3994
    %v4058 = vmul.f32 %v4057, 0.6931472
    %v4059 = vlog2.pop %v3996
    %v4060 = vmul.f32 %v4059, 0.6931472
    %v4061 = vlog2.pop %v3998
    %v4062 = vmul.f32 %v4061, 0.6931472
    %v4063 = vlog2.pop %v4000
    %v4064 = vmul.f32 %v4063, 0.6931472
    %v4065 = vsub.f32 %v3841, %v4002
    %v4066 = vsub.f32 %v3842, %v4004
    %v4067 = vsub.f32 %v3843, %v4006
    %v4068 = vsub.f32 %v3844, %v4008
    %v4069 = vsub.f32 %v3845, %v4010
    %v4070 = vsub.f32 %v3846, %v4012
    %v4071 = vsub.f32 %v3847, %v4014
    %v4072 = vsub.f32 %v3848, %v4016
    %v4073 = vsub.f32 %v3849, %v4018
    %v4074 = vsub.f32 %v3850, %v4020
    %v4075 = vsub.f32 %v3851, %v4022
    %v4076 = vsub.f32 %v3852, %v4024
    %v4077 = vsub.f32 %v3853, %v4026
    %v4078 = vsub.f32 %v3854, %v4028
    %v4079 = vsub.f32 %v3855, %v4030
    %v4080 = vsub.f32 %v3856, %v4032
    %v4081 = vsub.f32 %v3857, %v4034
    %v4082 = vsub.f32 %v3858, %v4036
    %v4083 = vsub.f32 %v3859, %v4038
    %v4084 = vsub.f32 %v3860, %v4040
    %v4085 = vsub.f32 %v3861, %v4042
    %v4086 = vsub.f32 %v3862, %v4044
    %v4087 = vsub.f32 %v3863, %v4046
    %v4088 = vsub.f32 %v3864, %v4048
    %v4089 = vsub.f32 %v3865, %v4050
    %v4090 = vsub.f32 %v3866, %v4052
    %v4091 = vsub.f32 %v3867, %v4054
    %v4092 = vsub.f32 %v3868, %v4056
    %v4093 = vsub.f32 %v3869, %v4058
    %v4094 = vsub.f32 %v3870, %v4060
    %v4095 = vsub.f32 %v3871, %v4062
    %v4096 = vsub.f32 %v3872, %v4064
    %4097 = vst [vmem:[%s7] sm:$0xff] %v4065
    %4098 = vst [vmem:[%s7 + $0x8] sm:$0xff] %v4066
    %4099 = vst [vmem:[%s7 + $0x10] sm:$0xff] %v4067
    %4100 = vst [vmem:[%s7 + $0x18] sm:$0xff] %v4068
    %4101 = vst [vmem:[%s7 + $0x20] sm:$0xff] %v4069
    %4102 = vst [vmem:[%s7 + $0x28] sm:$0xff] %v4070
    %4103 = vst [vmem:[%s7 + $0x30] sm:$0xff] %v4071
    %4104 = vst [vmem:[%s7 + $0x38] sm:$0xff] %v4072
    %4105 = vst [vmem:[%s7 + $0x40] sm:$0xff] %v4073
    %4106 = vst [vmem:[%s7 + $0x48] sm:$0xff] %v4074
    %4107 = vst [vmem:[%s7 + $0x50] sm:$0xff] %v4075
    %4108 = vst [vmem:[%s7 + $0x58] sm:$0xff] %v4076
    %4109 = vst [vmem:[%s7 + $0x60] sm:$0xff] %v4077
    %4110 = vst [vmem:[%s7 + $0x68] sm:$0xff] %v4078
    %4111 = vst [vmem:[%s7 + $0x70] sm:$0xff] %v4079
    %4112 = vst [vmem:[%s7 + $0x78] sm:$0xff] %v4080
    %4113 = vst [vmem:[%s7 + $0x80] sm:$0xff] %v4081
    %4114 = vst [vmem:[%s7 + $0x88] sm:$0xff] %v4082
    %4115 = vst [vmem:[%s7 + $0x90] sm:$0xff] %v4083
    %4116 = vst [vmem:[%s7 + $0x98] sm:$0xff] %v4084
    %4117 = vst [vmem:[%s7 + $0xa0] sm:$0xff] %v4085
    %4118 = vst [vmem:[%s7 + $0xa8] sm:$0xff] %v4086
    %4119 = vst [vmem:[%s7 + $0xb0] sm:$0xff] %v4087
    %4120 = vst [vmem:[%s7 + $0xb8] sm:$0xff] %v4088
    %4121 = vst [vmem:[%s7 + $0xc0] sm:$0xff] %v4089
    %4122 = vst [vmem:[%s7 + $0xc8] sm:$0xff] %v4090
    %4123 = vst [vmem:[%s7 + $0xd0] sm:$0xff] %v4091
    %4124 = vst [vmem:[%s7 + $0xd8] sm:$0xff] %v4092
    %4125 = vst [vmem:[%s7 + $0xe0] sm:$0xff] %v4093
    %4126 = vst [vmem:[%s7 + $0xe8] sm:$0xff] %v4094
    %4127 = vst [vmem:[%s7 + $0xf0] sm:$0xff] %v4095
    %4128 = vst [vmem:[%s7 + $0xf8] sm:$0xff] %v4096
    // Predicated region
    $region38: #{mlp_forward.1} parent=1 // pred_check
      _
    $region39: #{mlp_forward.1} parent=1 // pred_check_branch
      %4130 = sbr.rel (0) target = $region41
    $region40: #{mlp_forward.1} parent=1 // pred_region
      _
    $region41: #{mlp_forward.1} parent=1 // pred_fallthru
      _
    // Predicated region
    $region42: #{mlp_forward.1} parent=1 // pred_check
      _
    $region43: #{mlp_forward.1} parent=1 // pred_check_branch
      %4132 = sbr.rel (0) target = $region45
    $region44: #{mlp_forward.1} parent=1 // pred_region
      _
    $region45: #{mlp_forward.1} parent=1 // pred_fallthru
      _
    %4133 = vsyncpa [#allocation3], 1
    %4134 = vsyncpa [#allocation5], 1

</llo_original>
